<compile_context>
chip_gen: v5e
topology: v5e:2x2
jax: 0.10.0
libtpu: 0.0.40
codegen_flags: <defaults>
</compile_context>

<pallas_src>
import functools
import math

import jax
import jax.numpy as jnp
from jax import lax
from jax.experimental import pallas as pl
from jax.experimental.pallas import tpu as pltpu

F32 = jnp.float32
BF16 = jnp.bfloat16


# ----------------------------------------------------------------------------- helpers
def _silu(v):
    # stable silu: exp of -|v| only, reciprocal on the EUP slot
    e = jnp.exp(-jnp.abs(v))
    sig = jnp.where(v >= 0.0, 1.0, e) * pl.reciprocal(1.0 + e, approx=True)
    return v * sig


def _softplus(v):
    return jnp.maximum(v, 0.0) + jnp.log1p(jnp.exp(-jnp.abs(v)))


def _rmsnorm(v, w):
    var = jnp.mean(v * v, axis=-1, keepdims=True)
    return v * lax.rsqrt(var + 1e-5) * w


# ----------------------------------------------------------------------------- kernel
def mamba_kernel(x_ref, w_emb_ref, b_emb_ref, norm_w_ref,
                 w_inx_ref, w_inz_ref, conv_w_ref, conv_b_ref,
                 w_xproj_ref, w_dt_ref, b_dt_ref,
                 a_log_ref, dskip_ref, w_out_ref, normf_w_ref,
                 out_ref,
                 h_s, dt_s, u_s, bm_s, cm_s, y_s,
                 *, seq_len, b_tile):
    BL = x_ref.shape[0]                    # = b_tile * L rows (batch-major)
    L = seq_len
    d_inner = y_s.shape[1]
    d_state = a_log_ref.shape[0]
    K = conv_w_ref.shape[0]
    dt_rank = w_dt_ref.shape[0]

    layer = pl.program_id(1)
    n_layer = pl.num_programs(1)

    # static scan chunking: TC timesteps unrolled per fori iteration
    TC = 8 if L % 8 == 0 else (4 if L % 4 == 0 else (2 if L % 2 == 0 else 1))
    n_chunks = L // TC

    # ---- layer 0: input embedding into the residual-stream scratch ----------
    @pl.when(layer == 0)
    def _():
        x16 = x_ref[...].astype(BF16)                                 # (BL, D_in)
        h_s[...] = (jnp.dot(x16, w_emb_ref[...],
                            preferred_element_type=F32) + b_emb_ref[...])

    resid = h_s[...]                                                  # (BL, d_model)
    hn16 = _rmsnorm(resid, norm_w_ref[...]).astype(BF16)

    # ---- input projections (MXU, M = b_tile*L rows) --------------------------
    xi = jnp.dot(hn16, w_inx_ref[...], preferred_element_type=F32)    # (BL, d_inner)
    z = jnp.dot(hn16, w_inz_ref[...], preferred_element_type=F32)     # (BL, d_inner)

    # ---- depthwise causal conv: in-register sublane rolls + per-batch mask ---
    cw = conv_w_ref[...]                                              # (K, d_inner)
    t_idx = lax.broadcasted_iota(jnp.int32, (BL, 1), 0) % L           # time within seq
    acc = xi * cw[K - 1:K, :]                                         # shift-0 tap
    for k in range(K - 1):
        s = K - 1 - k                                                 # tap k hits x[t-s]
        shifted = pltpu.roll(xi, shift=s, axis=0)                     # row r <- row r-s
        acc = acc + jnp.where(t_idx >= s, shifted, 0.0) * cw[k:k + 1, :]
    xc = _silu(acc + conv_b_ref[...])                                 # (BL, d_inner) f32
    xc16 = xc.astype(BF16)

    # ---- fused x_proj: single MXU pass for [dt_in | B | C] -------------------
    xdbc = jnp.dot(xc16, w_xproj_ref[...], preferred_element_type=F32)
    dt_in = xdbc[:, 0:dt_rank]                                        # (BL, R)  f32
    bm = xdbc[:, dt_rank:dt_rank + d_state]                           # (BL, S)
    cm = xdbc[:, dt_rank + d_state:dt_rank + 2 * d_state]             # (BL, S)

    # dt path stays f32 (it feeds exp(dt*A))
    dt = _softplus(jnp.dot(dt_in, w_dt_ref[...],
                           preferred_element_type=F32) + b_dt_ref[...])  # (BL, d_inner)

    a = -jnp.exp(a_log_ref[...])                                      # (S, d_inner)

    # small 2-D scratches so the scan can slice chunks at dynamic offsets
    dt_s[...] = dt
    u_s[...] = dt * xc
    bm_s[...] = bm
    cm_s[...] = cm

    # ---- selective scan -------------------------------------------------------
    # State in the fori carry (vregs); da / dB*x computed on the fly per step
    # (no (L, S, d_inner) buffers); TC rows of y stored per chunk.
    def chunk_step(c, hs):
        new_hs = []
        for b in range(b_tile):                                       # static
            row0 = pl.multiple_of(b * L + c * TC, TC)
            dt_c = dt_s[pl.ds(row0, TC), :]                           # (TC, d_inner)
            u_c = u_s[pl.ds(row0, TC), :]
            # bulk lane->sublane relayout of B/C, amortised over TC steps
            bmb = bm_s[pl.ds(row0, TC), :][:, :, None]                # (TC, S, 1)
            cmb = cm_s[pl.ds(row0, TC), :][:, :, None]
            h = hs[b]                                                 # (S, d_inner)
            y_rows = []
            for t in range(TC):                                       # static unroll
                da_t = jnp.exp(dt_c[t:t + 1, :] * a)                  # (S, d_inner)
                h = da_t * h + u_c[t:t + 1, :] * bmb[t]
                y_rows.append(jnp.sum(h * cmb[t], axis=0, keepdims=True))
            y_s[pl.ds(row0, TC), :] = jnp.concatenate(y_rows, axis=0)
            new_hs.append(h)
        return tuple(new_hs)

    h0 = tuple(jnp.zeros((d_state, d_inner), F32) for _ in range(b_tile))
    lax.fori_loop(0, n_chunks, chunk_step, h0)

    # ---- skip, gate, output projection, residual ------------------------------
    y = y_s[...] + dskip_ref[...] * xc                                # (BL, d_inner)
    y = y * _silu(z)
    o = jnp.dot(y.astype(BF16), w_out_ref[...], preferred_element_type=F32)
    h_s[...] = resid + o

    # ---- final RMSNorm + output store on the last layer -----------------------
    @pl.when(layer == n_layer - 1)
    def _():
        out_ref[...] = _rmsnorm(h_s[...], normf_w_ref[...]).astype(out_ref.dtype)


# ----------------------------------------------------------------------------- wrapper
def mamba_encoder(x_bld, params, *, b_tile=None):
    """x_bld: (B, L, input_size) float32 -> (B, L, d_model) float32."""
    B, L, d_in = x_bld.shape
    d_model = params["w_emb"].shape[1]
    n_layer = params["norm_w"].shape[0]
    d_inner = params["w_inx"].shape[2]
    d_state = params["a_log"].shape[1]

    if b_tile is None:
        # fold up to 8 sequences per grid step (raise matmul M, reuse weights).
        # On v7x one would additionally prefer B // b_tile to be even.
        b_tile = 1
        for cand in (8, 4, 2):
            if B % cand == 0:
                b_tile = cand
                break
    assert B % b_tile == 0
    n_bblk = B // b_tile
    BL = b_tile * L

    # batch-major row flattening: row b*L + t
    x2d = x_bld.reshape(B * L, d_in)

    def per_layer(a):
        nd = a.ndim
        return pl.BlockSpec((None,) + a.shape[1:],
                            lambda bi, l, nd=nd: (l,) + (0,) * (nd - 1))

    def shared(a):
        nd = a.ndim
        return pl.BlockSpec(a.shape, lambda bi, l, nd=nd: (0,) * nd)

    in_specs = [
        pl.BlockSpec((BL, d_in), lambda bi, l: (bi, 0)),      # x rows (batch block)
        shared(params["w_emb"]),
        shared(params["b_emb"]),
        per_layer(params["norm_w"]),
        per_layer(params["w_inx"]),
        per_layer(params["w_inz"]),
        per_layer(params["conv_w"]),
        per_layer(params["conv_b"]),
        per_layer(params["w_xproj"]),
        per_layer(params["w_dt"]),
        per_layer(params["b_dt"]),
        per_layer(params["a_log"]),
        per_layer(params["dskip"]),
        per_layer(params["w_out"]),
        shared(params["normf_w"]),
    ]
    out_spec = pl.BlockSpec((BL, d_model), lambda bi, l: (bi, 0))

    scratch_shapes = [
        pltpu.VMEM((BL, d_model), F32),   # h_s  (residual-stream carry)
        pltpu.VMEM((BL, d_inner), F32),   # dt_s
        pltpu.VMEM((BL, d_inner), F32),   # u_s  (dt * conv_out)
        pltpu.VMEM((BL, d_state), F32),   # bm_s
        pltpu.VMEM((BL, d_state), F32),   # cm_s
        pltpu.VMEM((BL, d_inner), F32),   # y_s
    ]

    kernel = functools.partial(mamba_kernel, seq_len=L, b_tile=b_tile)

    out2d = pl.pallas_call(
        kernel,
        out_shape=jax.ShapeDtypeStruct((B * L, d_model), jnp.float32),
        grid_spec=pltpu.PrefetchScalarGridSpec(
            num_scalar_prefetch=0,
            grid=(n_bblk, n_layer),
            in_specs=in_specs,
            out_specs=out_spec,
            scratch_shapes=scratch_shapes),
        compiler_params=pltpu.CompilerParams(
            dimension_semantics=("parallel", "arbitrary"),
            vmem_limit_bytes=56 * 1024 * 1024),
    )(x2d, params["w_emb"], params["b_emb"], params["norm_w"],
      params["w_inx"], params["w_inz"], params["conv_w"], params["conv_b"],
      params["w_xproj"], params["w_dt"], params["b_dt"],
      params["a_log"], params["dskip"], params["w_out"], params["normf_w"])

    return out2d.reshape(B, L, d_model)


def mamba_forward(input_embeds, h_0, params):
    """Matches Mamba.forward: (T, B, D_in) -> ((T, B, d_model), None)."""
    del h_0
    x_bld = jnp.transpose(input_embeds, (1, 0, 2))        # (B, L, D_in)
    out_bld = mamba_encoder(x_bld, params)
    return jnp.transpose(out_bld, (1, 0, 2)), None        # back to (T, B, d_model)


# ----------------------------------------------------------------------------- params
def make_params(key, input_size, d_model, n_layer,
                d_state=16, expand=2, d_conv=4):
    d_inner = expand * d_model
    dt_rank = max(1, math.ceil(d_model / 16))
    K = d_conv
    keys = jax.random.split(key, 7)

    def init(k, shape, scale=0.02, dtype=BF16):
        return (scale * jax.random.normal(k, shape)).astype(dtype)

    # A[s, i] = s + 1  (reference Mamba init), stored state-major (d_state, d_inner)
    a_log = jnp.broadcast_to(
        jnp.log(jnp.arange(1, d_state + 1, dtype=F32))[None, :, None],
        (n_layer, d_state, d_inner)).astype(F32)

    return dict(
        w_emb=init(keys[0], (input_size, d_model)),                       # bf16
        b_emb=jnp.zeros((1, d_model), F32),
        norm_w=jnp.ones((n_layer, 1, d_model), F32),
        w_inx=init(keys[1], (n_layer, d_model, d_inner)),                 # bf16
        w_inz=init(keys[2], (n_layer, d_model, d_inner)),                 # bf16
        conv_w=init(keys[3], (n_layer, K, d_inner), 0.1, F32),
        conv_b=jnp.zeros((n_layer, 1, d_inner), F32),
        # fused x_proj slab: [dt_rank | d_state (B) | d_state (C)]
        w_xproj=init(keys[4], (n_layer, d_inner, dt_rank + 2 * d_state)),  # bf16
        w_dt=init(keys[5], (n_layer, dt_rank, d_inner), 0.1, F32),         # f32 (dt path)
        b_dt=jnp.full((n_layer, 1, d_inner), -4.6, F32),                   # softplus^-1(~0.01)
        a_log=a_log,
        dskip=jnp.ones((n_layer, 1, d_inner), F32),
        w_out=init(keys[6], (n_layer, d_inner, d_model)),                  # bf16
        normf_w=jnp.ones((1, d_model), F32),
    )


# ----------------------------------------------------------------------------- main
if __name__ == "__main__":
    input_size = 8        # tstep_dim
    hidden_size = 32      # d_model
    n_layer = 2
    max_seq_length = 8    # T
    batch = 2             # B

    key = jax.random.PRNGKey(0)
    kp, kx = jax.random.split(key)
    params = make_params(kp, input_size, hidden_size, n_layer)

    # policy-convention input: (T, B, input_size)
    input_embeds = jax.random.normal(kx, (max_seq_length, batch, input_size),
                                     dtype=jnp.float32)

    out, hidden_state = mamba_forward(input_embeds, None, params)
    out = jax.block_until_ready(out)

    assert out.shape == (max_seq_length, batch, hidden_size), out.shape
    assert hidden_state is None
    assert bool(jnp.all(jnp.isfinite(out)))
    print("KERNEL_OK")
</pallas_src>

<mosaic_0001>
module attributes {stable_mosaic.version = 11 : i64} {
  func.func @mamba_kernel(%arg0: i32, %arg1: i32, %arg2: memref<16x8xf32, #tpu.memory_space<vmem>>, %arg3: memref<8x32xbf16, #tpu.memory_space<vmem>>, %arg4: memref<1x32xf32, #tpu.memory_space<vmem>>, %arg5: memref<1x1x32xf32, #tpu.memory_space<vmem>>, %arg6: memref<1x32x64xbf16, #tpu.memory_space<vmem>>, %arg7: memref<1x32x64xbf16, #tpu.memory_space<vmem>>, %arg8: memref<1x4x64xf32, #tpu.memory_space<vmem>>, %arg9: memref<1x1x64xf32, #tpu.memory_space<vmem>>, %arg10: memref<1x64x34xbf16, #tpu.memory_space<vmem>>, %arg11: memref<1x2x64xf32, #tpu.memory_space<vmem>>, %arg12: memref<1x1x64xf32, #tpu.memory_space<vmem>>, %arg13: memref<1x16x64xf32, #tpu.memory_space<vmem>>, %arg14: memref<1x1x64xf32, #tpu.memory_space<vmem>>, %arg15: memref<1x64x32xbf16, #tpu.memory_space<vmem>>, %arg16: memref<1x32xf32, #tpu.memory_space<vmem>>, %arg17: memref<16x32xf32, #tpu.memory_space<vmem>>, %arg18: memref<16x32xf32, #tpu.memory_space<vmem>>, %arg19: memref<16x64xf32, #tpu.memory_space<vmem>>, %arg20: memref<16x64xf32, #tpu.memory_space<vmem>>, %arg21: memref<16x16xf32, #tpu.memory_space<vmem>>, %arg22: memref<16x16xf32, #tpu.memory_space<vmem>>, %arg23: memref<16x64xf32, #tpu.memory_space<vmem>>) attributes {dimension_semantics = [#tpu.dimension_semantics<parallel>, #tpu.dimension_semantics<arbitrary>], iteration_bounds = array<i64: 1, 2>, scalar_prefetch = 0 : i64, scratch_operands = 6 : i64, tpu.core_type = #tpu.core_type<tc>, window_params = [{transform_indices = @transform_0, window_bounds = array<i64: 16, 8>}, {pipeline_mode = #tpu.pipeline_mode<synchronous>, transform_indices = @transform_1, window_bounds = array<i64: 8, 32>}, {pipeline_mode = #tpu.pipeline_mode<synchronous>, transform_indices = @transform_2, window_bounds = array<i64: 1, 32>}, {transform_indices = @transform_3, window_bounds = array<i64: 1, 1, 32>}, {transform_indices = @transform_4, window_bounds = array<i64: 1, 32, 64>}, {transform_indices = @transform_5, window_bounds = array<i64: 1, 32, 64>}, {transform_indices = @transform_6, window_bounds = array<i64: 1, 4, 64>}, {transform_indices = @transform_7, window_bounds = array<i64: 1, 1, 64>}, {transform_indices = @transform_8, window_bounds = array<i64: 1, 64, 34>}, {transform_indices = @transform_9, window_bounds = array<i64: 1, 2, 64>}, {transform_indices = @transform_10, window_bounds = array<i64: 1, 1, 64>}, {transform_indices = @transform_11, window_bounds = array<i64: 1, 16, 64>}, {transform_indices = @transform_12, window_bounds = array<i64: 1, 1, 64>}, {transform_indices = @transform_13, window_bounds = array<i64: 1, 64, 32>}, {pipeline_mode = #tpu.pipeline_mode<synchronous>, transform_indices = @transform_14, window_bounds = array<i64: 1, 32>}, {transform_indices = @transform_15, window_bounds = array<i64: 16, 32>}]} {
    %c0_i32 = arith.constant 0 : i32
    %0 = arith.cmpi eq, %arg1, %c0_i32 : i32
    %1 = arith.extui %0 : i1 to i32
    %c0_i32_0 = arith.constant 0 : i32
    %2 = arith.cmpi ne, %1, %c0_i32_0 : i32
    scf.if %2 {
      %c0_112 = arith.constant 0 : index
      %c0_113 = arith.constant 0 : index
      %480 = vector.load %arg2[%c0_112, %c0_113] : memref<16x8xf32, #tpu.memory_space<vmem>>, vector<16x8xf32>
      %481 = arith.truncf %480 : vector<16x8xf32> to vector<16x8xbf16>
      %c0_114 = arith.constant 0 : index
      %c0_115 = arith.constant 0 : index
      %482 = vector.load %arg3[%c0_114, %c0_115] : memref<8x32xbf16, #tpu.memory_space<vmem>>, vector<8x32xbf16>
      %cst_116 = arith.constant dense<0.000000e+00> : vector<16x32xf32>
      %483 = tpu.matmul %481, %482, %cst_116 {dimension_numbers = #tpu.dot_dimension_numbers<[1], [0], [0], [1], [0, 0, 1, 1], [], []>} : vector<16x8xbf16>, vector<8x32xbf16>, vector<16x32xf32> -> vector<16x32xf32>
      %c0_117 = arith.constant 0 : index
      %c0_118 = arith.constant 0 : index
      %484 = vector.load %arg4[%c0_117, %c0_118] : memref<1x32xf32, #tpu.memory_space<vmem>>, vector<1x32xf32>
      %485 = vector.broadcast %484 : vector<1x32xf32> to vector<16x32xf32>
      %486 = arith.addf %483, %485 : vector<16x32xf32>
      %c0_119 = arith.constant 0 : index
      %c0_120 = arith.constant 0 : index
      %487 = vector.load %arg18[%c0_119, %c0_120] : memref<16x32xf32, #tpu.memory_space<vmem>>, vector<16x32xf32>
      tpu.vector_store %arg18[%c0_119, %c0_120], %486 {strides = array<i32>} : memref<16x32xf32, #tpu.memory_space<vmem>>, vector<16x32xf32>,
    } else {
    }
    %c0 = arith.constant 0 : index
    %c0_1 = arith.constant 0 : index
    %3 = vector.load %arg18[%c0, %c0_1] : memref<16x32xf32, #tpu.memory_space<vmem>>, vector<16x32xf32>
    %c0_2 = arith.constant 0 : index
    %c0_3 = arith.constant 0 : index
    %c0_4 = arith.constant 0 : index
    %4 = vector.load %arg5[%c0_2, %c0_3, %c0_4] : memref<1x1x32xf32, #tpu.memory_space<vmem>>, vector<1x1x32xf32>
    %5 = vector.shape_cast %4 : vector<1x1x32xf32> to vector<1x32xf32>
    %6 = arith.mulf %3, %3 : vector<16x32xf32>
    %cst = arith.constant dense<0.000000e+00> : vector<16xf32>
    %7 = vector.multi_reduction <add>, %6, %cst [1] : vector<16x32xf32> to vector<16xf32>
    %8 = vector.shape_cast %7 : vector<16xf32> to vector<16x1xf32>
    %cst_5 = arith.constant 3.200000e+01 : f32
    %9 = vector.broadcast %cst_5 : f32 to vector<16x1xf32>
    %10 = arith.divf %8, %9 : vector<16x1xf32>
    %cst_6 = arith.constant 9.99999974E-6 : f32
    %11 = vector.broadcast %cst_6 : f32 to vector<16x1xf32>
    %12 = arith.addf %10, %11 : vector<16x1xf32>
    %13 = math.rsqrt %12 : vector<16x1xf32>
    %14 = vector.broadcast %13 : vector<16x1xf32> to vector<16x32xf32>
    %15 = arith.mulf %3, %14 : vector<16x32xf32>
    %16 = vector.broadcast %5 : vector<1x32xf32> to vector<16x32xf32>
    %17 = arith.mulf %15, %16 : vector<16x32xf32>
    %18 = arith.truncf %17 : vector<16x32xf32> to vector<16x32xbf16>
    %c0_7 = arith.constant 0 : index
    %c0_8 = arith.constant 0 : index
    %c0_9 = arith.constant 0 : index
    %19 = vector.load %arg6[%c0_7, %c0_8, %c0_9] : memref<1x32x64xbf16, #tpu.memory_space<vmem>>, vector<1x32x64xbf16>
    %20 = vector.shape_cast %19 : vector<1x32x64xbf16> to vector<32x64xbf16>
    %cst_10 = arith.constant dense<0.000000e+00> : vector<16x64xf32>
    %21 = tpu.matmul %18, %20, %cst_10 {dimension_numbers = #tpu.dot_dimension_numbers<[1], [0], [0], [1], [0, 0, 1, 1], [], []>} : vector<16x32xbf16>, vector<32x64xbf16>, vector<16x64xf32> -> vector<16x64xf32>
    %c0_11 = arith.constant 0 : index
    %c0_12 = arith.constant 0 : index
    %c0_13 = arith.constant 0 : index
    %22 = vector.load %arg7[%c0_11, %c0_12, %c0_13] : memref<1x32x64xbf16, #tpu.memory_space<vmem>>, vector<1x32x64xbf16>
    %23 = vector.shape_cast %22 : vector<1x32x64xbf16> to vector<32x64xbf16>
    %cst_14 = arith.constant dense<0.000000e+00> : vector<16x64xf32>
    %24 = tpu.matmul %18, %23, %cst_14 {dimension_numbers = #tpu.dot_dimension_numbers<[1], [0], [0], [1], [0, 0, 1, 1], [], []>} : vector<16x32xbf16>, vector<32x64xbf16>, vector<16x64xf32> -> vector<16x64xf32>
    %c0_15 = arith.constant 0 : index
    %c0_16 = arith.constant 0 : index
    %c0_17 = arith.constant 0 : index
    %25 = vector.load %arg8[%c0_15, %c0_16, %c0_17] : memref<1x4x64xf32, #tpu.memory_space<vmem>>, vector<1x4x64xf32>
    %26 = vector.shape_cast %25 : vector<1x4x64xf32> to vector<4x64xf32>
    %27 = tpu.iota {dimensions = array<i32: 0>} : vector<16x1xi32>
    %c8_i32 = arith.constant 8 : i32
    %c0_i32_18 = arith.constant 0 : i32
    %28 = arith.cmpi eq, %c8_i32, %c0_i32_18 : i32
    %c1_i32 = arith.constant 1 : i32
    %29 = arith.select %28, %c1_i32, %c8_i32 : i32
    %30 = vector.broadcast %29 : i32 to vector<16x1xi32>
    %31 = arith.remsi %27, %30 : vector<16x1xi32>
    %c0_i32_19 = arith.constant 0 : i32
    %32 = vector.broadcast %c0_i32_19 : i32 to vector<16x1xi32>
    %33 = arith.cmpi ne, %31, %32 : vector<16x1xi32>
    %c0_i32_20 = arith.constant 0 : i32
    %34 = vector.broadcast %c0_i32_20 : i32 to vector<16x1xi32>
    %35 = arith.cmpi slt, %31, %34 : vector<16x1xi32>
    %c0_i32_21 = arith.constant 0 : i32
    %36 = arith.cmpi slt, %29, %c0_i32_21 : i32
    %37 = vector.broadcast %36 : i1 to vector<16x1xi1>
    %38 = vector.broadcast %37 : vector<16x1xi1> to vector<16x1xi1>
    %39 = arith.xori %35, %38 : vector<16x1xi1>
    %40 = arith.andi %39, %33 : vector<16x1xi1>
    %41 = vector.broadcast %29 : i32 to vector<16x1xi32>
    %42 = arith.addi %31, %41 : vector<16x1xi32>
    %43 = arith.select %40, %42, %31 : vector<16x1xi1>, vector<16x1xi32>
    %44 = vector.extract_strided_slice %26 {offsets = [3, 0], sizes = [1, 64], strides = [1, 1]} : vector<4x64xf32> to vector<1x64xf32>
    %45 = vector.broadcast %44 : vector<1x64xf32> to vector<16x64xf32>
    %46 = arith.mulf %21, %45 : vector<16x64xf32>
    %c3_i32 = arith.constant 3 : i32
    %47 = tpu.dynamic_rotate %21 by %c3_i32 dim 0 : vector<16x64xf32>, i32 -> vector<16x64xf32>
    %c3_i32_22 = arith.constant 3 : i32
    %48 = vector.broadcast %c3_i32_22 : i32 to vector<16x1xi32>
    %49 = arith.cmpi sge, %43, %48 : vector<16x1xi32>
    %cst_23 = arith.constant 0.000000e+00 : f32
    %50 = vector.shape_cast %49 : vector<16x1xi1> to vector<16x1xi1>
    %51 = vector.broadcast %50 : vector<16x1xi1> to vector<16x64xi1>
    %52 = vector.broadcast %cst_23 : f32 to vector<16x64xf32>
    %53 = arith.select %51, %47, %52 : vector<16x64xi1>, vector<16x64xf32>
    %54 = vector.extract_strided_slice %26 {offsets = [0, 0], sizes = [1, 64], strides = [1, 1]} : vector<4x64xf32> to vector<1x64xf32>
    %55 = vector.broadcast %54 : vector<1x64xf32> to vector<16x64xf32>
    %56 = arith.mulf %53, %55 : vector<16x64xf32>
    %57 = arith.addf %46, %56 : vector<16x64xf32>
    %c2_i32 = arith.constant 2 : i32
    %58 = tpu.dynamic_rotate %21 by %c2_i32 dim 0 : vector<16x64xf32>, i32 -> vector<16x64xf32>
    %c2_i32_24 = arith.constant 2 : i32
    %59 = vector.broadcast %c2_i32_24 : i32 to vector<16x1xi32>
    %60 = arith.cmpi sge, %43, %59 : vector<16x1xi32>
    %cst_25 = arith.constant 0.000000e+00 : f32
    %61 = vector.shape_cast %60 : vector<16x1xi1> to vector<16x1xi1>
    %62 = vector.broadcast %61 : vector<16x1xi1> to vector<16x64xi1>
    %63 = vector.broadcast %cst_25 : f32 to vector<16x64xf32>
    %64 = arith.select %62, %58, %63 : vector<16x64xi1>, vector<16x64xf32>
    %65 = vector.extract_strided_slice %26 {offsets = [1, 0], sizes = [1, 64], strides = [1, 1]} : vector<4x64xf32> to vector<1x64xf32>
    %66 = vector.broadcast %65 : vector<1x64xf32> to vector<16x64xf32>
    %67 = arith.mulf %64, %66 : vector<16x64xf32>
    %68 = arith.addf %57, %67 : vector<16x64xf32>
    %c1_i32_26 = arith.constant 1 : i32
    %69 = tpu.dynamic_rotate %21 by %c1_i32_26 dim 0 : vector<16x64xf32>, i32 -> vector<16x64xf32>
    %c1_i32_27 = arith.constant 1 : i32
    %70 = vector.broadcast %c1_i32_27 : i32 to vector<16x1xi32>
    %71 = arith.cmpi sge, %43, %70 : vector<16x1xi32>
    %cst_28 = arith.constant 0.000000e+00 : f32
    %72 = vector.shape_cast %71 : vector<16x1xi1> to vector<16x1xi1>
    %73 = vector.broadcast %72 : vector<16x1xi1> to vector<16x64xi1>
    %74 = vector.broadcast %cst_28 : f32 to vector<16x64xf32>
    %75 = arith.select %73, %69, %74 : vector<16x64xi1>, vector<16x64xf32>
    %76 = vector.extract_strided_slice %26 {offsets = [2, 0], sizes = [1, 64], strides = [1, 1]} : vector<4x64xf32> to vector<1x64xf32>
    %77 = vector.broadcast %76 : vector<1x64xf32> to vector<16x64xf32>
    %78 = arith.mulf %75, %77 : vector<16x64xf32>
    %79 = arith.addf %68, %78 : vector<16x64xf32>
    %c0_29 = arith.constant 0 : index
    %c0_30 = arith.constant 0 : index
    %c0_31 = arith.constant 0 : index
    %80 = vector.load %arg9[%c0_29, %c0_30, %c0_31] : memref<1x1x64xf32, #tpu.memory_space<vmem>>, vector<1x1x64xf32>
    %81 = vector.shape_cast %80 : vector<1x1x64xf32> to vector<1x64xf32>
    %82 = vector.broadcast %81 : vector<1x64xf32> to vector<16x64xf32>
    %83 = arith.addf %79, %82 : vector<16x64xf32>
    %84 = math.absf %83 : vector<16x64xf32>
    %cst_32 = arith.constant 0.000000e+00 : f32
    %85 = vector.broadcast %cst_32 : f32 to vector<16x64xf32>
    %86 = arith.subf %85, %84 : vector<16x64xf32>
    %87 = math.exp %86 : vector<16x64xf32>
    %cst_33 = arith.constant 0.000000e+00 : f32
    %88 = vector.broadcast %cst_33 : f32 to vector<16x64xf32>
    %89 = arith.cmpf oge, %83, %88 : vector<16x64xf32>
    %cst_34 = arith.constant 1.000000e+00 : f32
    %90 = vector.broadcast %cst_34 : f32 to vector<16x64xf32>
    %91 = arith.select %89, %90, %87 : vector<16x64xi1>, vector<16x64xf32>
    %cst_35 = arith.constant 1.000000e+00 : f32
    %92 = vector.broadcast %cst_35 : f32 to vector<16x64xf32>
    %93 = arith.addf %92, %87 : vector<16x64xf32>
    %94 = tpu.reciprocal %93 {approx = true} : vector<16x64xf32> -> vector<16x64xf32>
    %95 = arith.mulf %91, %94 : vector<16x64xf32>
    %96 = arith.mulf %83, %95 : vector<16x64xf32>
    %97 = arith.truncf %96 : vector<16x64xf32> to vector<16x64xbf16>
    %c0_36 = arith.constant 0 : index
    %c0_37 = arith.constant 0 : index
    %c0_38 = arith.constant 0 : index
    %98 = vector.load %arg10[%c0_36, %c0_37, %c0_38] : memref<1x64x34xbf16, #tpu.memory_space<vmem>>, vector<1x64x34xbf16>
    %99 = vector.shape_cast %98 : vector<1x64x34xbf16> to vector<64x34xbf16>
    %cst_39 = arith.constant dense<0.000000e+00> : vector<16x34xf32>
    %100 = tpu.matmul %97, %99, %cst_39 {dimension_numbers = #tpu.dot_dimension_numbers<[1], [0], [0], [1], [0, 0, 1, 1], [], []>} : vector<16x64xbf16>, vector<64x34xbf16>, vector<16x34xf32> -> vector<16x34xf32>
    %101 = vector.extract_strided_slice %100 {offsets = [0, 0], sizes = [16, 2], strides = [1, 1]} : vector<16x34xf32> to vector<16x2xf32>
    %102 = vector.extract_strided_slice %100 {offsets = [0, 2], sizes = [16, 16], strides = [1, 1]} : vector<16x34xf32> to vector<16x16xf32>
    %103 = vector.extract_strided_slice %100 {offsets = [0, 18], sizes = [16, 16], strides = [1, 1]} : vector<16x34xf32> to vector<16x16xf32>
    %c0_40 = arith.constant 0 : index
    %c0_41 = arith.constant 0 : index
    %c0_42 = arith.constant 0 : index
    %104 = vector.load %arg11[%c0_40, %c0_41, %c0_42] : memref<1x2x64xf32, #tpu.memory_space<vmem>>, vector<1x2x64xf32>
    %105 = vector.shape_cast %104 : vector<1x2x64xf32> to vector<2x64xf32>
    %cst_43 = arith.constant dense<0.000000e+00> : vector<16x64xf32>
    %106 = tpu.matmul %101, %105, %cst_43 {dimension_numbers = #tpu.dot_dimension_numbers<[1], [0], [0], [1], [0, 0, 1, 1], [], []>} : vector<16x2xf32>, vector<2x64xf32>, vector<16x64xf32> -> vector<16x64xf32>
    %c0_44 = arith.constant 0 : index
    %c0_45 = arith.constant 0 : index
    %c0_46 = arith.constant 0 : index
    %107 = vector.load %arg12[%c0_44, %c0_45, %c0_46] : memref<1x1x64xf32, #tpu.memory_space<vmem>>, vector<1x1x64xf32>
    %108 = vector.shape_cast %107 : vector<1x1x64xf32> to vector<1x64xf32>
    %109 = vector.broadcast %108 : vector<1x64xf32> to vector<16x64xf32>
    %110 = arith.addf %106, %109 : vector<16x64xf32>
    %cst_47 = arith.constant 0.000000e+00 : f32
    %111 = vector.broadcast %cst_47 : f32 to vector<16x64xf32>
    %112 = arith.maximumf %110, %111 : vector<16x64xf32>
    %113 = math.absf %110 : vector<16x64xf32>
    %cst_48 = arith.constant 0.000000e+00 : f32
    %114 = vector.broadcast %cst_48 : f32 to vector<16x64xf32>
    %115 = arith.subf %114, %113 : vector<16x64xf32>
    %116 = math.exp %115 : vector<16x64xf32>
    %117 = math.log1p %116 : vector<16x64xf32>
    %118 = arith.addf %112, %117 : vector<16x64xf32>
    %c0_49 = arith.constant 0 : index
    %c0_50 = arith.constant 0 : index
    %c0_51 = arith.constant 0 : index
    %119 = vector.load %arg13[%c0_49, %c0_50, %c0_51] : memref<1x16x64xf32, #tpu.memory_space<vmem>>, vector<1x16x64xf32>
    %120 = vector.shape_cast %119 : vector<1x16x64xf32> to vector<16x64xf32>
    %121 = math.exp %120 : vector<16x64xf32>
    %cst_52 = arith.constant 0.000000e+00 : f32
    %122 = vector.broadcast %cst_52 : f32 to vector<16x64xf32>
    %123 = arith.subf %122, %121 : vector<16x64xf32>
    %c0_53 = arith.constant 0 : index
    %c0_54 = arith.constant 0 : index
    %124 = vector.load %arg19[%c0_53, %c0_54] : memref<16x64xf32, #tpu.memory_space<vmem>>, vector<16x64xf32>
    tpu.vector_store %arg19[%c0_53, %c0_54], %118 {strides = array<i32>} : memref<16x64xf32, #tpu.memory_space<vmem>>, vector<16x64xf32>,
    %125 = arith.mulf %118, %96 : vector<16x64xf32>
    %c0_55 = arith.constant 0 : index
    %c0_56 = arith.constant 0 : index
    %126 = vector.load %arg20[%c0_55, %c0_56] : memref<16x64xf32, #tpu.memory_space<vmem>>, vector<16x64xf32>
    tpu.vector_store %arg20[%c0_55, %c0_56], %125 {strides = array<i32>} : memref<16x64xf32, #tpu.memory_space<vmem>>, vector<16x64xf32>,
    %c0_57 = arith.constant 0 : index
    %c0_58 = arith.constant 0 : index
    %127 = vector.load %arg21[%c0_57, %c0_58] : memref<16x16xf32, #tpu.memory_space<vmem>>, vector<16x16xf32>
    tpu.vector_store %arg21[%c0_57, %c0_58], %102 {strides = array<i32>} : memref<16x16xf32, #tpu.memory_space<vmem>>, vector<16x16xf32>,
    %c0_59 = arith.constant 0 : index
    %c0_60 = arith.constant 0 : index
    %128 = vector.load %arg22[%c0_59, %c0_60] : memref<16x16xf32, #tpu.memory_space<vmem>>, vector<16x16xf32>
    tpu.vector_store %arg22[%c0_59, %c0_60], %103 {strides = array<i32>} : memref<16x16xf32, #tpu.memory_space<vmem>>, vector<16x16xf32>,
    %cst_61 = arith.constant 0.000000e+00 : f32
    %129 = vector.broadcast %cst_61 : f32 to vector<16x64xf32>
    %cst_62 = arith.constant 0.000000e+00 : f32
    %130 = vector.broadcast %cst_62 : f32 to vector<16x64xf32>
    %c0_i32_63 = arith.constant 0 : i32
    %c8_i32_64 = arith.constant 8 : i32
    %131 = arith.muli %c0_i32_63, %c8_i32_64 : i32
    %c0_i32_65 = arith.constant 0 : i32
    %132 = arith.addi %c0_i32_65, %131 : i32
    %133 = tpu.assume_multiple %132, 8 : i32
    %134 = arith.index_cast %133 : i32 to index
    %c0_66 = arith.constant 0 : index
    %135 = vector.load %arg19[%134, %c0_66] : memref<16x64xf32, #tpu.memory_space<vmem>>, vector<8x64xf32>
    %136 = arith.index_cast %133 : i32 to index
    %c0_67 = arith.constant 0 : index
    %137 = vector.load %arg20[%136, %c0_67] : memref<16x64xf32, #tpu.memory_space<vmem>>, vector<8x64xf32>
    %138 = arith.index_cast %133 : i32 to index
    %c0_68 = arith.constant 0 : index
    %139 = vector.load %arg21[%138, %c0_68] : memref<16x16xf32, #tpu.memory_space<vmem>>, vector<8x16xf32>
    %140 = vector.shape_cast %139 : vector<8x16xf32> to vector<8x16x1xf32>
    %141 = arith.index_cast %133 : i32 to index
    %c0_69 = arith.constant 0 : index
    %142 = vector.load %arg22[%141, %c0_69] : memref<16x16xf32, #tpu.memory_space<vmem>>, vector<8x16xf32>
    %143 = vector.shape_cast %142 : vector<8x16xf32> to vector<8x16x1xf32>
    %144 = vector.extract_strided_slice %135 {offsets = [0, 0], sizes = [1, 64], strides = [1, 1]} : vector<8x64xf32> to vector<1x64xf32>
    %145 = vector.broadcast %144 : vector<1x64xf32> to vector<16x64xf32>
    %146 = arith.mulf %145, %123 : vector<16x64xf32>
    %147 = math.exp %146 : vector<16x64xf32>
    %148 = arith.mulf %147, %129 : vector<16x64xf32>
    %149 = vector.extract_strided_slice %137 {offsets = [0, 0], sizes = [1, 64], strides = [1, 1]} : vector<8x64xf32> to vector<1x64xf32>
    %150 = vector.extract_strided_slice %140 {offsets = [0, 0, 0], sizes = [1, 16, 1], strides = [1, 1, 1]} : vector<8x16x1xf32> to vector<1x16x1xf32>
    %151 = vector.shape_cast %150 : vector<1x16x1xf32> to vector<16x1xf32>
    %152 = vector.broadcast %149 : vector<1x64xf32> to vector<16x64xf32>
    %153 = vector.broadcast %151 : vector<16x1xf32> to vector<16x64xf32>
    %154 = arith.mulf %152, %153 : vector<16x64xf32>
    %155 = arith.addf %148, %154 : vector<16x64xf32>
    %156 = vector.extract_strided_slice %143 {offsets = [0, 0, 0], sizes = [1, 16, 1], strides = [1, 1, 1]} : vector<8x16x1xf32> to vector<1x16x1xf32>
    %157 = vector.shape_cast %156 : vector<1x16x1xf32> to vector<16x1xf32>
    %158 = vector.broadcast %157 : vector<16x1xf32> to vector<16x64xf32>
    %159 = arith.mulf %155, %158 : vector<16x64xf32>
    %cst_70 = arith.constant dense<0.000000e+00> : vector<64xf32>
    %160 = vector.multi_reduction <add>, %159, %cst_70 [0] : vector<16x64xf32> to vector<64xf32>
    %161 = vector.shape_cast %160 : vector<64xf32> to vector<1x64xf32>
    %162 = vector.extract_strided_slice %135 {offsets = [1, 0], sizes = [1, 64], strides = [1, 1]} : vector<8x64xf32> to vector<1x64xf32>
    %163 = vector.broadcast %162 : vector<1x64xf32> to vector<16x64xf32>
    %164 = arith.mulf %163, %123 : vector<16x64xf32>
    %165 = math.exp %164 : vector<16x64xf32>
    %166 = arith.mulf %165, %155 : vector<16x64xf32>
    %167 = vector.extract_strided_slice %137 {offsets = [1, 0], sizes = [1, 64], strides = [1, 1]} : vector<8x64xf32> to vector<1x64xf32>
    %168 = vector.extract_strided_slice %140 {offsets = [1, 0, 0], sizes = [1, 16, 1], strides = [1, 1, 1]} : vector<8x16x1xf32> to vector<1x16x1xf32>
    %169 = vector.shape_cast %168 : vector<1x16x1xf32> to vector<16x1xf32>
    %170 = vector.broadcast %167 : vector<1x64xf32> to vector<16x64xf32>
    %171 = vector.broadcast %169 : vector<16x1xf32> to vector<16x64xf32>
    %172 = arith.mulf %170, %171 : vector<16x64xf32>
    %173 = arith.addf %166, %172 : vector<16x64xf32>
    %174 = vector.extract_strided_slice %143 {offsets = [1, 0, 0], sizes = [1, 16, 1], strides = [1, 1, 1]} : vector<8x16x1xf32> to vector<1x16x1xf32>
    %175 = vector.shape_cast %174 : vector<1x16x1xf32> to vector<16x1xf32>
    %176 = vector.broadcast %175 : vector<16x1xf32> to vector<16x64xf32>
    %177 = arith.mulf %173, %176 : vector<16x64xf32>
    %cst_71 = arith.constant dense<0.000000e+00> : vector<64xf32>
    %178 = vector.multi_reduction <add>, %177, %cst_71 [0] : vector<16x64xf32> to vector<64xf32>
    %179 = vector.shape_cast %178 : vector<64xf32> to vector<1x64xf32>
    %180 = vector.extract_strided_slice %135 {offsets = [2, 0], sizes = [1, 64], strides = [1, 1]} : vector<8x64xf32> to vector<1x64xf32>
    %181 = vector.broadcast %180 : vector<1x64xf32> to vector<16x64xf32>
    %182 = arith.mulf %181, %123 : vector<16x64xf32>
    %183 = math.exp %182 : vector<16x64xf32>
    %184 = arith.mulf %183, %173 : vector<16x64xf32>
    %185 = vector.extract_strided_slice %137 {offsets = [2, 0], sizes = [1, 64], strides = [1, 1]} : vector<8x64xf32> to vector<1x64xf32>
    %186 = vector.extract_strided_slice %140 {offsets = [2, 0, 0], sizes = [1, 16, 1], strides = [1, 1, 1]} : vector<8x16x1xf32> to vector<1x16x1xf32>
    %187 = vector.shape_cast %186 : vector<1x16x1xf32> to vector<16x1xf32>
    %188 = vector.broadcast %185 : vector<1x64xf32> to vector<16x64xf32>
    %189 = vector.broadcast %187 : vector<16x1xf32> to vector<16x64xf32>
    %190 = arith.mulf %188, %189 : vector<16x64xf32>
    %191 = arith.addf %184, %190 : vector<16x64xf32>
    %192 = vector.extract_strided_slice %143 {offsets = [2, 0, 0], sizes = [1, 16, 1], strides = [1, 1, 1]} : vector<8x16x1xf32> to vector<1x16x1xf32>
    %193 = vector.shape_cast %192 : vector<1x16x1xf32> to vector<16x1xf32>
    %194 = vector.broadcast %193 : vector<16x1xf32> to vector<16x64xf32>
    %195 = arith.mulf %191, %194 : vector<16x64xf32>
    %cst_72 = arith.constant dense<0.000000e+00> : vector<64xf32>
    %196 = vector.multi_reduction <add>, %195, %cst_72 [0] : vector<16x64xf32> to vector<64xf32>
    %197 = vector.shape_cast %196 : vector<64xf32> to vector<1x64xf32>
    %198 = vector.extract_strided_slice %135 {offsets = [3, 0], sizes = [1, 64], strides = [1, 1]} : vector<8x64xf32> to vector<1x64xf32>
    %199 = vector.broadcast %198 : vector<1x64xf32> to vector<16x64xf32>
    %200 = arith.mulf %199, %123 : vector<16x64xf32>
    %201 = math.exp %200 : vector<16x64xf32>
    %202 = arith.mulf %201, %191 : vector<16x64xf32>
    %203 = vector.extract_strided_slice %137 {offsets = [3, 0], sizes = [1, 64], strides = [1, 1]} : vector<8x64xf32> to vector<1x64xf32>
    %204 = vector.extract_strided_slice %140 {offsets = [3, 0, 0], sizes = [1, 16, 1], strides = [1, 1, 1]} : vector<8x16x1xf32> to vector<1x16x1xf32>
    %205 = vector.shape_cast %204 : vector<1x16x1xf32> to vector<16x1xf32>
    %206 = vector.broadcast %203 : vector<1x64xf32> to vector<16x64xf32>
    %207 = vector.broadcast %205 : vector<16x1xf32> to vector<16x64xf32>
    %208 = arith.mulf %206, %207 : vector<16x64xf32>
    %209 = arith.addf %202, %208 : vector<16x64xf32>
    %210 = vector.extract_strided_slice %143 {offsets = [3, 0, 0], sizes = [1, 16, 1], strides = [1, 1, 1]} : vector<8x16x1xf32> to vector<1x16x1xf32>
    %211 = vector.shape_cast %210 : vector<1x16x1xf32> to vector<16x1xf32>
    %212 = vector.broadcast %211 : vector<16x1xf32> to vector<16x64xf32>
    %213 = arith.mulf %209, %212 : vector<16x64xf32>
    %cst_73 = arith.constant dense<0.000000e+00> : vector<64xf32>
    %214 = vector.multi_reduction <add>, %213, %cst_73 [0] : vector<16x64xf32> to vector<64xf32>
    %215 = vector.shape_cast %214 : vector<64xf32> to vector<1x64xf32>
    %216 = vector.extract_strided_slice %135 {offsets = [4, 0], sizes = [1, 64], strides = [1, 1]} : vector<8x64xf32> to vector<1x64xf32>
    %217 = vector.broadcast %216 : vector<1x64xf32> to vector<16x64xf32>
    %218 = arith.mulf %217, %123 : vector<16x64xf32>
    %219 = math.exp %218 : vector<16x64xf32>
    %220 = arith.mulf %219, %209 : vector<16x64xf32>
    %221 = vector.extract_strided_slice %137 {offsets = [4, 0], sizes = [1, 64], strides = [1, 1]} : vector<8x64xf32> to vector<1x64xf32>
    %222 = vector.extract_strided_slice %140 {offsets = [4, 0, 0], sizes = [1, 16, 1], strides = [1, 1, 1]} : vector<8x16x1xf32> to vector<1x16x1xf32>
    %223 = vector.shape_cast %222 : vector<1x16x1xf32> to vector<16x1xf32>
    %224 = vector.broadcast %221 : vector<1x64xf32> to vector<16x64xf32>
    %225 = vector.broadcast %223 : vector<16x1xf32> to vector<16x64xf32>
    %226 = arith.mulf %224, %225 : vector<16x64xf32>
    %227 = arith.addf %220, %226 : vector<16x64xf32>
    %228 = vector.extract_strided_slice %143 {offsets = [4, 0, 0], sizes = [1, 16, 1], strides = [1, 1, 1]} : vector<8x16x1xf32> to vector<1x16x1xf32>
    %229 = vector.shape_cast %228 : vector<1x16x1xf32> to vector<16x1xf32>
    %230 = vector.broadcast %229 : vector<16x1xf32> to vector<16x64xf32>
    %231 = arith.mulf %227, %230 : vector<16x64xf32>
    %cst_74 = arith.constant dense<0.000000e+00> : vector<64xf32>
    %232 = vector.multi_reduction <add>, %231, %cst_74 [0] : vector<16x64xf32> to vector<64xf32>
    %233 = vector.shape_cast %232 : vector<64xf32> to vector<1x64xf32>
    %234 = vector.extract_strided_slice %135 {offsets = [5, 0], sizes = [1, 64], strides = [1, 1]} : vector<8x64xf32> to vector<1x64xf32>
    %235 = vector.broadcast %234 : vector<1x64xf32> to vector<16x64xf32>
    %236 = arith.mulf %235, %123 : vector<16x64xf32>
    %237 = math.exp %236 : vector<16x64xf32>
    %238 = arith.mulf %237, %227 : vector<16x64xf32>
    %239 = vector.extract_strided_slice %137 {offsets = [5, 0], sizes = [1, 64], strides = [1, 1]} : vector<8x64xf32> to vector<1x64xf32>
    %240 = vector.extract_strided_slice %140 {offsets = [5, 0, 0], sizes = [1, 16, 1], strides = [1, 1, 1]} : vector<8x16x1xf32> to vector<1x16x1xf32>
    %241 = vector.shape_cast %240 : vector<1x16x1xf32> to vector<16x1xf32>
    %242 = vector.broadcast %239 : vector<1x64xf32> to vector<16x64xf32>
    %243 = vector.broadcast %241 : vector<16x1xf32> to vector<16x64xf32>
    %244 = arith.mulf %242, %243 : vector<16x64xf32>
    %245 = arith.addf %238, %244 : vector<16x64xf32>
    %246 = vector.extract_strided_slice %143 {offsets = [5, 0, 0], sizes = [1, 16, 1], strides = [1, 1, 1]} : vector<8x16x1xf32> to vector<1x16x1xf32>
    %247 = vector.shape_cast %246 : vector<1x16x1xf32> to vector<16x1xf32>
    %248 = vector.broadcast %247 : vector<16x1xf32> to vector<16x64xf32>
    %249 = arith.mulf %245, %248 : vector<16x64xf32>
    %cst_75 = arith.constant dense<0.000000e+00> : vector<64xf32>
    %250 = vector.multi_reduction <add>, %249, %cst_75 [0] : vector<16x64xf32> to vector<64xf32>
    %251 = vector.shape_cast %250 : vector<64xf32> to vector<1x64xf32>
    %252 = vector.extract_strided_slice %135 {offsets = [6, 0], sizes = [1, 64], strides = [1, 1]} : vector<8x64xf32> to vector<1x64xf32>
    %253 = vector.broadcast %252 : vector<1x64xf32> to vector<16x64xf32>
    %254 = arith.mulf %253, %123 : vector<16x64xf32>
    %255 = math.exp %254 : vector<16x64xf32>
    %256 = arith.mulf %255, %245 : vector<16x64xf32>
    %257 = vector.extract_strided_slice %137 {offsets = [6, 0], sizes = [1, 64], strides = [1, 1]} : vector<8x64xf32> to vector<1x64xf32>
    %258 = vector.extract_strided_slice %140 {offsets = [6, 0, 0], sizes = [1, 16, 1], strides = [1, 1, 1]} : vector<8x16x1xf32> to vector<1x16x1xf32>
    %259 = vector.shape_cast %258 : vector<1x16x1xf32> to vector<16x1xf32>
    %260 = vector.broadcast %257 : vector<1x64xf32> to vector<16x64xf32>
    %261 = vector.broadcast %259 : vector<16x1xf32> to vector<16x64xf32>
    %262 = arith.mulf %260, %261 : vector<16x64xf32>
    %263 = arith.addf %256, %262 : vector<16x64xf32>
    %264 = vector.extract_strided_slice %143 {offsets = [6, 0, 0], sizes = [1, 16, 1], strides = [1, 1, 1]} : vector<8x16x1xf32> to vector<1x16x1xf32>
    %265 = vector.shape_cast %264 : vector<1x16x1xf32> to vector<16x1xf32>
    %266 = vector.broadcast %265 : vector<16x1xf32> to vector<16x64xf32>
    %267 = arith.mulf %263, %266 : vector<16x64xf32>
    %cst_76 = arith.constant dense<0.000000e+00> : vector<64xf32>
    %268 = vector.multi_reduction <add>, %267, %cst_76 [0] : vector<16x64xf32> to vector<64xf32>
    %269 = vector.shape_cast %268 : vector<64xf32> to vector<1x64xf32>
    %270 = vector.extract_strided_slice %135 {offsets = [7, 0], sizes = [1, 64], strides = [1, 1]} : vector<8x64xf32> to vector<1x64xf32>
    %271 = vector.broadcast %270 : vector<1x64xf32> to vector<16x64xf32>
    %272 = arith.mulf %271, %123 : vector<16x64xf32>
    %273 = math.exp %272 : vector<16x64xf32>
    %274 = arith.mulf %273, %263 : vector<16x64xf32>
    %275 = vector.extract_strided_slice %137 {offsets = [7, 0], sizes = [1, 64], strides = [1, 1]} : vector<8x64xf32> to vector<1x64xf32>
    %276 = vector.extract_strided_slice %140 {offsets = [7, 0, 0], sizes = [1, 16, 1], strides = [1, 1, 1]} : vector<8x16x1xf32> to vector<1x16x1xf32>
    %277 = vector.shape_cast %276 : vector<1x16x1xf32> to vector<16x1xf32>
    %278 = vector.broadcast %275 : vector<1x64xf32> to vector<16x64xf32>
    %279 = vector.broadcast %277 : vector<16x1xf32> to vector<16x64xf32>
    %280 = arith.mulf %278, %279 : vector<16x64xf32>
    %281 = arith.addf %274, %280 : vector<16x64xf32>
    %282 = vector.extract_strided_slice %143 {offsets = [7, 0, 0], sizes = [1, 16, 1], strides = [1, 1, 1]} : vector<8x16x1xf32> to vector<1x16x1xf32>
    %283 = vector.shape_cast %282 : vector<1x16x1xf32> to vector<16x1xf32>
    %284 = vector.broadcast %283 : vector<16x1xf32> to vector<16x64xf32>
    %285 = arith.mulf %281, %284 : vector<16x64xf32>
    %cst_77 = arith.constant dense<0.000000e+00> : vector<64xf32>
    %286 = vector.multi_reduction <add>, %285, %cst_77 [0] : vector<16x64xf32> to vector<64xf32>
    %287 = vector.shape_cast %286 : vector<64xf32> to vector<1x64xf32>
    %288 = tpu.concatenate %161, %179, %197, %215, %233, %251, %269, %287 in 0 : vector<1x64xf32>, vector<1x64xf32>, vector<1x64xf32>, vector<1x64xf32>, vector<1x64xf32>, vector<1x64xf32>, vector<1x64xf32>, vector<1x64xf32> -> vector<8x64xf32>
    %289 = arith.index_cast %133 : i32 to index
    %c0_78 = arith.constant 0 : index
    %290 = vector.load %arg23[%289, %c0_78] : memref<16x64xf32, #tpu.memory_space<vmem>>, vector<8x64xf32>
    tpu.vector_store %arg23[%289, %c0_78], %288 {strides = array<i32>} : memref<16x64xf32, #tpu.memory_space<vmem>>, vector<8x64xf32>,
    %c8_i32_79 = arith.constant 8 : i32
    %291 = arith.muli %c0_i32_63, %c8_i32_79 : i32
    %c8_i32_80 = arith.constant 8 : i32
    %292 = arith.addi %c8_i32_80, %291 : i32
    %293 = tpu.assume_multiple %292, 8 : i32
    %294 = arith.index_cast %293 : i32 to index
    %c0_81 = arith.constant 0 : index
    %295 = vector.load %arg19[%294, %c0_81] : memref<16x64xf32, #tpu.memory_space<vmem>>, vector<8x64xf32>
    %296 = arith.index_cast %293 : i32 to index
    %c0_82 = arith.constant 0 : index
    %297 = vector.load %arg20[%296, %c0_82] : memref<16x64xf32, #tpu.memory_space<vmem>>, vector<8x64xf32>
    %298 = arith.index_cast %293 : i32 to index
    %c0_83 = arith.constant 0 : index
    %299 = vector.load %arg21[%298, %c0_83] : memref<16x16xf32, #tpu.memory_space<vmem>>, vector<8x16xf32>
    %300 = vector.shape_cast %299 : vector<8x16xf32> to vector<8x16x1xf32>
    %301 = arith.index_cast %293 : i32 to index
    %c0_84 = arith.constant 0 : index
    %302 = vector.load %arg22[%301, %c0_84] : memref<16x16xf32, #tpu.memory_space<vmem>>, vector<8x16xf32>
    %303 = vector.shape_cast %302 : vector<8x16xf32> to vector<8x16x1xf32>
    %304 = vector.extract_strided_slice %295 {offsets = [0, 0], sizes = [1, 64], strides = [1, 1]} : vector<8x64xf32> to vector<1x64xf32>
    %305 = vector.broadcast %304 : vector<1x64xf32> to vector<16x64xf32>
    %306 = arith.mulf %305, %123 : vector<16x64xf32>
    %307 = math.exp %306 : vector<16x64xf32>
    %308 = arith.mulf %307, %130 : vector<16x64xf32>
    %309 = vector.extract_strided_slice %297 {offsets = [0, 0], sizes = [1, 64], strides = [1, 1]} : vector<8x64xf32> to vector<1x64xf32>
    %310 = vector.extract_strided_slice %300 {offsets = [0, 0, 0], sizes = [1, 16, 1], strides = [1, 1, 1]} : vector<8x16x1xf32> to vector<1x16x1xf32>
    %311 = vector.shape_cast %310 : vector<1x16x1xf32> to vector<16x1xf32>
    %312 = vector.broadcast %309 : vector<1x64xf32> to vector<16x64xf32>
    %313 = vector.broadcast %311 : vector<16x1xf32> to vector<16x64xf32>
    %314 = arith.mulf %312, %313 : vector<16x64xf32>
    %315 = arith.addf %308, %314 : vector<16x64xf32>
    %316 = vector.extract_strided_slice %303 {offsets = [0, 0, 0], sizes = [1, 16, 1], strides = [1, 1, 1]} : vector<8x16x1xf32> to vector<1x16x1xf32>
    %317 = vector.shape_cast %316 : vector<1x16x1xf32> to vector<16x1xf32>
    %318 = vector.broadcast %317 : vector<16x1xf32> to vector<16x64xf32>
    %319 = arith.mulf %315, %318 : vector<16x64xf32>
    %cst_85 = arith.constant dense<0.000000e+00> : vector<64xf32>
    %320 = vector.multi_reduction <add>, %319, %cst_85 [0] : vector<16x64xf32> to vector<64xf32>
    %321 = vector.shape_cast %320 : vector<64xf32> to vector<1x64xf32>
    %322 = vector.extract_strided_slice %295 {offsets = [1, 0], sizes = [1, 64], strides = [1, 1]} : vector<8x64xf32> to vector<1x64xf32>
    %323 = vector.broadcast %322 : vector<1x64xf32> to vector<16x64xf32>
    %324 = arith.mulf %323, %123 : vector<16x64xf32>
    %325 = math.exp %324 : vector<16x64xf32>
    %326 = arith.mulf %325, %315 : vector<16x64xf32>
    %327 = vector.extract_strided_slice %297 {offsets = [1, 0], sizes = [1, 64], strides = [1, 1]} : vector<8x64xf32> to vector<1x64xf32>
    %328 = vector.extract_strided_slice %300 {offsets = [1, 0, 0], sizes = [1, 16, 1], strides = [1, 1, 1]} : vector<8x16x1xf32> to vector<1x16x1xf32>
    %329 = vector.shape_cast %328 : vector<1x16x1xf32> to vector<16x1xf32>
    %330 = vector.broadcast %327 : vector<1x64xf32> to vector<16x64xf32>
    %331 = vector.broadcast %329 : vector<16x1xf32> to vector<16x64xf32>
    %332 = arith.mulf %330, %331 : vector<16x64xf32>
    %333 = arith.addf %326, %332 : vector<16x64xf32>
    %334 = vector.extract_strided_slice %303 {offsets = [1, 0, 0], sizes = [1, 16, 1], strides = [1, 1, 1]} : vector<8x16x1xf32> to vector<1x16x1xf32>
    %335 = vector.shape_cast %334 : vector<1x16x1xf32> to vector<16x1xf32>
    %336 = vector.broadcast %335 : vector<16x1xf32> to vector<16x64xf32>
    %337 = arith.mulf %333, %336 : vector<16x64xf32>
    %cst_86 = arith.constant dense<0.000000e+00> : vector<64xf32>
    %338 = vector.multi_reduction <add>, %337, %cst_86 [0] : vector<16x64xf32> to vector<64xf32>
    %339 = vector.shape_cast %338 : vector<64xf32> to vector<1x64xf32>
    %340 = vector.extract_strided_slice %295 {offsets = [2, 0], sizes = [1, 64], strides = [1, 1]} : vector<8x64xf32> to vector<1x64xf32>
    %341 = vector.broadcast %340 : vector<1x64xf32> to vector<16x64xf32>
    %342 = arith.mulf %341, %123 : vector<16x64xf32>
    %343 = math.exp %342 : vector<16x64xf32>
    %344 = arith.mulf %343, %333 : vector<16x64xf32>
    %345 = vector.extract_strided_slice %297 {offsets = [2, 0], sizes = [1, 64], strides = [1, 1]} : vector<8x64xf32> to vector<1x64xf32>
    %346 = vector.extract_strided_slice %300 {offsets = [2, 0, 0], sizes = [1, 16, 1], strides = [1, 1, 1]} : vector<8x16x1xf32> to vector<1x16x1xf32>
    %347 = vector.shape_cast %346 : vector<1x16x1xf32> to vector<16x1xf32>
    %348 = vector.broadcast %345 : vector<1x64xf32> to vector<16x64xf32>
    %349 = vector.broadcast %347 : vector<16x1xf32> to vector<16x64xf32>
    %350 = arith.mulf %348, %349 : vector<16x64xf32>
    %351 = arith.addf %344, %350 : vector<16x64xf32>
    %352 = vector.extract_strided_slice %303 {offsets = [2, 0, 0], sizes = [1, 16, 1], strides = [1, 1, 1]} : vector<8x16x1xf32> to vector<1x16x1xf32>
    %353 = vector.shape_cast %352 : vector<1x16x1xf32> to vector<16x1xf32>
    %354 = vector.broadcast %353 : vector<16x1xf32> to vector<16x64xf32>
    %355 = arith.mulf %351, %354 : vector<16x64xf32>
    %cst_87 = arith.constant dense<0.000000e+00> : vector<64xf32>
    %356 = vector.multi_reduction <add>, %355, %cst_87 [0] : vector<16x64xf32> to vector<64xf32>
    %357 = vector.shape_cast %356 : vector<64xf32> to vector<1x64xf32>
    %358 = vector.extract_strided_slice %295 {offsets = [3, 0], sizes = [1, 64], strides = [1, 1]} : vector<8x64xf32> to vector<1x64xf32>
    %359 = vector.broadcast %358 : vector<1x64xf32> to vector<16x64xf32>
    %360 = arith.mulf %359, %123 : vector<16x64xf32>
    %361 = math.exp %360 : vector<16x64xf32>
    %362 = arith.mulf %361, %351 : vector<16x64xf32>
    %363 = vector.extract_strided_slice %297 {offsets = [3, 0], sizes = [1, 64], strides = [1, 1]} : vector<8x64xf32> to vector<1x64xf32>
    %364 = vector.extract_strided_slice %300 {offsets = [3, 0, 0], sizes = [1, 16, 1], strides = [1, 1, 1]} : vector<8x16x1xf32> to vector<1x16x1xf32>
    %365 = vector.shape_cast %364 : vector<1x16x1xf32> to vector<16x1xf32>
    %366 = vector.broadcast %363 : vector<1x64xf32> to vector<16x64xf32>
    %367 = vector.broadcast %365 : vector<16x1xf32> to vector<16x64xf32>
    %368 = arith.mulf %366, %367 : vector<16x64xf32>
    %369 = arith.addf %362, %368 : vector<16x64xf32>
    %370 = vector.extract_strided_slice %303 {offsets = [3, 0, 0], sizes = [1, 16, 1], strides = [1, 1, 1]} : vector<8x16x1xf32> to vector<1x16x1xf32>
    %371 = vector.shape_cast %370 : vector<1x16x1xf32> to vector<16x1xf32>
    %372 = vector.broadcast %371 : vector<16x1xf32> to vector<16x64xf32>
    %373 = arith.mulf %369, %372 : vector<16x64xf32>
    %cst_88 = arith.constant dense<0.000000e+00> : vector<64xf32>
    %374 = vector.multi_reduction <add>, %373, %cst_88 [0] : vector<16x64xf32> to vector<64xf32>
    %375 = vector.shape_cast %374 : vector<64xf32> to vector<1x64xf32>
    %376 = vector.extract_strided_slice %295 {offsets = [4, 0], sizes = [1, 64], strides = [1, 1]} : vector<8x64xf32> to vector<1x64xf32>
    %377 = vector.broadcast %376 : vector<1x64xf32> to vector<16x64xf32>
    %378 = arith.mulf %377, %123 : vector<16x64xf32>
    %379 = math.exp %378 : vector<16x64xf32>
    %380 = arith.mulf %379, %369 : vector<16x64xf32>
    %381 = vector.extract_strided_slice %297 {offsets = [4, 0], sizes = [1, 64], strides = [1, 1]} : vector<8x64xf32> to vector<1x64xf32>
    %382 = vector.extract_strided_slice %300 {offsets = [4, 0, 0], sizes = [1, 16, 1], strides = [1, 1, 1]} : vector<8x16x1xf32> to vector<1x16x1xf32>
    %383 = vector.shape_cast %382 : vector<1x16x1xf32> to vector<16x1xf32>
    %384 = vector.broadcast %381 : vector<1x64xf32> to vector<16x64xf32>
    %385 = vector.broadcast %383 : vector<16x1xf32> to vector<16x64xf32>
    %386 = arith.mulf %384, %385 : vector<16x64xf32>
    %387 = arith.addf %380, %386 : vector<16x64xf32>
    %388 = vector.extract_strided_slice %303 {offsets = [4, 0, 0], sizes = [1, 16, 1], strides = [1, 1, 1]} : vector<8x16x1xf32> to vector<1x16x1xf32>
    %389 = vector.shape_cast %388 : vector<1x16x1xf32> to vector<16x1xf32>
    %390 = vector.broadcast %389 : vector<16x1xf32> to vector<16x64xf32>
    %391 = arith.mulf %387, %390 : vector<16x64xf32>
    %cst_89 = arith.constant dense<0.000000e+00> : vector<64xf32>
    %392 = vector.multi_reduction <add>, %391, %cst_89 [0] : vector<16x64xf32> to vector<64xf32>
    %393 = vector.shape_cast %392 : vector<64xf32> to vector<1x64xf32>
    %394 = vector.extract_strided_slice %295 {offsets = [5, 0], sizes = [1, 64], strides = [1, 1]} : vector<8x64xf32> to vector<1x64xf32>
    %395 = vector.broadcast %394 : vector<1x64xf32> to vector<16x64xf32>
    %396 = arith.mulf %395, %123 : vector<16x64xf32>
    %397 = math.exp %396 : vector<16x64xf32>
    %398 = arith.mulf %397, %387 : vector<16x64xf32>
    %399 = vector.extract_strided_slice %297 {offsets = [5, 0], sizes = [1, 64], strides = [1, 1]} : vector<8x64xf32> to vector<1x64xf32>
    %400 = vector.extract_strided_slice %300 {offsets = [5, 0, 0], sizes = [1, 16, 1], strides = [1, 1, 1]} : vector<8x16x1xf32> to vector<1x16x1xf32>
    %401 = vector.shape_cast %400 : vector<1x16x1xf32> to vector<16x1xf32>
    %402 = vector.broadcast %399 : vector<1x64xf32> to vector<16x64xf32>
    %403 = vector.broadcast %401 : vector<16x1xf32> to vector<16x64xf32>
    %404 = arith.mulf %402, %403 : vector<16x64xf32>
    %405 = arith.addf %398, %404 : vector<16x64xf32>
    %406 = vector.extract_strided_slice %303 {offsets = [5, 0, 0], sizes = [1, 16, 1], strides = [1, 1, 1]} : vector<8x16x1xf32> to vector<1x16x1xf32>
    %407 = vector.shape_cast %406 : vector<1x16x1xf32> to vector<16x1xf32>
    %408 = vector.broadcast %407 : vector<16x1xf32> to vector<16x64xf32>
    %409 = arith.mulf %405, %408 : vector<16x64xf32>
    %cst_90 = arith.constant dense<0.000000e+00> : vector<64xf32>
    %410 = vector.multi_reduction <add>, %409, %cst_90 [0] : vector<16x64xf32> to vector<64xf32>
    %411 = vector.shape_cast %410 : vector<64xf32> to vector<1x64xf32>
    %412 = vector.extract_strided_slice %295 {offsets = [6, 0], sizes = [1, 64], strides = [1, 1]} : vector<8x64xf32> to vector<1x64xf32>
    %413 = vector.broadcast %412 : vector<1x64xf32> to vector<16x64xf32>
    %414 = arith.mulf %413, %123 : vector<16x64xf32>
    %415 = math.exp %414 : vector<16x64xf32>
    %416 = arith.mulf %415, %405 : vector<16x64xf32>
    %417 = vector.extract_strided_slice %297 {offsets = [6, 0], sizes = [1, 64], strides = [1, 1]} : vector<8x64xf32> to vector<1x64xf32>
    %418 = vector.extract_strided_slice %300 {offsets = [6, 0, 0], sizes = [1, 16, 1], strides = [1, 1, 1]} : vector<8x16x1xf32> to vector<1x16x1xf32>
    %419 = vector.shape_cast %418 : vector<1x16x1xf32> to vector<16x1xf32>
    %420 = vector.broadcast %417 : vector<1x64xf32> to vector<16x64xf32>
    %421 = vector.broadcast %419 : vector<16x1xf32> to vector<16x64xf32>
    %422 = arith.mulf %420, %421 : vector<16x64xf32>
    %423 = arith.addf %416, %422 : vector<16x64xf32>
    %424 = vector.extract_strided_slice %303 {offsets = [6, 0, 0], sizes = [1, 16, 1], strides = [1, 1, 1]} : vector<8x16x1xf32> to vector<1x16x1xf32>
    %425 = vector.shape_cast %424 : vector<1x16x1xf32> to vector<16x1xf32>
    %426 = vector.broadcast %425 : vector<16x1xf32> to vector<16x64xf32>
    %427 = arith.mulf %423, %426 : vector<16x64xf32>
    %cst_91 = arith.constant dense<0.000000e+00> : vector<64xf32>
    %428 = vector.multi_reduction <add>, %427, %cst_91 [0] : vector<16x64xf32> to vector<64xf32>
    %429 = vector.shape_cast %428 : vector<64xf32> to vector<1x64xf32>
    %430 = vector.extract_strided_slice %295 {offsets = [7, 0], sizes = [1, 64], strides = [1, 1]} : vector<8x64xf32> to vector<1x64xf32>
    %431 = vector.broadcast %430 : vector<1x64xf32> to vector<16x64xf32>
    %432 = arith.mulf %431, %123 : vector<16x64xf32>
    %433 = math.exp %432 : vector<16x64xf32>
    %434 = arith.mulf %433, %423 : vector<16x64xf32>
    %435 = vector.extract_strided_slice %297 {offsets = [7, 0], sizes = [1, 64], strides = [1, 1]} : vector<8x64xf32> to vector<1x64xf32>
    %436 = vector.extract_strided_slice %300 {offsets = [7, 0, 0], sizes = [1, 16, 1], strides = [1, 1, 1]} : vector<8x16x1xf32> to vector<1x16x1xf32>
    %437 = vector.shape_cast %436 : vector<1x16x1xf32> to vector<16x1xf32>
    %438 = vector.broadcast %435 : vector<1x64xf32> to vector<16x64xf32>
    %439 = vector.broadcast %437 : vector<16x1xf32> to vector<16x64xf32>
    %440 = arith.mulf %438, %439 : vector<16x64xf32>
    %441 = arith.addf %434, %440 : vector<16x64xf32>
    %442 = vector.extract_strided_slice %303 {offsets = [7, 0, 0], sizes = [1, 16, 1], strides = [1, 1, 1]} : vector<8x16x1xf32> to vector<1x16x1xf32>
    %443 = vector.shape_cast %442 : vector<1x16x1xf32> to vector<16x1xf32>
    %444 = vector.broadcast %443 : vector<16x1xf32> to vector<16x64xf32>
    %445 = arith.mulf %441, %444 : vector<16x64xf32>
    %cst_92 = arith.constant dense<0.000000e+00> : vector<64xf32>
    %446 = vector.multi_reduction <add>, %445, %cst_92 [0] : vector<16x64xf32> to vector<64xf32>
    %447 = vector.shape_cast %446 : vector<64xf32> to vector<1x64xf32>
    %448 = tpu.concatenate %321, %339, %357, %375, %393, %411, %429, %447 in 0 : vector<1x64xf32>, vector<1x64xf32>, vector<1x64xf32>, vector<1x64xf32>, vector<1x64xf32>, vector<1x64xf32>, vector<1x64xf32>, vector<1x64xf32> -> vector<8x64xf32>
    %449 = arith.index_cast %293 : i32 to index
    %c0_93 = arith.constant 0 : index
    %450 = vector.load %arg23[%449, %c0_93] : memref<16x64xf32, #tpu.memory_space<vmem>>, vector<8x64xf32>
    tpu.vector_store %arg23[%449, %c0_93], %448 {strides = array<i32>} : memref<16x64xf32, #tpu.memory_space<vmem>>, vector<8x64xf32>,
    %c1_i32_94 = arith.constant 1 : i32
    %c0_95 = arith.constant 0 : index
    %c0_96 = arith.constant 0 : index
    %451 = vector.load %arg23[%c0_95, %c0_96] : memref<16x64xf32, #tpu.memory_space<vmem>>, vector<16x64xf32>
    %c0_97 = arith.constant 0 : index
    %c0_98 = arith.constant 0 : index
    %c0_99 = arith.constant 0 : index
    %452 = vector.load %arg14[%c0_97, %c0_98, %c0_99] : memref<1x1x64xf32, #tpu.memory_space<vmem>>, vector<1x1x64xf32>
    %453 = vector.shape_cast %452 : vector<1x1x64xf32> to vector<1x64xf32>
    %454 = vector.broadcast %453 : vector<1x64xf32> to vector<16x64xf32>
    %455 = arith.mulf %454, %96 : vector<16x64xf32>
    %456 = arith.addf %451, %455 : vector<16x64xf32>
    %457 = math.absf %24 : vector<16x64xf32>
    %cst_100 = arith.constant 0.000000e+00 : f32
    %458 = vector.broadcast %cst_100 : f32 to vector<16x64xf32>
    %459 = arith.subf %458, %457 : vector<16x64xf32>
    %460 = math.exp %459 : vector<16x64xf32>
    %cst_101 = arith.constant 0.000000e+00 : f32
    %461 = vector.broadcast %cst_101 : f32 to vector<16x64xf32>
    %462 = arith.cmpf oge, %24, %461 : vector<16x64xf32>
    %cst_102 = arith.constant 1.000000e+00 : f32
    %463 = vector.broadcast %cst_102 : f32 to vector<16x64xf32>
    %464 = arith.select %462, %463, %460 : vector<16x64xi1>, vector<16x64xf32>
    %cst_103 = arith.constant 1.000000e+00 : f32
    %465 = vector.broadcast %cst_103 : f32 to vector<16x64xf32>
    %466 = arith.addf %465, %460 : vector<16x64xf32>
    %467 = tpu.reciprocal %466 {approx = true} : vector<16x64xf32> -> vector<16x64xf32>
    %468 = arith.mulf %464, %467 : vector<16x64xf32>
    %469 = arith.mulf %24, %468 : vector<16x64xf32>
    %470 = arith.mulf %456, %469 : vector<16x64xf32>
    %471 = arith.truncf %470 : vector<16x64xf32> to vector<16x64xbf16>
    %c0_104 = arith.constant 0 : index
    %c0_105 = arith.constant 0 : index
    %c0_106 = arith.constant 0 : index
    %472 = vector.load %arg15[%c0_104, %c0_105, %c0_106] : memref<1x64x32xbf16, #tpu.memory_space<vmem>>, vector<1x64x32xbf16>
    %473 = vector.shape_cast %472 : vector<1x64x32xbf16> to vector<64x32xbf16>
    %cst_107 = arith.constant dense<0.000000e+00> : vector<16x32xf32>
    %474 = tpu.matmul %471, %473, %cst_107 {dimension_numbers = #tpu.dot_dimension_numbers<[1], [0], [0], [1], [0, 0, 1, 1], [], []>} : vector<16x64xbf16>, vector<64x32xbf16>, vector<16x32xf32> -> vector<16x32xf32>
    %475 = arith.addf %3, %474 : vector<16x32xf32>
    %c0_108 = arith.constant 0 : index
    %c0_109 = arith.constant 0 : index
    %476 = vector.load %arg18[%c0_108, %c0_109] : memref<16x32xf32, #tpu.memory_space<vmem>>, vector<16x32xf32>
    tpu.vector_store %arg18[%c0_108, %c0_109], %475 {strides = array<i32>} : memref<16x32xf32, #tpu.memory_space<vmem>>, vector<16x32xf32>,
    %c1_i32_110 = arith.constant 1 : i32
    %477 = arith.cmpi eq, %arg1, %c1_i32_110 : i32
    %478 = arith.extui %477 : i1 to i32
    %c0_i32_111 = arith.constant 0 : i32
    %479 = arith.cmpi ne, %478, %c0_i32_111 : i32
    scf.if %479 {
      %c0_112 = arith.constant 0 : index
      %c0_113 = arith.constant 0 : index
      %480 = vector.load %arg18[%c0_112, %c0_113] : memref<16x32xf32, #tpu.memory_space<vmem>>, vector<16x32xf32>
      %c0_114 = arith.constant 0 : index
      %c0_115 = arith.constant 0 : index
      %481 = vector.load %arg16[%c0_114, %c0_115] : memref<1x32xf32, #tpu.memory_space<vmem>>, vector<1x32xf32>
      %482 = arith.mulf %480, %480 : vector<16x32xf32>
      %cst_116 = arith.constant dense<0.000000e+00> : vector<16xf32>
      %483 = vector.multi_reduction <add>, %482, %cst_116 [1] : vector<16x32xf32> to vector<16xf32>
      %484 = vector.shape_cast %483 : vector<16xf32> to vector<16x1xf32>
      %cst_117 = arith.constant 3.200000e+01 : f32
      %485 = vector.broadcast %cst_117 : f32 to vector<16x1xf32>
      %486 = arith.divf %484, %485 : vector<16x1xf32>
      %cst_118 = arith.constant 9.99999974E-6 : f32
      %487 = vector.broadcast %cst_118 : f32 to vector<16x1xf32>
      %488 = arith.addf %486, %487 : vector<16x1xf32>
      %489 = math.rsqrt %488 : vector<16x1xf32>
      %490 = vector.broadcast %489 : vector<16x1xf32> to vector<16x32xf32>
      %491 = arith.mulf %480, %490 : vector<16x32xf32>
      %492 = vector.broadcast %481 : vector<1x32xf32> to vector<16x32xf32>
      %493 = arith.mulf %491, %492 : vector<16x32xf32>
      %c0_119 = arith.constant 0 : index
      %c0_120 = arith.constant 0 : index
      %494 = vector.load %arg17[%c0_119, %c0_120] : memref<16x32xf32, #tpu.memory_space<vmem>>, vector<16x32xf32>
      tpu.vector_store %arg17[%c0_119, %c0_120], %493 {strides = array<i32>} : memref<16x32xf32, #tpu.memory_space<vmem>>, vector<16x32xf32>,
    } else {
    }
    return
  }
  func.func @transform_0(%arg0: i32, %arg1: i32) -> (i32, i32) {
    %c0_i32 = arith.constant 0 : i32
    %c0_i32_0 = arith.constant 0 : i32
    return %arg0, %c0_i32 : i32, i32
  }
  func.func @transform_1(%arg0: i32, %arg1: i32) -> (i32, i32) {
    %c0_i32 = arith.constant 0 : i32
    %c0_i32_0 = arith.constant 0 : i32
    %c0_i32_1 = arith.constant 0 : i32
    return %c0_i32, %c0_i32_0 : i32, i32
  }
  func.func @transform_2(%arg0: i32, %arg1: i32) -> (i32, i32) {
    %c0_i32 = arith.constant 0 : i32
    %c0_i32_0 = arith.constant 0 : i32
    %c0_i32_1 = arith.constant 0 : i32
    return %c0_i32, %c0_i32_0 : i32, i32
  }
  func.func @transform_3(%arg0: i32, %arg1: i32) -> (i32, i32, i32) {
    %c0_i32 = arith.constant 0 : i32
    %c0_i32_0 = arith.constant 0 : i32
    %c0_i32_1 = arith.constant 0 : i32
    return %arg1, %c0_i32, %c0_i32_0 : i32, i32, i32
  }
  func.func @transform_4(%arg0: i32, %arg1: i32) -> (i32, i32, i32) {
    %c0_i32 = arith.constant 0 : i32
    %c0_i32_0 = arith.constant 0 : i32
    %c0_i32_1 = arith.constant 0 : i32
    return %arg1, %c0_i32, %c0_i32_0 : i32, i32, i32
  }
  func.func @transform_5(%arg0: i32, %arg1: i32) -> (i32, i32, i32) {
    %c0_i32 = arith.constant 0 : i32
    %c0_i32_0 = arith.constant 0 : i32
    %c0_i32_1 = arith.constant 0 : i32
    return %arg1, %c0_i32, %c0_i32_0 : i32, i32, i32
  }
  func.func @transform_6(%arg0: i32, %arg1: i32) -> (i32, i32, i32) {
    %c0_i32 = arith.constant 0 : i32
    %c0_i32_0 = arith.constant 0 : i32
    %c0_i32_1 = arith.constant 0 : i32
    return %arg1, %c0_i32, %c0_i32_0 : i32, i32, i32
  }
  func.func @transform_7(%arg0: i32, %arg1: i32) -> (i32, i32, i32) {
    %c0_i32 = arith.constant 0 : i32
    %c0_i32_0 = arith.constant 0 : i32
    %c0_i32_1 = arith.constant 0 : i32
    return %arg1, %c0_i32, %c0_i32_0 : i32, i32, i32
  }
  func.func @transform_8(%arg0: i32, %arg1: i32) -> (i32, i32, i32) {
    %c0_i32 = arith.constant 0 : i32
    %c0_i32_0 = arith.constant 0 : i32
    %c0_i32_1 = arith.constant 0 : i32
    return %arg1, %c0_i32, %c0_i32_0 : i32, i32, i32
  }
  func.func @transform_9(%arg0: i32, %arg1: i32) -> (i32, i32, i32) {
    %c0_i32 = arith.constant 0 : i32
    %c0_i32_0 = arith.constant 0 : i32
    %c0_i32_1 = arith.constant 0 : i32
    return %arg1, %c0_i32, %c0_i32_0 : i32, i32, i32
  }
  func.func @transform_10(%arg0: i32, %arg1: i32) -> (i32, i32, i32) {
    %c0_i32 = arith.constant 0 : i32
    %c0_i32_0 = arith.constant 0 : i32
    %c0_i32_1 = arith.constant 0 : i32
    return %arg1, %c0_i32, %c0_i32_0 : i32, i32, i32
  }
  func.func @transform_11(%arg0: i32, %arg1: i32) -> (i32, i32, i32) {
    %c0_i32 = arith.constant 0 : i32
    %c0_i32_0 = arith.constant 0 : i32
    %c0_i32_1 = arith.constant 0 : i32
    return %arg1, %c0_i32, %c0_i32_0 : i32, i32, i32
  }
  func.func @transform_12(%arg0: i32, %arg1: i32) -> (i32, i32, i32) {
    %c0_i32 = arith.constant 0 : i32
    %c0_i32_0 = arith.constant 0 : i32
    %c0_i32_1 = arith.constant 0 : i32
    return %arg1, %c0_i32, %c0_i32_0 : i32, i32, i32
  }
  func.func @transform_13(%arg0: i32, %arg1: i32) -> (i32, i32, i32) {
    %c0_i32 = arith.constant 0 : i32
    %c0_i32_0 = arith.constant 0 : i32
    %c0_i32_1 = arith.constant 0 : i32
    return %arg1, %c0_i32, %c0_i32_0 : i32, i32, i32
  }
  func.func @transform_14(%arg0: i32, %arg1: i32) -> (i32, i32) {
    %c0_i32 = arith.constant 0 : i32
    %c0_i32_0 = arith.constant 0 : i32
    %c0_i32_1 = arith.constant 0 : i32
    return %c0_i32, %c0_i32_0 : i32, i32
  }
  func.func @transform_15(%arg0: i32, %arg1: i32) -> (i32, i32) {
    %c0_i32 = arith.constant 0 : i32
    %c0_i32_0 = arith.constant 0 : i32
    return %arg0, %c0_i32 : i32, i32
  }
}

</mosaic_0001>

<llo_original>
// kernel: tpu_custom_call.1
$region0: #{tpu_custom_call.1}
  #allocation0 [shape = 'u32[]', space=smem, size = 0x4, offset = 0x4, fixed_abs, tag = 'smem constant byte address 0x4 - core index']
  #allocation1 [shape = 'u32[72,128]{1,0:T(1,128)}', space=vmem, size = 0x9000, scoped, tag = 'internal scratch']
  #allocation2 [shape = 'f32[16,32]{1,0:T(8,128)}', space=vmem, size = 0x2000, scoped, tag = 'scratch operand']
  #allocation3 [shape = 'f32[16,64]{1,0:T(8,128)}', space=vmem, size = 0x2000, scoped, tag = 'scratch operand']
  #allocation4 [shape = 'f32[16,64]{1,0:T(8,128)}', space=vmem, size = 0x2000, scoped, tag = 'scratch operand']
  #allocation5 [shape = 'f32[16,16]{1,0:T(8,128)}', space=vmem, size = 0x2000, scoped, tag = 'scratch operand']
  #allocation6 [shape = 'f32[16,16]{1,0:T(8,128)}', space=vmem, size = 0x2000, scoped, tag = 'scratch operand']
  #allocation7 [shape = 'f32[16,64]{1,0:T(8,128)}', space=vmem, size = 0x2000, scoped, tag = 'scratch operand']
  %s0 = inlined_call_operand.vmem [shape: f32[16,8], index: 0, kind: input, shape index: {}]
  %s1 = inlined_call_operand.vmem [shape: bf16[8,32], index: 1, kind: input, shape index: {}]
  %s2 = inlined_call_operand.vmem [shape: f32[1,32], index: 2, kind: input, shape index: {}]
  %s3 = inlined_call_operand.vmem [shape: f32[2,1,32], index: 3, kind: input, shape index: {}]
  %s4 = inlined_call_operand.vmem [shape: bf16[2,32,64], index: 4, kind: input, shape index: {}]
  %s5 = inlined_call_operand.vmem [shape: bf16[2,32,64], index: 5, kind: input, shape index: {}]
  %s6 = inlined_call_operand.vmem [shape: f32[2,4,64], index: 6, kind: input, shape index: {}]
  %s7 = inlined_call_operand.vmem [shape: f32[2,1,64], index: 7, kind: input, shape index: {}]
  %s8 = inlined_call_operand.vmem [shape: bf16[2,64,34], index: 8, kind: input, shape index: {}]
  %s9 = inlined_call_operand.vmem [shape: f32[2,2,64], index: 9, kind: input, shape index: {}]
  %s10 = inlined_call_operand.vmem [shape: f32[2,1,64], index: 10, kind: input, shape index: {}]
  %s11 = inlined_call_operand.vmem [shape: f32[2,16,64], index: 11, kind: input, shape index: {}]
  %s12 = inlined_call_operand.vmem [shape: f32[2,1,64], index: 12, kind: input, shape index: {}]
  %s13 = inlined_call_operand.vmem [shape: bf16[2,64,32], index: 13, kind: input, shape index: {}]
  %s14 = inlined_call_operand.vmem [shape: f32[1,32], index: 14, kind: input, shape index: {}]
  %s15 = inlined_call_operand.hbm [shape: f32[16,32], index: 15, kind: output, shape index: {}]
  %s16 = sld [smem:[#allocation0]]
  $region101: #{tpu_custom_call.1} parent=0
    _
  %s18 = ssub.s32 1, %s16
  %s19 = scalar_select 0, %s18, %s16
  $region1: #{tpu_custom_call.1} parent=0
    #allocation8 [shape = 'u8[8192]{0}', space=vmem, size = 0x2000, scoped, tag = 'output window, operand 0, single buffered']
    #allocation9 [shape = 's32[2]{0}', space=sflag, size = 0x8, scoped, tag = 'scoped memory for tpu_custom_call.1']
    %20 = vsyncpa [#allocation9], 0
    loop: start=0, step=1, limit=4
    $region2: #{tpu_custom_call.1} parent=1 // loop_pre_header
      _
    $region3: #{tpu_custom_call.1} parent=1 // loop_header
      %s22 = sphi 0, %s26
      %p23 = scmp.ge.s32.totalorder %s22, 4
      %s29 = sphi 0, %s41
      %s30 = sphi 0, %s37
      %s31 = sphi 0, %s29
      %s32 = sphi 0, %s30
      %s33 = sphi 0, %s31
      %s34 = sphi 0, %s32
      %s44 = sphi 0, %s46
      %s47 = sphi 0, %s44
      %s48 = sphi 0, %s47
      %s64 = sphi 0, %s48
      %s68 = sphi 0, %s68
      %s70 = sphi 0, %s68
      %s71 = sphi 0, %s70
      %s85 = sphi 0, %s71
      %s89 = sphi 0, %s89
      %s91 = sphi 0, %s89
      %s92 = sphi 0, %s91
      %s106 = sphi 0, %s92
      %s112 = sphi 0, %s114
      %s115 = sphi 0, %s112
      %s116 = sphi 0, %s115
      %s132 = sphi 0, %s116
      %s138 = sphi 0, %s140
      %s141 = sphi 0, %s138
      %s142 = sphi 0, %s141
      %s158 = sphi 0, %s142
      %s164 = sphi 0, %s166
      %s167 = sphi 0, %s164
      %s168 = sphi 0, %s167
      %s184 = sphi 0, %s168
      %s190 = sphi 0, %s192
      %s193 = sphi 0, %s190
      %s194 = sphi 0, %s193
      %s210 = sphi 0, %s194
      %s216 = sphi 0, %s218
      %s219 = sphi 0, %s216
      %s220 = sphi 0, %s219
      %s236 = sphi 0, %s220
      %s242 = sphi 0, %s244
      %s245 = sphi 0, %s242
      %s246 = sphi 0, %s245
      %s262 = sphi 0, %s246
      %s268 = sphi 0, %s270
      %s271 = sphi 0, %s268
      %s272 = sphi 0, %s271
      %s288 = sphi 0, %s272
      %s294 = sphi 0, %s296
      %s297 = sphi 0, %s294
      %s298 = sphi 0, %s297
      %s314 = sphi 0, %s298
      %s320 = sphi 0, %s322
      %s323 = sphi 0, %s320
      %s324 = sphi 0, %s323
      %s340 = sphi 0, %s324
      %s346 = sphi 0, %s348
      %s349 = sphi 0, %s346
      %s350 = sphi 0, %s349
      %s366 = sphi 0, %s350
      %s372 = sphi 0, %s374
      %s375 = sphi 0, %s372
      %s376 = sphi 0, %s375
      %s392 = sphi 0, %s376
      %s396 = sphi 0, %s396
      %s398 = sphi 0, %s396
      %s399 = sphi 0, %s398
      %s413 = sphi 0, %s399
      %s419 = sphi 0, %s421
      %s422 = sphi 0, %s419
      %s423 = sphi 0, %s422
      %s439 = sphi 0, %s423
    $region4: #{tpu_custom_call.1} parent=1 // loop_header_branch
      %25 = sbr.rel (%p23) target = $region8
    $region5: #{tpu_custom_call.1} parent=1 // loop_body
      %s27 = ssub.s32 %s22, 1
      %s28 = ssub.s32 %s22, 2
      %s35 = sadd.s32 1, %s30
      %p36 = scmp.ge.s32.totalorder %s35, 2
      %s37 = scalar_select %p36, 0, %s35
      %s38 = sadd.s32 1, %s29
      %s39 = scalar_select %p36, %s38, %s29
      %p40 = scmp.ge.s32.totalorder %s39, 1
      %s41 = scalar_select %p40, 0, %s39
      %s42 = ssub.s32 %s29, %s41
      %p43 = scmp.eq.s32.totalorder %s42, 0
      %s45 = sadd.s32 %s44, 1
      %s46 = scalar_select %p43, %s44, %s45
      %p49 = pneg %p43
      %p50 = scmp.eq.s32.totalorder %s22, 1
      %p51 = por %p49, %p50
      %p52 = scmp.ne.s32.totalorder %s44, %s47
      %p53 = scmp.eq.s32.totalorder %s22, 0
      %p54 = por %p52, %p53
      %p55 = scmp.ne.s32.totalorder %s44, %s47
      %p56 = scmp.eq.s32.totalorder %s27, 1
      %p57 = por %p55, %p56
      %p58 = scmp.ne.s32.totalorder %s47, %s48
      %p59 = scmp.eq.s32.totalorder %s27, 0
      %p60 = por %p58, %p59
      %p61 = scmp.ne.s32.totalorder %s47, %s48
      %p62 = scmp.eq.s32.totalorder %s28, 1
      %p63 = por %p61, %p62
      %p65 = scmp.ne.s32.totalorder %s48, %s64
      %p66 = scmp.eq.s32.totalorder %s28, 0
      %p67 = por %p65, %p66
      %s69 = sadd.s32 %s68, 1
      %p72 = scmp.eq.s32.totalorder %s22, 1
      %p73 = scmp.ne.s32.totalorder %s68, %s70
      %p74 = scmp.eq.s32.totalorder %s22, 0
      %p75 = por %p73, %p74
      %p76 = scmp.ne.s32.totalorder %s68, %s70
      %p77 = scmp.eq.s32.totalorder %s27, 1
      %p78 = por %p76, %p77
      %p79 = scmp.ne.s32.totalorder %s70, %s71
      %p80 = scmp.eq.s32.totalorder %s27, 0
      %p81 = por %p79, %p80
      %p82 = scmp.ne.s32.totalorder %s70, %s71
      %p83 = scmp.eq.s32.totalorder %s28, 1
      %p84 = por %p82, %p83
      %p86 = scmp.ne.s32.totalorder %s71, %s85
      %p87 = scmp.eq.s32.totalorder %s28, 0
      %p88 = por %p86, %p87
      %s90 = sadd.s32 %s89, 1
      %p93 = scmp.eq.s32.totalorder %s22, 1
      %p94 = scmp.ne.s32.totalorder %s89, %s91
      %p95 = scmp.eq.s32.totalorder %s22, 0
      %p96 = por %p94, %p95
      %p97 = scmp.ne.s32.totalorder %s89, %s91
      %p98 = scmp.eq.s32.totalorder %s27, 1
      %p99 = por %p97, %p98
      %p100 = scmp.ne.s32.totalorder %s91, %s92
      %p101 = scmp.eq.s32.totalorder %s27, 0
      %p102 = por %p100, %p101
      %p103 = scmp.ne.s32.totalorder %s91, %s92
      %p104 = scmp.eq.s32.totalorder %s28, 1
      %p105 = por %p103, %p104
      %p107 = scmp.ne.s32.totalorder %s92, %s106
      %p108 = scmp.eq.s32.totalorder %s28, 0
      %p109 = por %p107, %p108
      %s110 = ssub.s32 %s30, %s37
      %p111 = scmp.eq.s32.totalorder %s110, 0
      %s113 = sadd.s32 %s112, 1
      %s114 = scalar_select %p111, %s112, %s113
      %p117 = pneg %p111
      %p118 = scmp.eq.s32.totalorder %s22, 1
      %p119 = por %p117, %p118
      %p120 = scmp.ne.s32.totalorder %s112, %s115
      %p121 = scmp.eq.s32.totalorder %s22, 0
      %p122 = por %p120, %p121
      %p123 = scmp.ne.s32.totalorder %s112, %s115
      %p124 = scmp.eq.s32.totalorder %s27, 1
      %p125 = por %p123, %p124
      %p126 = scmp.ne.s32.totalorder %s115, %s116
      %p127 = scmp.eq.s32.totalorder %s27, 0
      %p128 = por %p126, %p127
      %p129 = scmp.ne.s32.totalorder %s115, %s116
      %p130 = scmp.eq.s32.totalorder %s28, 1
      %p131 = por %p129, %p130
      %p133 = scmp.ne.s32.totalorder %s116, %s132
      %p134 = scmp.eq.s32.totalorder %s28, 0
      %p135 = por %p133, %p134
      %s136 = ssub.s32 %s30, %s37
      %p137 = scmp.eq.s32.totalorder %s136, 0
      %s139 = sadd.s32 %s138, 1
      %s140 = scalar_select %p137, %s138, %s139
      %p143 = pneg %p137
      %p144 = scmp.eq.s32.totalorder %s22, 1
      %p145 = por %p143, %p144
      %p146 = scmp.ne.s32.totalorder %s138, %s141
      %p147 = scmp.eq.s32.totalorder %s22, 0
      %p148 = por %p146, %p147
      %p149 = scmp.ne.s32.totalorder %s138, %s141
      %p150 = scmp.eq.s32.totalorder %s27, 1
      %p151 = por %p149, %p150
      %p152 = scmp.ne.s32.totalorder %s141, %s142
      %p153 = scmp.eq.s32.totalorder %s27, 0
      %p154 = por %p152, %p153
      %p155 = scmp.ne.s32.totalorder %s141, %s142
      %p156 = scmp.eq.s32.totalorder %s28, 1
      %p157 = por %p155, %p156
      %p159 = scmp.ne.s32.totalorder %s142, %s158
      %p160 = scmp.eq.s32.totalorder %s28, 0
      %p161 = por %p159, %p160
      %s162 = ssub.s32 %s30, %s37
      %p163 = scmp.eq.s32.totalorder %s162, 0
      %s165 = sadd.s32 %s164, 1
      %s166 = scalar_select %p163, %s164, %s165
      %p169 = pneg %p163
      %p170 = scmp.eq.s32.totalorder %s22, 1
      %p171 = por %p169, %p170
      %p172 = scmp.ne.s32.totalorder %s164, %s167
      %p173 = scmp.eq.s32.totalorder %s22, 0
      %p174 = por %p172, %p173
      %p175 = scmp.ne.s32.totalorder %s164, %s167
      %p176 = scmp.eq.s32.totalorder %s27, 1
      %p177 = por %p175, %p176
      %p178 = scmp.ne.s32.totalorder %s167, %s168
      %p179 = scmp.eq.s32.totalorder %s27, 0
      %p180 = por %p178, %p179
      %p181 = scmp.ne.s32.totalorder %s167, %s168
      %p182 = scmp.eq.s32.totalorder %s28, 1
      %p183 = por %p181, %p182
      %p185 = scmp.ne.s32.totalorder %s168, %s184
      %p186 = scmp.eq.s32.totalorder %s28, 0
      %p187 = por %p185, %p186
      %s188 = ssub.s32 %s30, %s37
      %p189 = scmp.eq.s32.totalorder %s188, 0
      %s191 = sadd.s32 %s190, 1
      %s192 = scalar_select %p189, %s190, %s191
      %p195 = pneg %p189
      %p196 = scmp.eq.s32.totalorder %s22, 1
      %p197 = por %p195, %p196
      %p198 = scmp.ne.s32.totalorder %s190, %s193
      %p199 = scmp.eq.s32.totalorder %s22, 0
      %p200 = por %p198, %p199
      %p201 = scmp.ne.s32.totalorder %s190, %s193
      %p202 = scmp.eq.s32.totalorder %s27, 1
      %p203 = por %p201, %p202
      %p204 = scmp.ne.s32.totalorder %s193, %s194
      %p205 = scmp.eq.s32.totalorder %s27, 0
      %p206 = por %p204, %p205
      %p207 = scmp.ne.s32.totalorder %s193, %s194
      %p208 = scmp.eq.s32.totalorder %s28, 1
      %p209 = por %p207, %p208
      %p211 = scmp.ne.s32.totalorder %s194, %s210
      %p212 = scmp.eq.s32.totalorder %s28, 0
      %p213 = por %p211, %p212
      %s214 = ssub.s32 %s30, %s37
      %p215 = scmp.eq.s32.totalorder %s214, 0
      %s217 = sadd.s32 %s216, 1
      %s218 = scalar_select %p215, %s216, %s217
      %p221 = pneg %p215
      %p222 = scmp.eq.s32.totalorder %s22, 1
      %p223 = por %p221, %p222
      %p224 = scmp.ne.s32.totalorder %s216, %s219
      %p225 = scmp.eq.s32.totalorder %s22, 0
      %p226 = por %p224, %p225
      %p227 = scmp.ne.s32.totalorder %s216, %s219
      %p228 = scmp.eq.s32.totalorder %s27, 1
      %p229 = por %p227, %p228
      %p230 = scmp.ne.s32.totalorder %s219, %s220
      %p231 = scmp.eq.s32.totalorder %s27, 0
      %p232 = por %p230, %p231
      %p233 = scmp.ne.s32.totalorder %s219, %s220
      %p234 = scmp.eq.s32.totalorder %s28, 1
      %p235 = por %p233, %p234
      %p237 = scmp.ne.s32.totalorder %s220, %s236
      %p238 = scmp.eq.s32.totalorder %s28, 0
      %p239 = por %p237, %p238
      %s240 = ssub.s32 %s30, %s37
      %p241 = scmp.eq.s32.totalorder %s240, 0
      %s243 = sadd.s32 %s242, 1
      %s244 = scalar_select %p241, %s242, %s243
      %p247 = pneg %p241
      %p248 = scmp.eq.s32.totalorder %s22, 1
      %p249 = por %p247, %p248
      %p250 = scmp.ne.s32.totalorder %s242, %s245
      %p251 = scmp.eq.s32.totalorder %s22, 0
      %p252 = por %p250, %p251
      %p253 = scmp.ne.s32.totalorder %s242, %s245
      %p254 = scmp.eq.s32.totalorder %s27, 1
      %p255 = por %p253, %p254
      %p256 = scmp.ne.s32.totalorder %s245, %s246
      %p257 = scmp.eq.s32.totalorder %s27, 0
      %p258 = por %p256, %p257
      %p259 = scmp.ne.s32.totalorder %s245, %s246
      %p260 = scmp.eq.s32.totalorder %s28, 1
      %p261 = por %p259, %p260
      %p263 = scmp.ne.s32.totalorder %s246, %s262
      %p264 = scmp.eq.s32.totalorder %s28, 0
      %p265 = por %p263, %p264
      %s266 = ssub.s32 %s30, %s37
      %p267 = scmp.eq.s32.totalorder %s266, 0
      %s269 = sadd.s32 %s268, 1
      %s270 = scalar_select %p267, %s268, %s269
      %p273 = pneg %p267
      %p274 = scmp.eq.s32.totalorder %s22, 1
      %p275 = por %p273, %p274
      %p276 = scmp.ne.s32.totalorder %s268, %s271
      %p277 = scmp.eq.s32.totalorder %s22, 0
      %p278 = por %p276, %p277
      %p279 = scmp.ne.s32.totalorder %s268, %s271
      %p280 = scmp.eq.s32.totalorder %s27, 1
      %p281 = por %p279, %p280
      %p282 = scmp.ne.s32.totalorder %s271, %s272
      %p283 = scmp.eq.s32.totalorder %s27, 0
      %p284 = por %p282, %p283
      %p285 = scmp.ne.s32.totalorder %s271, %s272
      %p286 = scmp.eq.s32.totalorder %s28, 1
      %p287 = por %p285, %p286
      %p289 = scmp.ne.s32.totalorder %s272, %s288
      %p290 = scmp.eq.s32.totalorder %s28, 0
      %p291 = por %p289, %p290
      %s292 = ssub.s32 %s30, %s37
      %p293 = scmp.eq.s32.totalorder %s292, 0
      %s295 = sadd.s32 %s294, 1
      %s296 = scalar_select %p293, %s294, %s295
      %p299 = pneg %p293
      %p300 = scmp.eq.s32.totalorder %s22, 1
      %p301 = por %p299, %p300
      %p302 = scmp.ne.s32.totalorder %s294, %s297
      %p303 = scmp.eq.s32.totalorder %s22, 0
      %p304 = por %p302, %p303
      %p305 = scmp.ne.s32.totalorder %s294, %s297
      %p306 = scmp.eq.s32.totalorder %s27, 1
      %p307 = por %p305, %p306
      %p308 = scmp.ne.s32.totalorder %s297, %s298
      %p309 = scmp.eq.s32.totalorder %s27, 0
      %p310 = por %p308, %p309
      %p311 = scmp.ne.s32.totalorder %s297, %s298
      %p312 = scmp.eq.s32.totalorder %s28, 1
      %p313 = por %p311, %p312
      %p315 = scmp.ne.s32.totalorder %s298, %s314
      %p316 = scmp.eq.s32.totalorder %s28, 0
      %p317 = por %p315, %p316
      %s318 = ssub.s32 %s30, %s37
      %p319 = scmp.eq.s32.totalorder %s318, 0
      %s321 = sadd.s32 %s320, 1
      %s322 = scalar_select %p319, %s320, %s321
      %p325 = pneg %p319
      %p326 = scmp.eq.s32.totalorder %s22, 1
      %p327 = por %p325, %p326
      %p328 = scmp.ne.s32.totalorder %s320, %s323
      %p329 = scmp.eq.s32.totalorder %s22, 0
      %p330 = por %p328, %p329
      %p331 = scmp.ne.s32.totalorder %s320, %s323
      %p332 = scmp.eq.s32.totalorder %s27, 1
      %p333 = por %p331, %p332
      %p334 = scmp.ne.s32.totalorder %s323, %s324
      %p335 = scmp.eq.s32.totalorder %s27, 0
      %p336 = por %p334, %p335
      %p337 = scmp.ne.s32.totalorder %s323, %s324
      %p338 = scmp.eq.s32.totalorder %s28, 1
      %p339 = por %p337, %p338
      %p341 = scmp.ne.s32.totalorder %s324, %s340
      %p342 = scmp.eq.s32.totalorder %s28, 0
      %p343 = por %p341, %p342
      %s344 = ssub.s32 %s30, %s37
      %p345 = scmp.eq.s32.totalorder %s344, 0
      %s347 = sadd.s32 %s346, 1
      %s348 = scalar_select %p345, %s346, %s347
      %p351 = pneg %p345
      %p352 = scmp.eq.s32.totalorder %s22, 1
      %p353 = por %p351, %p352
      %p354 = scmp.ne.s32.totalorder %s346, %s349
      %p355 = scmp.eq.s32.totalorder %s22, 0
      %p356 = por %p354, %p355
      %p357 = scmp.ne.s32.totalorder %s346, %s349
      %p358 = scmp.eq.s32.totalorder %s27, 1
      %p359 = por %p357, %p358
      %p360 = scmp.ne.s32.totalorder %s349, %s350
      %p361 = scmp.eq.s32.totalorder %s27, 0
      %p362 = por %p360, %p361
      %p363 = scmp.ne.s32.totalorder %s349, %s350
      %p364 = scmp.eq.s32.totalorder %s28, 1
      %p365 = por %p363, %p364
      %p367 = scmp.ne.s32.totalorder %s350, %s366
      %p368 = scmp.eq.s32.totalorder %s28, 0
      %p369 = por %p367, %p368
      %s370 = ssub.s32 %s30, %s37
      %p371 = scmp.eq.s32.totalorder %s370, 0
      %s373 = sadd.s32 %s372, 1
      %s374 = scalar_select %p371, %s372, %s373
      %p377 = pneg %p371
      %p378 = scmp.eq.s32.totalorder %s22, 1
      %p379 = por %p377, %p378
      %p380 = scmp.ne.s32.totalorder %s372, %s375
      %p381 = scmp.eq.s32.totalorder %s22, 0
      %p382 = por %p380, %p381
      %p383 = scmp.ne.s32.totalorder %s372, %s375
      %p384 = scmp.eq.s32.totalorder %s27, 1
      %p385 = por %p383, %p384
      %p386 = scmp.ne.s32.totalorder %s375, %s376
      %p387 = scmp.eq.s32.totalorder %s27, 0
      %p388 = por %p386, %p387
      %p389 = scmp.ne.s32.totalorder %s375, %s376
      %p390 = scmp.eq.s32.totalorder %s28, 1
      %p391 = por %p389, %p390
      %p393 = scmp.ne.s32.totalorder %s376, %s392
      %p394 = scmp.eq.s32.totalorder %s28, 0
      %p395 = por %p393, %p394
      %s397 = sadd.s32 %s396, 1
      %p400 = scmp.eq.s32.totalorder %s22, 1
      %p401 = scmp.ne.s32.totalorder %s396, %s398
      %p402 = scmp.eq.s32.totalorder %s22, 0
      %p403 = por %p401, %p402
      %p404 = scmp.ne.s32.totalorder %s396, %s398
      %p405 = scmp.eq.s32.totalorder %s27, 1
      %p406 = por %p404, %p405
      %p407 = scmp.ne.s32.totalorder %s398, %s399
      %p408 = scmp.eq.s32.totalorder %s27, 0
      %p409 = por %p407, %p408
      %p410 = scmp.ne.s32.totalorder %s398, %s399
      %p411 = scmp.eq.s32.totalorder %s28, 1
      %p412 = por %p410, %p411
      %p414 = scmp.ne.s32.totalorder %s399, %s413
      %p415 = scmp.eq.s32.totalorder %s28, 0
      %p416 = por %p414, %p415
      %s417 = ssub.s32 %s29, %s41
      %p418 = scmp.eq.s32.totalorder %s417, 0
      %s420 = sadd.s32 %s419, 1
      %s421 = scalar_select %p418, %s419, %s420
      %p424 = pneg %p418
      %p425 = scmp.eq.s32.totalorder %s22, 1
      %p426 = por %p424, %p425
      %p427 = scmp.ne.s32.totalorder %s419, %s422
      %p428 = scmp.eq.s32.totalorder %s22, 0
      %p429 = por %p427, %p428
      %p430 = scmp.ne.s32.totalorder %s419, %s422
      %p431 = scmp.eq.s32.totalorder %s27, 1
      %p432 = por %p430, %p431
      %p433 = scmp.ne.s32.totalorder %s422, %s423
      %p434 = scmp.eq.s32.totalorder %s27, 0
      %p435 = por %p433, %p434
      %p436 = scmp.ne.s32.totalorder %s422, %s423
      %p437 = scmp.eq.s32.totalorder %s28, 1
      %p438 = por %p436, %p437
      %p440 = scmp.ne.s32.totalorder %s423, %s439
      %p441 = scmp.eq.s32.totalorder %s28, 0
      %p442 = por %p440, %p441
      %p443 = scmp.le.s32.totalorder 1, %s22
      %p444 = scmp.lt.s32.totalorder %s22, 3
      %p445 = pnand %p443, %p444
      %p446 = pneg %p445
      // Predicated region
      $region9: #{tpu_custom_call.1} parent=5 // pred_check
        _
      $region10: #{tpu_custom_call.1} parent=5 // pred_check_branch
        %448 = sbr.rel (%p445) target = $region12
      $region11: #{tpu_custom_call.1} parent=5 // pred_region
        %s449 = ssub.s32 %s22, 1
        // Predicated region
        $region13: #{tpu_custom_call.1} parent=11 // pred_check
          %p450 = pneg %p60
        $region14: #{tpu_custom_call.1} parent=11 // pred_check_branch
          %452 = sbr.rel (%p450) target = $region16
        $region15: #{tpu_custom_call.1} parent=11 // pred_region
          %s453 = smul.u32 2, %s31
          %p454 = scmp.lt.s32.totalorder %s453, 1
          %s455 = scalar_select %p454, %s453, 1
          %s456 = smul.addr %s455, 8
          %s457 = scalar_lea.vmem %s0, %s456
          %s458 = smul.u32 2, %s31
        $region16: #{tpu_custom_call.1} parent=11 // pred_fallthru
          _
        // Predicated region
        $region17: #{tpu_custom_call.1} parent=11 // pred_check
          %p459 = pneg %p81
        $region18: #{tpu_custom_call.1} parent=11 // pred_check_branch
          %461 = sbr.rel (%p459) target = $region20
        $region19: #{tpu_custom_call.1} parent=11 // pred_region
          _
        $region20: #{tpu_custom_call.1} parent=11 // pred_fallthru
          _
        // Predicated region
        $region21: #{tpu_custom_call.1} parent=11 // pred_check
          %p462 = pneg %p102
        $region22: #{tpu_custom_call.1} parent=11 // pred_check_branch
          %464 = sbr.rel (%p462) target = $region24
        $region23: #{tpu_custom_call.1} parent=11 // pred_region
          _
        $region24: #{tpu_custom_call.1} parent=11 // pred_fallthru
          _
        // Predicated region
        $region25: #{tpu_custom_call.1} parent=11 // pred_check
          %p465 = pneg %p409
        $region26: #{tpu_custom_call.1} parent=11 // pred_check_branch
          %467 = sbr.rel (%p465) target = $region28
        $region27: #{tpu_custom_call.1} parent=11 // pred_region
          _
        $region28: #{tpu_custom_call.1} parent=11 // pred_fallthru
          _
      $region12: #{tpu_custom_call.1} parent=5 // pred_fallthru
        _
      %p468 = scmp.lt.s32.totalorder %s22, 2
      // Predicated region
      $region29: #{tpu_custom_call.1} parent=5 // pred_check
        %p469 = pneg %p468
      $region30: #{tpu_custom_call.1} parent=5 // pred_check_branch
        %471 = sbr.rel (%p469) target = $region32
      $region31: #{tpu_custom_call.1} parent=5 // pred_region
        // Predicated region
        $region33: #{tpu_custom_call.1} parent=31 // pred_check
          %p472 = pneg %p122
        $region34: #{tpu_custom_call.1} parent=31 // pred_check_branch
          %474 = sbr.rel (%p472) target = $region36
        $region35: #{tpu_custom_call.1} parent=31 // pred_region
          %p475 = scmp.lt.s32.totalorder %s30, 1
          %s476 = scalar_select %p475, %s30, 1
          %s477 = scalar_lea.vmem %s3, %s476
        $region36: #{tpu_custom_call.1} parent=31 // pred_fallthru
          _
        // Predicated region
        $region37: #{tpu_custom_call.1} parent=31 // pred_check
          %p478 = pneg %p148
        $region38: #{tpu_custom_call.1} parent=31 // pred_check_branch
          %480 = sbr.rel (%p478) target = $region40
        $region39: #{tpu_custom_call.1} parent=31 // pred_region
          %p481 = scmp.lt.s32.totalorder %s30, 1
          %s482 = scalar_select %p481, %s30, 1
          %s483 = smul.addr %s482, 4
          %s484 = smul.addr %s483, 4
          %s485 = scalar_lea.vmem %s4, %s484
        $region40: #{tpu_custom_call.1} parent=31 // pred_fallthru
          _
        // Predicated region
        $region41: #{tpu_custom_call.1} parent=31 // pred_check
          %p486 = pneg %p174
        $region42: #{tpu_custom_call.1} parent=31 // pred_check_branch
          %488 = sbr.rel (%p486) target = $region44
        $region43: #{tpu_custom_call.1} parent=31 // pred_region
          %p489 = scmp.lt.s32.totalorder %s30, 1
          %s490 = scalar_select %p489, %s30, 1
          %s491 = smul.addr %s490, 4
          %s492 = smul.addr %s491, 4
          %s493 = scalar_lea.vmem %s5, %s492
        $region44: #{tpu_custom_call.1} parent=31 // pred_fallthru
          _
        // Predicated region
        $region45: #{tpu_custom_call.1} parent=31 // pred_check
          %p494 = pneg %p200
        $region46: #{tpu_custom_call.1} parent=31 // pred_check_branch
          %496 = sbr.rel (%p494) target = $region48
        $region47: #{tpu_custom_call.1} parent=31 // pred_region
          %p497 = scmp.lt.s32.totalorder %s30, 1
          %s498 = scalar_select %p497, %s30, 1
          %s499 = smul.addr %s498, 4
          %s500 = scalar_lea.vmem %s6, %s499
        $region48: #{tpu_custom_call.1} parent=31 // pred_fallthru
          _
        // Predicated region
        $region49: #{tpu_custom_call.1} parent=31 // pred_check
          %p501 = pneg %p226
        $region50: #{tpu_custom_call.1} parent=31 // pred_check_branch
          %503 = sbr.rel (%p501) target = $region52
        $region51: #{tpu_custom_call.1} parent=31 // pred_region
          %p504 = scmp.lt.s32.totalorder %s30, 1
          %s505 = scalar_select %p504, %s30, 1
          %s506 = scalar_lea.vmem %s7, %s505
        $region52: #{tpu_custom_call.1} parent=31 // pred_fallthru
          _
        // Predicated region
        $region53: #{tpu_custom_call.1} parent=31 // pred_check
          %p507 = pneg %p252
        $region54: #{tpu_custom_call.1} parent=31 // pred_check_branch
          %509 = sbr.rel (%p507) target = $region56
        $region55: #{tpu_custom_call.1} parent=31 // pred_region
          %p510 = scmp.lt.s32.totalorder %s30, 1
          %s511 = scalar_select %p510, %s30, 1
          %s512 = smul.addr %s511, 8
          %s513 = smul.addr %s512, 4
          %s514 = scalar_lea.vmem %s8, %s513
        $region56: #{tpu_custom_call.1} parent=31 // pred_fallthru
          _
        // Predicated region
        $region57: #{tpu_custom_call.1} parent=31 // pred_check
          %p515 = pneg %p278
        $region58: #{tpu_custom_call.1} parent=31 // pred_check_branch
          %517 = sbr.rel (%p515) target = $region60
        $region59: #{tpu_custom_call.1} parent=31 // pred_region
          %p518 = scmp.lt.s32.totalorder %s30, 1
          %s519 = scalar_select %p518, %s30, 1
          %s520 = smul.addr %s519, 2
          %s521 = scalar_lea.vmem %s9, %s520
        $region60: #{tpu_custom_call.1} parent=31 // pred_fallthru
          _
        // Predicated region
        $region61: #{tpu_custom_call.1} parent=31 // pred_check
          %p522 = pneg %p304
        $region62: #{tpu_custom_call.1} parent=31 // pred_check_branch
          %524 = sbr.rel (%p522) target = $region64
        $region63: #{tpu_custom_call.1} parent=31 // pred_region
          %p525 = scmp.lt.s32.totalorder %s30, 1
          %s526 = scalar_select %p525, %s30, 1
          %s527 = scalar_lea.vmem %s10, %s526
        $region64: #{tpu_custom_call.1} parent=31 // pred_fallthru
          _
        // Predicated region
        $region65: #{tpu_custom_call.1} parent=31 // pred_check
          %p528 = pneg %p330
        $region66: #{tpu_custom_call.1} parent=31 // pred_check_branch
          %530 = sbr.rel (%p528) target = $region68
        $region67: #{tpu_custom_call.1} parent=31 // pred_region
          %p531 = scmp.lt.s32.totalorder %s30, 1
          %s532 = scalar_select %p531, %s30, 1
          %s533 = smul.addr %s532, 2
          %s534 = smul.addr %s533, 8
          %s535 = scalar_lea.vmem %s11, %s534
        $region68: #{tpu_custom_call.1} parent=31 // pred_fallthru
          _
        // Predicated region
        $region69: #{tpu_custom_call.1} parent=31 // pred_check
          %p536 = pneg %p356
        $region70: #{tpu_custom_call.1} parent=31 // pred_check_branch
          %538 = sbr.rel (%p536) target = $region72
        $region71: #{tpu_custom_call.1} parent=31 // pred_region
          %p539 = scmp.lt.s32.totalorder %s30, 1
          %s540 = scalar_select %p539, %s30, 1
          %s541 = scalar_lea.vmem %s12, %s540
        $region72: #{tpu_custom_call.1} parent=31 // pred_fallthru
          _
        // Predicated region
        $region73: #{tpu_custom_call.1} parent=31 // pred_check
          %p542 = pneg %p382
        $region74: #{tpu_custom_call.1} parent=31 // pred_check_branch
          %544 = sbr.rel (%p542) target = $region76
        $region75: #{tpu_custom_call.1} parent=31 // pred_region
          %p545 = scmp.lt.s32.totalorder %s30, 1
          %s546 = scalar_select %p545, %s30, 1
          %s547 = smul.addr %s546, 8
          %s548 = smul.addr %s547, 4
          %s549 = scalar_lea.vmem %s13, %s548
        $region76: #{tpu_custom_call.1} parent=31 // pred_fallthru
          _
      $region32: #{tpu_custom_call.1} parent=5 // pred_fallthru
        _
      %p550 = scmp.le.s32.totalorder 1, %s22
      %p551 = scmp.lt.s32.totalorder %s22, 3
      %p552 = pnand %p550, %p551
      %p553 = pneg %p552
      // Predicated region
      $region77: #{tpu_custom_call.1} parent=5 // pred_check
        _
      $region78: #{tpu_custom_call.1} parent=5 // pred_check_branch
        %555 = sbr.rel (%p552) target = $region80
      $region79: #{tpu_custom_call.1} parent=5 // pred_region
        %s556 = ssub.s32 %s22, 1
        %s557 = smul.u32 2, %s31
        %p558 = scmp.lt.s32.totalorder %s557, 1
        %s559 = scalar_select %p558, %s557, 1
        %s560 = smul.addr %s559, 8
        %s561 = scalar_lea.vmem %s0, %s560
        %p562 = pneg %p60
        %p563 = pneg %p57
        %p564 = pneg %p81
        %p565 = pneg %p78
        %p566 = pneg %p102
        %p567 = pneg %p99
        %p568 = scmp.lt.s32.totalorder %s32, 1
        %s569 = scalar_select %p568, %s32, 1
        %s570 = scalar_lea.vmem %s3, %s569
        %p571 = pneg %p128
        %p572 = pneg %p125
        %p573 = scmp.lt.s32.totalorder %s32, 1
        %s574 = scalar_select %p573, %s32, 1
        %s575 = smul.addr %s574, 4
        %s576 = smul.addr %s575, 4
        %s577 = scalar_lea.vmem %s4, %s576
        %p578 = pneg %p154
        %p579 = pneg %p151
        %p580 = scmp.lt.s32.totalorder %s32, 1
        %s581 = scalar_select %p580, %s32, 1
        %s582 = smul.addr %s581, 4
        %s583 = smul.addr %s582, 4
        %s584 = scalar_lea.vmem %s5, %s583
        %p585 = pneg %p180
        %p586 = pneg %p177
        %p587 = scmp.lt.s32.totalorder %s32, 1
        %s588 = scalar_select %p587, %s32, 1
        %s589 = smul.addr %s588, 4
        %s590 = scalar_lea.vmem %s6, %s589
        %p591 = pneg %p206
        %p592 = pneg %p203
        %p593 = scmp.lt.s32.totalorder %s32, 1
        %s594 = scalar_select %p593, %s32, 1
        %s595 = scalar_lea.vmem %s7, %s594
        %p596 = pneg %p232
        %p597 = pneg %p229
        %p598 = scmp.lt.s32.totalorder %s32, 1
        %s599 = scalar_select %p598, %s32, 1
        %s600 = smul.addr %s599, 8
        %s601 = smul.addr %s600, 4
        %s602 = scalar_lea.vmem %s8, %s601
        %p603 = pneg %p258
        %p604 = pneg %p255
        %p605 = scmp.lt.s32.totalorder %s32, 1
        %s606 = scalar_select %p605, %s32, 1
        %s607 = smul.addr %s606, 2
        %s608 = scalar_lea.vmem %s9, %s607
        %p609 = pneg %p284
        %p610 = pneg %p281
        %p611 = scmp.lt.s32.totalorder %s32, 1
        %s612 = scalar_select %p611, %s32, 1
        %s613 = scalar_lea.vmem %s10, %s612
        %p614 = pneg %p310
        %p615 = pneg %p307
        %p616 = scmp.lt.s32.totalorder %s32, 1
        %s617 = scalar_select %p616, %s32, 1
        %s618 = smul.addr %s617, 2
        %s619 = smul.addr %s618, 8
        %s620 = scalar_lea.vmem %s11, %s619
        %p621 = pneg %p336
        %p622 = pneg %p333
        %p623 = scmp.lt.s32.totalorder %s32, 1
        %s624 = scalar_select %p623, %s32, 1
        %s625 = scalar_lea.vmem %s12, %s624
        %p626 = pneg %p362
        %p627 = pneg %p359
        %p628 = scmp.lt.s32.totalorder %s32, 1
        %s629 = scalar_select %p628, %s32, 1
        %s630 = smul.addr %s629, 8
        %s631 = smul.addr %s630, 4
        %s632 = scalar_lea.vmem %s13, %s631
        %p633 = pneg %p388
        %p634 = pneg %p385
        %p635 = pneg %p409
        %p636 = pneg %p406
        %p637 = pneg %p435
        %p638 = pneg %p432
        %s639 = smul.u32 2, %s31
        %p640 = scmp.lt.s32.totalorder %s639, 1
        %s641 = scalar_select %p640, %s639, 1
        %s642 = smul.addr %s641, 8
        %s643 = scalar_lea.vmem %s0, %s642
        %s644 = smul.u32 2, %s31
        %p645 = scmp.lt.s32.totalorder %s32, 1
        %s646 = scalar_select %p645, %s32, 1
        %s647 = scalar_lea.vmem %s3, %s646
        %p648 = scmp.lt.s32.totalorder %s32, 1
        %s649 = scalar_select %p648, %s32, 1
        %s650 = smul.addr %s649, 4
        %s651 = smul.addr %s650, 4
        %s652 = scalar_lea.vmem %s4, %s651
        %p653 = scmp.lt.s32.totalorder %s32, 1
        %s654 = scalar_select %p653, %s32, 1
        %s655 = smul.addr %s654, 4
        %s656 = smul.addr %s655, 4
        %s657 = scalar_lea.vmem %s5, %s656
        %p658 = scmp.lt.s32.totalorder %s32, 1
        %s659 = scalar_select %p658, %s32, 1
        %s660 = smul.addr %s659, 4
        %s661 = scalar_lea.vmem %s6, %s660
        %p662 = scmp.lt.s32.totalorder %s32, 1
        %s663 = scalar_select %p662, %s32, 1
        %s664 = scalar_lea.vmem %s7, %s663
        %p665 = scmp.lt.s32.totalorder %s32, 1
        %s666 = scalar_select %p665, %s32, 1
        %s667 = smul.addr %s666, 8
        %s668 = smul.addr %s667, 4
        %s669 = scalar_lea.vmem %s8, %s668
        %p670 = scmp.lt.s32.totalorder %s32, 1
        %s671 = scalar_select %p670, %s32, 1
        %s672 = smul.addr %s671, 2
        %s673 = scalar_lea.vmem %s9, %s672
        %p674 = scmp.lt.s32.totalorder %s32, 1
        %s675 = scalar_select %p674, %s32, 1
        %s676 = scalar_lea.vmem %s10, %s675
        %p677 = scmp.lt.s32.totalorder %s32, 1
        %s678 = scalar_select %p677, %s32, 1
        %s679 = smul.addr %s678, 2
        %s680 = smul.addr %s679, 8
        %s681 = scalar_lea.vmem %s11, %s680
        %p682 = scmp.lt.s32.totalorder %s32, 1
        %s683 = scalar_select %p682, %s32, 1
        %s684 = scalar_lea.vmem %s12, %s683
        %p685 = scmp.lt.s32.totalorder %s32, 1
        %s686 = scalar_select %p685, %s32, 1
        %s687 = smul.addr %s686, 8
        %s688 = smul.addr %s687, 4
        %s689 = scalar_lea.vmem %s13, %s688
        %s690 = smul.u32 2, %s31
        %p692 = scmp.eq.s32.totalorder %s32, 0
        // Predicated region
        $region81: #{tpu_custom_call.1} parent=79 // pred_check
          %p693 = pneg %p692
        $region82: #{tpu_custom_call.1} parent=79 // pred_check_branch
          %695 = sbr.rel (%p693) target = $region84
        $region83: #{tpu_custom_call.1} parent=79 // pred_region
          %v696 = vld [vmem:[%s643] sm:$0xff]
          %v697 = vld [vmem:[%s643 + $0x8] sm:$0xff]
          %v698 = vpack.c.bf16 %v697, %v696
          %v699 = vld [vmem:[%s1] sm:$0xf]
          %v700 = vld [vmem:[%s2] sm:$0x1]
          %v702 = vperm.slane %v700, 0
          %vm704 = vcmask 64512
          %v706 = vsel %vm704, %v698, 0
          %vm708 = vcmask 1043456
          %v710 = vsel %vm708, %v699, 0
          %712 = vmatpush.bf16.msra.mxu0 0
          %713 = vmatpush.bf16.msra.mxu0 0
          %714 = vmatpush.bf16.msra.mxu0 0
          %715 = vmatpush.bf16.msra.mxu0 0
          %716 = vmatpush.bf16.msra.mxu0 0
          %717 = vmatpush.bf16.msra.mxu0 0
          %718 = vmatpush.bf16.msra.mxu0 0
          %719 = vmatpush.bf16.msra.mxu0 %v710
          %720 = vmatmul.bf16.gmra.mxu0 %v706
          %v721 = vpop.f32.mrf.mxu0
          %v722 = vadd.f32 %v702, %v721
          %v723 = vpop.f32.mrf.mxu0
          %v724 = vadd.f32 %v702, %v723
          %725 = vdwg.mxu0
          %vm726 = vcmask 261120
          %727 = vst.msk [vmem:[#allocation2] sm:$0xff] %vm726, %v722
          %728 = vst.msk [vmem:[#allocation2 + $0x8] sm:$0xff] %vm726, %v724
        $region84: #{tpu_custom_call.1} parent=79 // pred_fallthru
          _
        %v729 = vld [vmem:[#allocation2] sm:$0xff]
        %v730 = vld [vmem:[#allocation2 + $0x8] sm:$0xff]
        %v731 = vld [vmem:[%s647] sm:$0x1]
        %v732 = vmul.f32 %v729, %v729
        %v733 = vmul.f32 %v730, %v730
        %vm734 = vcmask 261120
        %v735 = vsel %vm734, %v732, 0.0
        %736 = vadd.xlane.f32.xlu0 %v735
        %v737 = vpop.xlane.xlu0 %736
        %v738 = vsel %vm734, %v733, 0.0
        %739 = vadd.xlane.f32.xlu0 %v738
        %v740 = vpop.xlane.xlu0 %739
        %v741 = vrcp.pop 32.0
        %v742 = vmul.f32 32.0, %v741
        %v743 = vsub.f32 1.0, %v742
        %v744 = vmul.f32 %v741, %v743
        %v745 = vadd.f32 %v741, %v744
        %vm746 = vweird.f32 %v741
        %v747 = vsel %vm746, %v741, %v745
        %v748 = vmul.f32 %v737, %v747
        %v749 = vmul.f32 %v740, %v747
        %v750 = vadd.f32 %v748, 1e-05
        %v751 = vadd.f32 %v749, 1e-05
        %v752 = vrsqrt.pop %v750
        %v753 = vmul.f32 %v752, %v750
        %v754 = vmul.f32 %v753, %v752
        %v755 = vmul.f32 0.5, %v754
        %v756 = vsub.f32 1.5, %v755
        %v757 = vmul.f32 %v752, %v756
        %vm758 = vweird.f32 %v750
        %vm759 = vweird.f32 %v752
        %vm760 = vmor %vm758, %vm759
        %v761 = vsel %vm760, %v752, %v757
        %v762 = vrsqrt.pop %v751
        %v763 = vmul.f32 %v762, %v751
        %v764 = vmul.f32 %v763, %v762
        %v765 = vmul.f32 0.5, %v764
        %v766 = vsub.f32 1.5, %v765
        %v767 = vmul.f32 %v762, %v766
        %vm768 = vweird.f32 %v751
        %vm769 = vweird.f32 %v762
        %vm770 = vmor %vm768, %vm769
        %v771 = vsel %vm770, %v762, %v767
        %v772 = vmul.f32 %v729, %v761
        %v773 = vmul.f32 %v730, %v771
        %v775 = vperm.slane %v731, 0
        %v777 = vmul.f32 %v772, %v775
        %v778 = vmul.f32 %v773, %v775
        %v779 = vpack.c.bf16 %v778, %v777
        %v780 = vld [vmem:[%s652] sm:$0xf]
        %v781 = vld [vmem:[%s652 + $0x4] sm:$0xf]
        %v782 = vld [vmem:[%s652 + $0x8] sm:$0xf]
        %v783 = vld [vmem:[%s652 + $0xc] sm:$0xf]
        %v788 = vunpack.c.l.b16 %v780
        %v789 = vunpack.c.l.b16 %v781
        %v790 = vunpack.c.l.b16 %v782
        %v791 = vunpack.c.l.b16 %v783
        %v792 = vpack.c.b16 %v789, %v788
        %v793 = vpack.c.b16 %v791, %v790
        %v797 = vsel %vm734, %v779, 0
        %799 = vmatpush.bf16.msra.mxu0 0
        %800 = vmatpush.bf16.msra.mxu0 0
        %801 = vmatpush.bf16.msra.mxu0 0
        %802 = vmatpush.bf16.msra.mxu0 0
        %803 = vmatpush.bf16.msra.mxu0 0
        %804 = vmatpush.bf16.msra.mxu0 0
        %805 = vmatpush.bf16.msra.mxu0 %v793
        %806 = vmatpush.bf16.msra.mxu0 %v792
        %807 = vmatmul.bf16.gmra.mxu0 %v797
        %v808 = vpop.f32.mrf.mxu0
        %v809 = vadd.f32 0.0, %v808
        %v810 = vpop.f32.mrf.mxu0
        %v811 = vadd.f32 0.0, %v810
        %812 = vdwg.mxu0
        %v813 = vld [vmem:[%s657] sm:$0xf]
        %v814 = vld [vmem:[%s657 + $0x4] sm:$0xf]
        %v815 = vld [vmem:[%s657 + $0x8] sm:$0xf]
        %v816 = vld [vmem:[%s657 + $0xc] sm:$0xf]
        %v821 = vunpack.c.l.b16 %v813
        %v822 = vunpack.c.l.b16 %v814
        %v823 = vunpack.c.l.b16 %v815
        %v824 = vunpack.c.l.b16 %v816
        %v825 = vpack.c.b16 %v822, %v821
        %v826 = vpack.c.b16 %v824, %v823
        %829 = vmatpush.bf16.msra.mxu0 0
        %830 = vmatpush.bf16.msra.mxu0 0
        %831 = vmatpush.bf16.msra.mxu0 0
        %832 = vmatpush.bf16.msra.mxu0 0
        %833 = vmatpush.bf16.msra.mxu0 0
        %834 = vmatpush.bf16.msra.mxu0 0
        %835 = vmatpush.bf16.msra.mxu0 %v826
        %836 = vmatpush.bf16.msra.mxu0 %v825
        %837 = vmatmul.bf16.gmra.mxu0 %v797
        %v838 = vpop.f32.mrf.mxu0
        %v839 = vadd.f32 0.0, %v838
        %v840 = vpop.f32.mrf.mxu0
        %v841 = vadd.f32 0.0, %v840
        %842 = vdwg.mxu0
        %v843 = vld [vmem:[%s661] sm:$0xf]
        %v844 = vlaneseq
        %v845 = vshrl.u32 %v844, 7
        %v846 = vadd.s32 %v845, 8
        %vm847 = vcmp.lt.s32.totalorder %v845, 0
        %v848 = vsub.s32 0, %v845
        %v849 = vsel %vm847, %v848, %v845
        %v850 = vshrl.u32 %v849, 3
        %v851 = vand.u32 %v849, 7
        %v852 = vsub.s32 0, %v851
        %v853 = vsel %vm847, %v852, %v851
        %vm854 = vcmp.lt.s32.totalorder %v846, 0
        %v855 = vsub.s32 0, %v846
        %v856 = vsel %vm854, %v855, %v846
        %v857 = vshrl.u32 %v856, 3
        %v858 = vand.u32 %v856, 7
        %v859 = vsub.s32 0, %v858
        %v860 = vsel %vm854, %v859, %v858
        %vm861 = vcmp.ne.s32.totalorder %v853, 0
        %vm862 = vcmp.ne.s32.totalorder %v860, 0
        %vm863 = vcmp.lt.s32.totalorder %v853, 0
        %vm864 = vcmp.lt.s32.totalorder %v860, 0
        %vm865 = vmand %vm863, %vm861
        %vm866 = vmand %vm864, %vm862
        %v867 = vadd.s32 %v853, 8
        %v868 = vadd.s32 %v860, 8
        %v869 = vsel %vm865, %v867, %v853
        %v870 = vsel %vm866, %v868, %v860
        %v871 = vperm.slane %v843, 3
        %v872 = vmul.f32 %v809, %v871
        %v873 = vmul.f32 %v811, %v871
        %v874 = vrot.slane %v809, 5
        %v875 = vrot.slane %v811, 5
        %vm876 = vcmp.lt.s32.totalorder %v845, 3
        %v877 = vsel %vm876, %v874, %v875
        %v878 = vsel %vm876, %v875, %v874
        %vm879 = vcmp.ge.s32.totalorder %v869, 3
        %vm880 = vcmp.ge.s32.totalorder %v870, 3
        %v881 = vsel %vm879, 1, 0
        %v882 = vsel %vm880, 1, 0
        %vm883 = vcmp.eq.s32.totalorder %v881, 1
        %vm884 = vcmp.eq.s32.totalorder %v882, 1
        %v885 = vsel %vm883, %v878, 0.0
        %v886 = vsel %vm884, %v877, 0.0
        %v887 = vperm.slane %v843, 0
        %v888 = vmul.f32 %v885, %v887
        %v889 = vmul.f32 %v886, %v887
        %v890 = vadd.f32 %v872, %v888
        %v891 = vadd.f32 %v873, %v889
        %v892 = vrot.slane %v809, 6
        %v893 = vrot.slane %v811, 6
        %vm894 = vcmp.lt.s32.totalorder %v845, 2
        %v895 = vsel %vm894, %v892, %v893
        %v896 = vsel %vm894, %v893, %v892
        %vm897 = vcmp.ge.s32.totalorder %v869, 2
        %vm898 = vcmp.ge.s32.totalorder %v870, 2
        %v899 = vsel %vm897, 1, 0
        %v900 = vsel %vm898, 1, 0
        %vm901 = vcmp.eq.s32.totalorder %v899, 1
        %vm902 = vcmp.eq.s32.totalorder %v900, 1
        %v903 = vsel %vm901, %v896, 0.0
        %v904 = vsel %vm902, %v895, 0.0
        %v905 = vperm.slane %v843, 1
        %v906 = vmul.f32 %v903, %v905
        %v907 = vmul.f32 %v904, %v905
        %v908 = vadd.f32 %v890, %v906
        %v909 = vadd.f32 %v891, %v907
        %v910 = vrot.slane %v809, 7
        %v911 = vrot.slane %v811, 7
        %vm912 = vcmp.lt.s32.totalorder %v845, 1
        %v913 = vsel %vm912, %v910, %v911
        %v914 = vsel %vm912, %v911, %v910
        %vm915 = vcmp.ge.s32.totalorder %v869, 1
        %vm916 = vcmp.ge.s32.totalorder %v870, 1
        %v917 = vsel %vm915, 1, 0
        %v918 = vsel %vm916, 1, 0
        %vm919 = vcmp.eq.s32.totalorder %v917, 1
        %vm920 = vcmp.eq.s32.totalorder %v918, 1
        %v921 = vsel %vm919, %v914, 0.0
        %v922 = vsel %vm920, %v913, 0.0
        %v923 = vperm.slane %v843, 2
        %v924 = vmul.f32 %v921, %v923
        %v925 = vmul.f32 %v922, %v923
        %v926 = vadd.f32 %v908, %v924
        %v927 = vadd.f32 %v909, %v925
        %v928 = vld [vmem:[%s664] sm:$0x1]
        %v930 = vperm.slane %v928, 0
        %v932 = vadd.f32 %v926, %v930
        %v933 = vadd.f32 %v927, %v930
        %v934 = vand.u32 2147483647, %v932
        %v935 = vand.u32 2147483647, %v933
        %v936 = vsub.f32 0.0, %v934
        %v937 = vsub.f32 0.0, %v935
        %v938 = vmul.f32 %v936, 1.442695
        %v939 = vpow.pop %v938
        %v940 = vmul.f32 %v937, 1.442695
        %v941 = vpow.pop %v940
        %vm942 = vcmp.ge.f32.partialorder %v932, 0.0
        %vm943 = vcmp.ge.f32.partialorder %v933, 0.0
        %v944 = vsel %vm942, 1.0, %v939
        %v945 = vsel %vm943, 1.0, %v941
        %v946 = vadd.f32 %v939, 1.0
        %v947 = vadd.f32 %v941, 1.0
        %v948 = vrcp.pop %v946
        %v949 = vrcp.pop %v947
        %v950 = vmul.f32 %v944, %v948
        %v951 = vmul.f32 %v945, %v949
        %v952 = vmul.f32 %v932, %v950
        %v953 = vmul.f32 %v933, %v951
        %v954 = vpack.c.bf16 %v953, %v952
        %v955 = vld [vmem:[%s669] sm:$0xf]
        %v956 = vld [vmem:[%s669 + $0x4] sm:$0xf]
        %v957 = vld [vmem:[%s669 + $0x8] sm:$0xf]
        %v958 = vld [vmem:[%s669 + $0xc] sm:$0xf]
        %v959 = vld [vmem:[%s669 + $0x10] sm:$0xf]
        %v960 = vld [vmem:[%s669 + $0x14] sm:$0xf]
        %v961 = vld [vmem:[%s669 + $0x18] sm:$0xf]
        %v962 = vld [vmem:[%s669 + $0x1c] sm:$0xf]
        %v971 = vunpack.c.l.b16 %v955
        %v972 = vunpack.c.l.b16 %v956
        %v973 = vunpack.c.l.b16 %v957
        %v974 = vunpack.c.l.b16 %v958
        %v975 = vunpack.c.l.b16 %v959
        %v976 = vunpack.c.l.b16 %v960
        %v977 = vunpack.c.l.b16 %v961
        %v978 = vunpack.c.l.b16 %v962
        %v979 = vpack.c.b16 %v972, %v971
        %v980 = vpack.c.b16 %v974, %v973
        %v981 = vpack.c.b16 %v976, %v975
        %v982 = vpack.c.b16 %v978, %v977
        %vm987 = vcmask 523264
        %v989 = vsel %vm987, %v954, 0
        %991 = vmatpush.bf16.msra.mxu0 0
        %992 = vmatpush.bf16.msra.mxu0 0
        %993 = vmatpush.bf16.msra.mxu0 0
        %994 = vmatpush.bf16.msra.mxu0 0
        %995 = vmatpush.bf16.msra.mxu0 %v982
        %996 = vmatpush.bf16.msra.mxu0 %v981
        %997 = vmatpush.bf16.msra.mxu0 %v980
        %998 = vmatpush.bf16.msra.mxu0 %v979
        %999 = vmatmul.bf16.gmra.mxu0 %v989
        %v1000 = vpop.f32.mrf.mxu0
        %v1001 = vadd.f32 0.0, %v1000
        %v1002 = vpop.f32.mrf.mxu0
        %v1003 = vadd.f32 0.0, %v1002
        %1004 = vdwg.mxu0
        %v1005 = vld [vmem:[%s673] sm:$0x3]
        %v1006 = vld [vmem:[%s676] sm:$0x1]
        %v1008 = vperm.slane %v1006, 0
        %vm1010 = vcmask 15360
        %v1012 = vsel %vm1010, %v1001, 0
        %v1015 = vsel %vm1010, %v1003, 0
        %vm1017 = vcmask 1041408
        %v1019 = vsel %vm1017, %v1005, 0
        %1021 = vmatpush.msra.mxu0 0.0
        %1022 = vmatpush.msra.mxu0 0.0
        %1023 = vmatpush.msra.mxu0 0.0
        %1024 = vmatpush.msra.mxu0 0.0
        %1025 = vmatpush.msra.mxu0 0.0
        %1026 = vmatpush.msra.mxu0 0.0
        %1027 = vmatpush.msra.mxu0 0.0
        %1028 = vmatpush.msra.mxu0 0.0
        %1029 = vmatpush.msra.mxu0 0.0
        %1030 = vmatpush.msra.mxu0 0.0
        %1031 = vmatpush.msra.mxu0 0.0
        %1032 = vmatpush.msra.mxu0 0.0
        %1033 = vmatpush.msra.mxu0 0.0
        %1034 = vmatpush.msra.mxu0 0.0
        %1035 = vmatpush.msra.mxu0 0.0
        %1036 = vmatpush.msra.mxu0 %v1019
        %1037 = vmatmul.f32.gmra.mxu0 %v1012
        %v1038 = vpop.f32.mrf.mxu0
        %v1039 = vadd.f32 %v1008, %v1038
        %1040 = vmatmul.f32.gmra.mxu0 %v1015
        %v1041 = vpop.f32.mrf.mxu0
        %v1042 = vadd.f32 %v1008, %v1041
        %1043 = vdwg.mxu0
        %v1044 = vmax.f32 %v1039, 0.0
        %v1045 = vmax.f32 %v1042, 0.0
        %v1046 = vand.u32 2147483647, %v1039
        %v1047 = vand.u32 2147483647, %v1042
        %v1048 = vsub.f32 0.0, %v1046
        %v1049 = vsub.f32 0.0, %v1047
        %v1050 = vmul.f32 %v1048, 1.442695
        %v1051 = vpow.pop %v1050
        %v1052 = vmul.f32 %v1049, 1.442695
        %v1053 = vpow.pop %v1052
        %v1054 = vadd.f32 %v1051, 1.0
        %v1055 = vlog2.pop %v1054
        %v1056 = vmul.f32 %v1055, 0.6931472
        %v1057 = vmul.f32 -0.5, %v1051
        %v1058 = vadd.f32 %v1057, 1.0
        %v1059 = vmul.f32 %v1058, %v1051
        %v1060 = vand.u32 2147483647, %v1051
        %vm1061 = vcmp.lt.f32.partialorder %v1060, 0.0004427343
        %v1062 = vsel %vm1061, %v1059, %v1056
        %v1063 = vadd.f32 %v1053, 1.0
        %v1064 = vlog2.pop %v1063
        %v1065 = vmul.f32 %v1064, 0.6931472
        %v1066 = vmul.f32 -0.5, %v1053
        %v1067 = vadd.f32 %v1066, 1.0
        %v1068 = vmul.f32 %v1067, %v1053
        %v1069 = vand.u32 2147483647, %v1053
        %vm1070 = vcmp.lt.f32.partialorder %v1069, 0.0004427343
        %v1071 = vsel %vm1070, %v1068, %v1065
        %v1072 = vadd.f32 %v1044, %v1062
        %v1073 = vadd.f32 %v1045, %v1071
        %v1074 = vld [vmem:[%s681] sm:$0xff]
        %v1075 = vld [vmem:[%s681 + $0x8] sm:$0xff]
        %v1076 = vmul.f32 %v1074, 1.442695
        %v1077 = vpow.pop %v1076
        %v1078 = vmul.f32 %v1075, 1.442695
        %v1079 = vpow.pop %v1078
        %v1080 = vsub.f32 0.0, %v1077
        %v1081 = vsub.f32 0.0, %v1079
        %1082 = vst.msk [vmem:[#allocation3] sm:$0xff] %vm987, %v1072
        %1083 = vst.msk [vmem:[#allocation3 + $0x8] sm:$0xff] %vm987, %v1073
        %v1084 = vmul.f32 %v1072, %v952
        %v1085 = vmul.f32 %v1073, %v953
        %1086 = vst.msk [vmem:[#allocation4] sm:$0xff] %vm987, %v1084
        %1087 = vst.msk [vmem:[#allocation4 + $0x8] sm:$0xff] %vm987, %v1085
        %1088 = vrot.lane.b32.xlu0 %v1001, 126
        %v1089 = vpop.permute.xlu0 %1088
        %1090 = vrot.lane.b32.xlu0 %v1003, 126
        %v1091 = vpop.permute.xlu0 %1090
        %vm1094 = vcmask 130048
        %1095 = vst.msk [vmem:[#allocation5] sm:$0xff] %vm1094, %v1089
        %1096 = vst.msk [vmem:[#allocation5 + $0x8] sm:$0xff] %vm1094, %v1091
        %1097 = vrot.lane.b32.xlu0 %v1001, 110
        %v1098 = vpop.permute.xlu0 %1097
        %1099 = vrot.lane.b32.xlu0 %v1003, 110
        %v1100 = vpop.permute.xlu0 %1099
        %1103 = vst.msk [vmem:[#allocation6] sm:$0xff] %vm1094, %v1098
        %1104 = vst.msk [vmem:[#allocation6 + $0x8] sm:$0xff] %vm1094, %v1100
        %v1105 = vld [vmem:[#allocation3] sm:$0xff]
        %v1106 = vld [vmem:[#allocation4] sm:$0xff]
        %v1107 = vld [vmem:[#allocation5] sm:$0xff]
        %v1108 = vperm.slane %v1107, 0
        %v1109 = vlaneseq
        %v1110 = vshrl.u32 %v1109, 7
        %1112 = vset.pattern.permute.xlu0 %v1110
        %1113 = vperm.xlu0 %1112, %v1108
        %v1114 = vpop.permute.xlu0 %1113
        %v1115 = vlaneseq
        %v1116 = vshrl.u32 %v1115, 7
        %v1117 = vadd.s32 %v1116, 8
        %1118 = vset.pattern.permute.xlu0 %v1117
        %1119 = vperm.xlu0 %1118, %v1108
        %v1120 = vpop.permute.xlu0 %1119
        %v1121 = vperm.slane %v1107, 1
        %v1122 = vlaneseq
        %v1123 = vshrl.u32 %v1122, 7
        %1125 = vset.pattern.permute.xlu0 %v1123
        %1126 = vperm.xlu0 %1125, %v1121
        %v1127 = vpop.permute.xlu0 %1126
        %v1128 = vlaneseq
        %v1129 = vshrl.u32 %v1128, 7
        %v1130 = vadd.s32 %v1129, 8
        %1131 = vset.pattern.permute.xlu0 %v1130
        %1132 = vperm.xlu0 %1131, %v1121
        %v1133 = vpop.permute.xlu0 %1132
        %v1134 = vperm.slane %v1107, 2
        %v1135 = vlaneseq
        %v1136 = vshrl.u32 %v1135, 7
        %1138 = vset.pattern.permute.xlu0 %v1136
        %1139 = vperm.xlu0 %1138, %v1134
        %v1140 = vpop.permute.xlu0 %1139
        %v1141 = vlaneseq
        %v1142 = vshrl.u32 %v1141, 7
        %v1143 = vadd.s32 %v1142, 8
        %1144 = vset.pattern.permute.xlu0 %v1143
        %1145 = vperm.xlu0 %1144, %v1134
        %v1146 = vpop.permute.xlu0 %1145
        %v1147 = vperm.slane %v1107, 3
        %v1148 = vlaneseq
        %v1149 = vshrl.u32 %v1148, 7
        %1151 = vset.pattern.permute.xlu0 %v1149
        %1152 = vperm.xlu0 %1151, %v1147
        %v1153 = vpop.permute.xlu0 %1152
        %v1154 = vlaneseq
        %v1155 = vshrl.u32 %v1154, 7
        %v1156 = vadd.s32 %v1155, 8
        %1157 = vset.pattern.permute.xlu0 %v1156
        %1158 = vperm.xlu0 %1157, %v1147
        %v1159 = vpop.permute.xlu0 %1158
        %v1160 = vperm.slane %v1107, 4
        %v1161 = vlaneseq
        %v1162 = vshrl.u32 %v1161, 7
        %1164 = vset.pattern.permute.xlu0 %v1162
        %1165 = vperm.xlu0 %1164, %v1160
        %v1166 = vpop.permute.xlu0 %1165
        %v1167 = vlaneseq
        %v1168 = vshrl.u32 %v1167, 7
        %v1169 = vadd.s32 %v1168, 8
        %1170 = vset.pattern.permute.xlu0 %v1169
        %1171 = vperm.xlu0 %1170, %v1160
        %v1172 = vpop.permute.xlu0 %1171
        %v1173 = vperm.slane %v1107, 5
        %v1174 = vlaneseq
        %v1175 = vshrl.u32 %v1174, 7
        %1177 = vset.pattern.permute.xlu0 %v1175
        %1178 = vperm.xlu0 %1177, %v1173
        %v1179 = vpop.permute.xlu0 %1178
        %v1180 = vlaneseq
        %v1181 = vshrl.u32 %v1180, 7
        %v1182 = vadd.s32 %v1181, 8
        %1183 = vset.pattern.permute.xlu0 %v1182
        %1184 = vperm.xlu0 %1183, %v1173
        %v1185 = vpop.permute.xlu0 %1184
        %v1186 = vperm.slane %v1107, 6
        %v1187 = vlaneseq
        %v1188 = vshrl.u32 %v1187, 7
        %1190 = vset.pattern.permute.xlu0 %v1188
        %1191 = vperm.xlu0 %1190, %v1186
        %v1192 = vpop.permute.xlu0 %1191
        %v1193 = vlaneseq
        %v1194 = vshrl.u32 %v1193, 7
        %v1195 = vadd.s32 %v1194, 8
        %1196 = vset.pattern.permute.xlu0 %v1195
        %1197 = vperm.xlu0 %1196, %v1186
        %v1198 = vpop.permute.xlu0 %1197
        %v1199 = vperm.slane %v1107, 7
        %v1200 = vlaneseq
        %v1201 = vshrl.u32 %v1200, 7
        %1203 = vset.pattern.permute.xlu0 %v1201
        %1204 = vperm.xlu0 %1203, %v1199
        %v1205 = vpop.permute.xlu0 %1204
        %v1206 = vlaneseq
        %v1207 = vshrl.u32 %v1206, 7
        %v1208 = vadd.s32 %v1207, 8
        %1209 = vset.pattern.permute.xlu0 %v1208
        %1210 = vperm.xlu0 %1209, %v1199
        %v1211 = vpop.permute.xlu0 %1210
        %v1212 = vld [vmem:[#allocation6] sm:$0xff]
        %v1213 = vperm.slane %v1212, 0
        %v1214 = vlaneseq
        %v1215 = vshrl.u32 %v1214, 7
        %1217 = vset.pattern.permute.xlu0 %v1215
        %1218 = vperm.xlu0 %1217, %v1213
        %v1219 = vpop.permute.xlu0 %1218
        %v1220 = vlaneseq
        %v1221 = vshrl.u32 %v1220, 7
        %v1222 = vadd.s32 %v1221, 8
        %1223 = vset.pattern.permute.xlu0 %v1222
        %1224 = vperm.xlu0 %1223, %v1213
        %v1225 = vpop.permute.xlu0 %1224
        %v1226 = vperm.slane %v1212, 1
        %v1227 = vlaneseq
        %v1228 = vshrl.u32 %v1227, 7
        %1230 = vset.pattern.permute.xlu0 %v1228
        %1231 = vperm.xlu0 %1230, %v1226
        %v1232 = vpop.permute.xlu0 %1231
        %v1233 = vlaneseq
        %v1234 = vshrl.u32 %v1233, 7
        %v1235 = vadd.s32 %v1234, 8
        %1236 = vset.pattern.permute.xlu0 %v1235
        %1237 = vperm.xlu0 %1236, %v1226
        %v1238 = vpop.permute.xlu0 %1237
        %v1239 = vperm.slane %v1212, 2
        %v1240 = vlaneseq
        %v1241 = vshrl.u32 %v1240, 7
        %1243 = vset.pattern.permute.xlu0 %v1241
        %1244 = vperm.xlu0 %1243, %v1239
        %v1245 = vpop.permute.xlu0 %1244
        %v1246 = vlaneseq
        %v1247 = vshrl.u32 %v1246, 7
        %v1248 = vadd.s32 %v1247, 8
        %1249 = vset.pattern.permute.xlu0 %v1248
        %1250 = vperm.xlu0 %1249, %v1239
        %v1251 = vpop.permute.xlu0 %1250
        %v1252 = vperm.slane %v1212, 3
        %v1253 = vlaneseq
        %v1254 = vshrl.u32 %v1253, 7
        %1256 = vset.pattern.permute.xlu0 %v1254
        %1257 = vperm.xlu0 %1256, %v1252
        %v1258 = vpop.permute.xlu0 %1257
        %v1259 = vlaneseq
        %v1260 = vshrl.u32 %v1259, 7
        %v1261 = vadd.s32 %v1260, 8
        %1262 = vset.pattern.permute.xlu0 %v1261
        %1263 = vperm.xlu0 %1262, %v1252
        %v1264 = vpop.permute.xlu0 %1263
        %v1265 = vperm.slane %v1212, 4
        %v1266 = vlaneseq
        %v1267 = vshrl.u32 %v1266, 7
        %1269 = vset.pattern.permute.xlu0 %v1267
        %1270 = vperm.xlu0 %1269, %v1265
        %v1271 = vpop.permute.xlu0 %1270
        %v1272 = vlaneseq
        %v1273 = vshrl.u32 %v1272, 7
        %v1274 = vadd.s32 %v1273, 8
        %1275 = vset.pattern.permute.xlu0 %v1274
        %1276 = vperm.xlu0 %1275, %v1265
        %v1277 = vpop.permute.xlu0 %1276
        %v1278 = vperm.slane %v1212, 5
        %v1279 = vlaneseq
        %v1280 = vshrl.u32 %v1279, 7
        %1282 = vset.pattern.permute.xlu0 %v1280
        %1283 = vperm.xlu0 %1282, %v1278
        %v1284 = vpop.permute.xlu0 %1283
        %v1285 = vlaneseq
        %v1286 = vshrl.u32 %v1285, 7
        %v1287 = vadd.s32 %v1286, 8
        %1288 = vset.pattern.permute.xlu0 %v1287
        %1289 = vperm.xlu0 %1288, %v1278
        %v1290 = vpop.permute.xlu0 %1289
        %v1291 = vperm.slane %v1212, 6
        %v1292 = vlaneseq
        %v1293 = vshrl.u32 %v1292, 7
        %1295 = vset.pattern.permute.xlu0 %v1293
        %1296 = vperm.xlu0 %1295, %v1291
        %v1297 = vpop.permute.xlu0 %1296
        %v1298 = vlaneseq
        %v1299 = vshrl.u32 %v1298, 7
        %v1300 = vadd.s32 %v1299, 8
        %1301 = vset.pattern.permute.xlu0 %v1300
        %1302 = vperm.xlu0 %1301, %v1291
        %v1303 = vpop.permute.xlu0 %1302
        %v1304 = vperm.slane %v1212, 7
        %v1305 = vlaneseq
        %v1306 = vshrl.u32 %v1305, 7
        %1308 = vset.pattern.permute.xlu0 %v1306
        %1309 = vperm.xlu0 %1308, %v1304
        %v1310 = vpop.permute.xlu0 %1309
        %v1311 = vlaneseq
        %v1312 = vshrl.u32 %v1311, 7
        %v1313 = vadd.s32 %v1312, 8
        %1314 = vset.pattern.permute.xlu0 %v1313
        %1315 = vperm.xlu0 %1314, %v1304
        %v1316 = vpop.permute.xlu0 %1315
        %v1317 = vperm.slane %v1105, 0
        %v1318 = vmul.f32 %v1317, %v1080
        %v1319 = vmul.f32 %v1317, %v1081
        %v1320 = vmul.f32 %v1318, 1.442695
        %v1321 = vpow.pop %v1320
        %v1322 = vmul.f32 %v1319, 1.442695
        %v1323 = vpow.pop %v1322
        %v1324 = vmul.f32 %v1321, 0.0
        %v1325 = vmul.f32 %v1323, 0.0
        %v1326 = vperm.slane %v1106, 0
        %v1327 = vmul.f32 %v1326, %v1114
        %v1328 = vmul.f32 %v1326, %v1120
        %v1329 = vadd.f32 %v1324, %v1327
        %v1330 = vadd.f32 %v1325, %v1328
        %v1331 = vmul.f32 %v1329, %v1219
        %v1332 = vmul.f32 %v1330, %v1225
        %v1333 = vsel %vm987, %v1331, 0.0
        %v1334 = vsel %vm987, %v1332, 0.0
        %v1335 = vadd.f32 %v1333, %v1334
        %v1336 = vrot.slane %v1335, 4
        %v1337 = vadd.f32 %v1335, %v1336
        %v1338 = vrot.slane %v1337, 2
        %v1339 = vadd.f32 %v1337, %v1338
        %v1340 = vrot.slane %v1339, 1
        %v1341 = vadd.f32 %v1339, %v1340
        %v1342 = vperm.slane %v1105, 1
        %v1343 = vmul.f32 %v1342, %v1080
        %v1344 = vmul.f32 %v1342, %v1081
        %v1345 = vmul.f32 %v1343, 1.442695
        %v1346 = vpow.pop %v1345
        %v1347 = vmul.f32 %v1344, 1.442695
        %v1348 = vpow.pop %v1347
        %v1349 = vmul.f32 %v1346, %v1329
        %v1350 = vmul.f32 %v1348, %v1330
        %v1351 = vperm.slane %v1106, 1
        %v1352 = vmul.f32 %v1351, %v1127
        %v1353 = vmul.f32 %v1351, %v1133
        %v1354 = vadd.f32 %v1349, %v1352
        %v1355 = vadd.f32 %v1350, %v1353
        %v1356 = vmul.f32 %v1354, %v1232
        %v1357 = vmul.f32 %v1355, %v1238
        %v1358 = vsel %vm987, %v1356, 0.0
        %v1359 = vsel %vm987, %v1357, 0.0
        %v1360 = vadd.f32 %v1358, %v1359
        %v1361 = vrot.slane %v1360, 4
        %v1362 = vadd.f32 %v1360, %v1361
        %v1363 = vrot.slane %v1362, 2
        %v1364 = vadd.f32 %v1362, %v1363
        %v1365 = vrot.slane %v1364, 1
        %v1366 = vadd.f32 %v1364, %v1365
        %v1367 = vperm.slane %v1105, 2
        %v1368 = vmul.f32 %v1367, %v1080
        %v1369 = vmul.f32 %v1367, %v1081
        %v1370 = vmul.f32 %v1368, 1.442695
        %v1371 = vpow.pop %v1370
        %v1372 = vmul.f32 %v1369, 1.442695
        %v1373 = vpow.pop %v1372
        %v1374 = vmul.f32 %v1371, %v1354
        %v1375 = vmul.f32 %v1373, %v1355
        %v1376 = vperm.slane %v1106, 2
        %v1377 = vmul.f32 %v1376, %v1140
        %v1378 = vmul.f32 %v1376, %v1146
        %v1379 = vadd.f32 %v1374, %v1377
        %v1380 = vadd.f32 %v1375, %v1378
        %v1381 = vmul.f32 %v1379, %v1245
        %v1382 = vmul.f32 %v1380, %v1251
        %v1383 = vsel %vm987, %v1381, 0.0
        %v1384 = vsel %vm987, %v1382, 0.0
        %v1385 = vadd.f32 %v1383, %v1384
        %v1386 = vrot.slane %v1385, 4
        %v1387 = vadd.f32 %v1385, %v1386
        %v1388 = vrot.slane %v1387, 2
        %v1389 = vadd.f32 %v1387, %v1388
        %v1390 = vrot.slane %v1389, 1
        %v1391 = vadd.f32 %v1389, %v1390
        %v1392 = vperm.slane %v1105, 3
        %v1393 = vmul.f32 %v1392, %v1080
        %v1394 = vmul.f32 %v1392, %v1081
        %v1395 = vmul.f32 %v1393, 1.442695
        %v1396 = vpow.pop %v1395
        %v1397 = vmul.f32 %v1394, 1.442695
        %v1398 = vpow.pop %v1397
        %v1399 = vmul.f32 %v1396, %v1379
        %v1400 = vmul.f32 %v1398, %v1380
        %v1401 = vperm.slane %v1106, 3
        %v1402 = vmul.f32 %v1401, %v1153
        %v1403 = vmul.f32 %v1401, %v1159
        %v1404 = vadd.f32 %v1399, %v1402
        %v1405 = vadd.f32 %v1400, %v1403
        %v1406 = vmul.f32 %v1404, %v1258
        %v1407 = vmul.f32 %v1405, %v1264
        %v1408 = vsel %vm987, %v1406, 0.0
        %v1409 = vsel %vm987, %v1407, 0.0
        %v1410 = vadd.f32 %v1408, %v1409
        %v1411 = vrot.slane %v1410, 4
        %v1412 = vadd.f32 %v1410, %v1411
        %v1413 = vrot.slane %v1412, 2
        %v1414 = vadd.f32 %v1412, %v1413
        %v1415 = vrot.slane %v1414, 1
        %v1416 = vadd.f32 %v1414, %v1415
        %v1417 = vperm.slane %v1105, 4
        %v1418 = vmul.f32 %v1417, %v1080
        %v1419 = vmul.f32 %v1417, %v1081
        %v1420 = vmul.f32 %v1418, 1.442695
        %v1421 = vpow.pop %v1420
        %v1422 = vmul.f32 %v1419, 1.442695
        %v1423 = vpow.pop %v1422
        %v1424 = vmul.f32 %v1421, %v1404
        %v1425 = vmul.f32 %v1423, %v1405
        %v1426 = vperm.slane %v1106, 4
        %v1427 = vmul.f32 %v1426, %v1166
        %v1428 = vmul.f32 %v1426, %v1172
        %v1429 = vadd.f32 %v1424, %v1427
        %v1430 = vadd.f32 %v1425, %v1428
        %v1431 = vmul.f32 %v1429, %v1271
        %v1432 = vmul.f32 %v1430, %v1277
        %v1433 = vsel %vm987, %v1431, 0.0
        %v1434 = vsel %vm987, %v1432, 0.0
        %v1435 = vadd.f32 %v1433, %v1434
        %v1436 = vrot.slane %v1435, 4
        %v1437 = vadd.f32 %v1435, %v1436
        %v1438 = vrot.slane %v1437, 2
        %v1439 = vadd.f32 %v1437, %v1438
        %v1440 = vrot.slane %v1439, 1
        %v1441 = vadd.f32 %v1439, %v1440
        %v1442 = vperm.slane %v1105, 5
        %v1443 = vmul.f32 %v1442, %v1080
        %v1444 = vmul.f32 %v1442, %v1081
        %v1445 = vmul.f32 %v1443, 1.442695
        %v1446 = vpow.pop %v1445
        %v1447 = vmul.f32 %v1444, 1.442695
        %v1448 = vpow.pop %v1447
        %v1449 = vmul.f32 %v1446, %v1429
        %v1450 = vmul.f32 %v1448, %v1430
        %v1451 = vperm.slane %v1106, 5
        %v1452 = vmul.f32 %v1451, %v1179
        %v1453 = vmul.f32 %v1451, %v1185
        %v1454 = vadd.f32 %v1449, %v1452
        %v1455 = vadd.f32 %v1450, %v1453
        %v1456 = vmul.f32 %v1454, %v1284
        %v1457 = vmul.f32 %v1455, %v1290
        %v1458 = vsel %vm987, %v1456, 0.0
        %v1459 = vsel %vm987, %v1457, 0.0
        %v1460 = vadd.f32 %v1458, %v1459
        %v1461 = vrot.slane %v1460, 4
        %v1462 = vadd.f32 %v1460, %v1461
        %v1463 = vrot.slane %v1462, 2
        %v1464 = vadd.f32 %v1462, %v1463
        %v1465 = vrot.slane %v1464, 1
        %v1466 = vadd.f32 %v1464, %v1465
        %v1467 = vperm.slane %v1105, 6
        %v1468 = vmul.f32 %v1467, %v1080
        %v1469 = vmul.f32 %v1467, %v1081
        %v1470 = vmul.f32 %v1468, 1.442695
        %v1471 = vpow.pop %v1470
        %v1472 = vmul.f32 %v1469, 1.442695
        %v1473 = vpow.pop %v1472
        %v1474 = vmul.f32 %v1471, %v1454
        %v1475 = vmul.f32 %v1473, %v1455
        %v1476 = vperm.slane %v1106, 6
        %v1477 = vmul.f32 %v1476, %v1192
        %v1478 = vmul.f32 %v1476, %v1198
        %v1479 = vadd.f32 %v1474, %v1477
        %v1480 = vadd.f32 %v1475, %v1478
        %v1481 = vmul.f32 %v1479, %v1297
        %v1482 = vmul.f32 %v1480, %v1303
        %v1483 = vsel %vm987, %v1481, 0.0
        %v1484 = vsel %vm987, %v1482, 0.0
        %v1485 = vadd.f32 %v1483, %v1484
        %v1486 = vrot.slane %v1485, 4
        %v1487 = vadd.f32 %v1485, %v1486
        %v1488 = vrot.slane %v1487, 2
        %v1489 = vadd.f32 %v1487, %v1488
        %v1490 = vrot.slane %v1489, 1
        %v1491 = vadd.f32 %v1489, %v1490
        %v1492 = vperm.slane %v1105, 7
        %v1493 = vmul.f32 %v1492, %v1080
        %v1494 = vmul.f32 %v1492, %v1081
        %v1495 = vmul.f32 %v1493, 1.442695
        %v1496 = vpow.pop %v1495
        %v1497 = vmul.f32 %v1494, 1.442695
        %v1498 = vpow.pop %v1497
        %v1499 = vmul.f32 %v1496, %v1479
        %v1500 = vmul.f32 %v1498, %v1480
        %v1501 = vperm.slane %v1106, 7
        %v1502 = vmul.f32 %v1501, %v1205
        %v1503 = vmul.f32 %v1501, %v1211
        %v1504 = vadd.f32 %v1499, %v1502
        %v1505 = vadd.f32 %v1500, %v1503
        %v1506 = vmul.f32 %v1504, %v1310
        %v1507 = vmul.f32 %v1505, %v1316
        %v1508 = vsel %vm987, %v1506, 0.0
        %v1509 = vsel %vm987, %v1507, 0.0
        %v1510 = vadd.f32 %v1508, %v1509
        %v1511 = vrot.slane %v1510, 4
        %v1512 = vadd.f32 %v1510, %v1511
        %v1513 = vrot.slane %v1512, 2
        %v1514 = vadd.f32 %v1512, %v1513
        %v1515 = vrot.slane %v1514, 1
        %v1516 = vadd.f32 %v1514, %v1515
        %vm1517 = vcmask 1040384
        %v1518 = vsel %vm1517, %v1341, %v1366
        %v1519 = vsel %vm1017, %v1518, %v1391
        %vm1520 = vcmask 1042432
        %v1521 = vsel %vm1520, %v1519, %v1416
        %vm1522 = vcmask 1043456
        %v1523 = vsel %vm1522, %v1521, %v1441
        %vm1524 = vcmask 1044480
        %v1525 = vsel %vm1524, %v1523, %v1466
        %vm1526 = vcmask 1045504
        %v1527 = vsel %vm1526, %v1525, %v1491
        %vm1528 = vcmask 1046528
        %v1529 = vsel %vm1528, %v1527, %v1516
        %1530 = vst.msk [vmem:[#allocation7] sm:$0xff] %vm987, %v1529
        %s1531 = scalar_lea.vmem [#allocation3], 8
        %v1532 = vld [vmem:[%s1531] sm:$0xff]
        %s1533 = scalar_lea.vmem [#allocation4], 8
        %v1534 = vld [vmem:[%s1533] sm:$0xff]
        %s1535 = scalar_lea.vmem [#allocation5], 8
        %v1536 = vld [vmem:[%s1535] sm:$0xff]
        %v1537 = vperm.slane %v1536, 0
        %v1538 = vlaneseq
        %v1539 = vshrl.u32 %v1538, 7
        %1541 = vset.pattern.permute.xlu0 %v1539
        %1542 = vperm.xlu0 %1541, %v1537
        %v1543 = vpop.permute.xlu0 %1542
        %v1544 = vlaneseq
        %v1545 = vshrl.u32 %v1544, 7
        %v1546 = vadd.s32 %v1545, 8
        %1547 = vset.pattern.permute.xlu0 %v1546
        %1548 = vperm.xlu0 %1547, %v1537
        %v1549 = vpop.permute.xlu0 %1548
        %v1550 = vperm.slane %v1536, 1
        %v1551 = vlaneseq
        %v1552 = vshrl.u32 %v1551, 7
        %1554 = vset.pattern.permute.xlu0 %v1552
        %1555 = vperm.xlu0 %1554, %v1550
        %v1556 = vpop.permute.xlu0 %1555
        %v1557 = vlaneseq
        %v1558 = vshrl.u32 %v1557, 7
        %v1559 = vadd.s32 %v1558, 8
        %1560 = vset.pattern.permute.xlu0 %v1559
        %1561 = vperm.xlu0 %1560, %v1550
        %v1562 = vpop.permute.xlu0 %1561
        %v1563 = vperm.slane %v1536, 2
        %v1564 = vlaneseq
        %v1565 = vshrl.u32 %v1564, 7
        %1567 = vset.pattern.permute.xlu0 %v1565
        %1568 = vperm.xlu0 %1567, %v1563
        %v1569 = vpop.permute.xlu0 %1568
        %v1570 = vlaneseq
        %v1571 = vshrl.u32 %v1570, 7
        %v1572 = vadd.s32 %v1571, 8
        %1573 = vset.pattern.permute.xlu0 %v1572
        %1574 = vperm.xlu0 %1573, %v1563
        %v1575 = vpop.permute.xlu0 %1574
        %v1576 = vperm.slane %v1536, 3
        %v1577 = vlaneseq
        %v1578 = vshrl.u32 %v1577, 7
        %1580 = vset.pattern.permute.xlu0 %v1578
        %1581 = vperm.xlu0 %1580, %v1576
        %v1582 = vpop.permute.xlu0 %1581
        %v1583 = vlaneseq
        %v1584 = vshrl.u32 %v1583, 7
        %v1585 = vadd.s32 %v1584, 8
        %1586 = vset.pattern.permute.xlu0 %v1585
        %1587 = vperm.xlu0 %1586, %v1576
        %v1588 = vpop.permute.xlu0 %1587
        %v1589 = vperm.slane %v1536, 4
        %v1590 = vlaneseq
        %v1591 = vshrl.u32 %v1590, 7
        %1593 = vset.pattern.permute.xlu0 %v1591
        %1594 = vperm.xlu0 %1593, %v1589
        %v1595 = vpop.permute.xlu0 %1594
        %v1596 = vlaneseq
        %v1597 = vshrl.u32 %v1596, 7
        %v1598 = vadd.s32 %v1597, 8
        %1599 = vset.pattern.permute.xlu0 %v1598
        %1600 = vperm.xlu0 %1599, %v1589
        %v1601 = vpop.permute.xlu0 %1600
        %v1602 = vperm.slane %v1536, 5
        %v1603 = vlaneseq
        %v1604 = vshrl.u32 %v1603, 7
        %1606 = vset.pattern.permute.xlu0 %v1604
        %1607 = vperm.xlu0 %1606, %v1602
        %v1608 = vpop.permute.xlu0 %1607
        %v1609 = vlaneseq
        %v1610 = vshrl.u32 %v1609, 7
        %v1611 = vadd.s32 %v1610, 8
        %1612 = vset.pattern.permute.xlu0 %v1611
        %1613 = vperm.xlu0 %1612, %v1602
        %v1614 = vpop.permute.xlu0 %1613
        %v1615 = vperm.slane %v1536, 6
        %v1616 = vlaneseq
        %v1617 = vshrl.u32 %v1616, 7
        %1619 = vset.pattern.permute.xlu0 %v1617
        %1620 = vperm.xlu0 %1619, %v1615
        %v1621 = vpop.permute.xlu0 %1620
        %v1622 = vlaneseq
        %v1623 = vshrl.u32 %v1622, 7
        %v1624 = vadd.s32 %v1623, 8
        %1625 = vset.pattern.permute.xlu0 %v1624
        %1626 = vperm.xlu0 %1625, %v1615
        %v1627 = vpop.permute.xlu0 %1626
        %v1628 = vperm.slane %v1536, 7
        %v1629 = vlaneseq
        %v1630 = vshrl.u32 %v1629, 7
        %1632 = vset.pattern.permute.xlu0 %v1630
        %1633 = vperm.xlu0 %1632, %v1628
        %v1634 = vpop.permute.xlu0 %1633
        %v1635 = vlaneseq
        %v1636 = vshrl.u32 %v1635, 7
        %v1637 = vadd.s32 %v1636, 8
        %1638 = vset.pattern.permute.xlu0 %v1637
        %1639 = vperm.xlu0 %1638, %v1628
        %v1640 = vpop.permute.xlu0 %1639
        %s1641 = scalar_lea.vmem [#allocation6], 8
        %v1642 = vld [vmem:[%s1641] sm:$0xff]
        %v1643 = vperm.slane %v1642, 0
        %v1644 = vlaneseq
        %v1645 = vshrl.u32 %v1644, 7
        %1647 = vset.pattern.permute.xlu0 %v1645
        %1648 = vperm.xlu0 %1647, %v1643
        %v1649 = vpop.permute.xlu0 %1648
        %v1650 = vlaneseq
        %v1651 = vshrl.u32 %v1650, 7
        %v1652 = vadd.s32 %v1651, 8
        %1653 = vset.pattern.permute.xlu0 %v1652
        %1654 = vperm.xlu0 %1653, %v1643
        %v1655 = vpop.permute.xlu0 %1654
        %v1656 = vperm.slane %v1642, 1
        %v1657 = vlaneseq
        %v1658 = vshrl.u32 %v1657, 7
        %1660 = vset.pattern.permute.xlu0 %v1658
        %1661 = vperm.xlu0 %1660, %v1656
        %v1662 = vpop.permute.xlu0 %1661
        %v1663 = vlaneseq
        %v1664 = vshrl.u32 %v1663, 7
        %v1665 = vadd.s32 %v1664, 8
        %1666 = vset.pattern.permute.xlu0 %v1665
        %1667 = vperm.xlu0 %1666, %v1656
        %v1668 = vpop.permute.xlu0 %1667
        %v1669 = vperm.slane %v1642, 2
        %v1670 = vlaneseq
        %v1671 = vshrl.u32 %v1670, 7
        %1673 = vset.pattern.permute.xlu0 %v1671
        %1674 = vperm.xlu0 %1673, %v1669
        %v1675 = vpop.permute.xlu0 %1674
        %v1676 = vlaneseq
        %v1677 = vshrl.u32 %v1676, 7
        %v1678 = vadd.s32 %v1677, 8
        %1679 = vset.pattern.permute.xlu0 %v1678
        %1680 = vperm.xlu0 %1679, %v1669
        %v1681 = vpop.permute.xlu0 %1680
        %v1682 = vperm.slane %v1642, 3
        %v1683 = vlaneseq
        %v1684 = vshrl.u32 %v1683, 7
        %1686 = vset.pattern.permute.xlu0 %v1684
        %1687 = vperm.xlu0 %1686, %v1682
        %v1688 = vpop.permute.xlu0 %1687
        %v1689 = vlaneseq
        %v1690 = vshrl.u32 %v1689, 7
        %v1691 = vadd.s32 %v1690, 8
        %1692 = vset.pattern.permute.xlu0 %v1691
        %1693 = vperm.xlu0 %1692, %v1682
        %v1694 = vpop.permute.xlu0 %1693
        %v1695 = vperm.slane %v1642, 4
        %v1696 = vlaneseq
        %v1697 = vshrl.u32 %v1696, 7
        %1699 = vset.pattern.permute.xlu0 %v1697
        %1700 = vperm.xlu0 %1699, %v1695
        %v1701 = vpop.permute.xlu0 %1700
        %v1702 = vlaneseq
        %v1703 = vshrl.u32 %v1702, 7
        %v1704 = vadd.s32 %v1703, 8
        %1705 = vset.pattern.permute.xlu0 %v1704
        %1706 = vperm.xlu0 %1705, %v1695
        %v1707 = vpop.permute.xlu0 %1706
        %v1708 = vperm.slane %v1642, 5
        %v1709 = vlaneseq
        %v1710 = vshrl.u32 %v1709, 7
        %1712 = vset.pattern.permute.xlu0 %v1710
        %1713 = vperm.xlu0 %1712, %v1708
        %v1714 = vpop.permute.xlu0 %1713
        %v1715 = vlaneseq
        %v1716 = vshrl.u32 %v1715, 7
        %v1717 = vadd.s32 %v1716, 8
        %1718 = vset.pattern.permute.xlu0 %v1717
        %1719 = vperm.xlu0 %1718, %v1708
        %v1720 = vpop.permute.xlu0 %1719
        %v1721 = vperm.slane %v1642, 6
        %v1722 = vlaneseq
        %v1723 = vshrl.u32 %v1722, 7
        %1725 = vset.pattern.permute.xlu0 %v1723
        %1726 = vperm.xlu0 %1725, %v1721
        %v1727 = vpop.permute.xlu0 %1726
        %v1728 = vlaneseq
        %v1729 = vshrl.u32 %v1728, 7
        %v1730 = vadd.s32 %v1729, 8
        %1731 = vset.pattern.permute.xlu0 %v1730
        %1732 = vperm.xlu0 %1731, %v1721
        %v1733 = vpop.permute.xlu0 %1732
        %v1734 = vperm.slane %v1642, 7
        %v1735 = vlaneseq
        %v1736 = vshrl.u32 %v1735, 7
        %1738 = vset.pattern.permute.xlu0 %v1736
        %1739 = vperm.xlu0 %1738, %v1734
        %v1740 = vpop.permute.xlu0 %1739
        %v1741 = vlaneseq
        %v1742 = vshrl.u32 %v1741, 7
        %v1743 = vadd.s32 %v1742, 8
        %1744 = vset.pattern.permute.xlu0 %v1743
        %1745 = vperm.xlu0 %1744, %v1734
        %v1746 = vpop.permute.xlu0 %1745
        %v1747 = vperm.slane %v1532, 0
        %v1748 = vmul.f32 %v1747, %v1080
        %v1749 = vmul.f32 %v1747, %v1081
        %v1750 = vmul.f32 %v1748, 1.442695
        %v1751 = vpow.pop %v1750
        %v1752 = vmul.f32 %v1749, 1.442695
        %v1753 = vpow.pop %v1752
        %v1754 = vmul.f32 %v1751, 0.0
        %v1755 = vmul.f32 %v1753, 0.0
        %v1756 = vperm.slane %v1534, 0
        %v1757 = vmul.f32 %v1756, %v1543
        %v1758 = vmul.f32 %v1756, %v1549
        %v1759 = vadd.f32 %v1754, %v1757
        %v1760 = vadd.f32 %v1755, %v1758
        %v1761 = vmul.f32 %v1759, %v1649
        %v1762 = vmul.f32 %v1760, %v1655
        %v1763 = vsel %vm987, %v1761, 0.0
        %v1764 = vsel %vm987, %v1762, 0.0
        %v1765 = vadd.f32 %v1763, %v1764
        %v1766 = vrot.slane %v1765, 4
        %v1767 = vadd.f32 %v1765, %v1766
        %v1768 = vrot.slane %v1767, 2
        %v1769 = vadd.f32 %v1767, %v1768
        %v1770 = vrot.slane %v1769, 1
        %v1771 = vadd.f32 %v1769, %v1770
        %v1772 = vperm.slane %v1532, 1
        %v1773 = vmul.f32 %v1772, %v1080
        %v1774 = vmul.f32 %v1772, %v1081
        %v1775 = vmul.f32 %v1773, 1.442695
        %v1776 = vpow.pop %v1775
        %v1777 = vmul.f32 %v1774, 1.442695
        %v1778 = vpow.pop %v1777
        %v1779 = vmul.f32 %v1776, %v1759
        %v1780 = vmul.f32 %v1778, %v1760
        %v1781 = vperm.slane %v1534, 1
        %v1782 = vmul.f32 %v1781, %v1556
        %v1783 = vmul.f32 %v1781, %v1562
        %v1784 = vadd.f32 %v1779, %v1782
        %v1785 = vadd.f32 %v1780, %v1783
        %v1786 = vmul.f32 %v1784, %v1662
        %v1787 = vmul.f32 %v1785, %v1668
        %v1788 = vsel %vm987, %v1786, 0.0
        %v1789 = vsel %vm987, %v1787, 0.0
        %v1790 = vadd.f32 %v1788, %v1789
        %v1791 = vrot.slane %v1790, 4
        %v1792 = vadd.f32 %v1790, %v1791
        %v1793 = vrot.slane %v1792, 2
        %v1794 = vadd.f32 %v1792, %v1793
        %v1795 = vrot.slane %v1794, 1
        %v1796 = vadd.f32 %v1794, %v1795
        %v1797 = vperm.slane %v1532, 2
        %v1798 = vmul.f32 %v1797, %v1080
        %v1799 = vmul.f32 %v1797, %v1081
        %v1800 = vmul.f32 %v1798, 1.442695
        %v1801 = vpow.pop %v1800
        %v1802 = vmul.f32 %v1799, 1.442695
        %v1803 = vpow.pop %v1802
        %v1804 = vmul.f32 %v1801, %v1784
        %v1805 = vmul.f32 %v1803, %v1785
        %v1806 = vperm.slane %v1534, 2
        %v1807 = vmul.f32 %v1806, %v1569
        %v1808 = vmul.f32 %v1806, %v1575
        %v1809 = vadd.f32 %v1804, %v1807
        %v1810 = vadd.f32 %v1805, %v1808
        %v1811 = vmul.f32 %v1809, %v1675
        %v1812 = vmul.f32 %v1810, %v1681
        %v1813 = vsel %vm987, %v1811, 0.0
        %v1814 = vsel %vm987, %v1812, 0.0
        %v1815 = vadd.f32 %v1813, %v1814
        %v1816 = vrot.slane %v1815, 4
        %v1817 = vadd.f32 %v1815, %v1816
        %v1818 = vrot.slane %v1817, 2
        %v1819 = vadd.f32 %v1817, %v1818
        %v1820 = vrot.slane %v1819, 1
        %v1821 = vadd.f32 %v1819, %v1820
        %v1822 = vperm.slane %v1532, 3
        %v1823 = vmul.f32 %v1822, %v1080
        %v1824 = vmul.f32 %v1822, %v1081
        %v1825 = vmul.f32 %v1823, 1.442695
        %v1826 = vpow.pop %v1825
        %v1827 = vmul.f32 %v1824, 1.442695
        %v1828 = vpow.pop %v1827
        %v1829 = vmul.f32 %v1826, %v1809
        %v1830 = vmul.f32 %v1828, %v1810
        %v1831 = vperm.slane %v1534, 3
        %v1832 = vmul.f32 %v1831, %v1582
        %v1833 = vmul.f32 %v1831, %v1588
        %v1834 = vadd.f32 %v1829, %v1832
        %v1835 = vadd.f32 %v1830, %v1833
        %v1836 = vmul.f32 %v1834, %v1688
        %v1837 = vmul.f32 %v1835, %v1694
        %v1838 = vsel %vm987, %v1836, 0.0
        %v1839 = vsel %vm987, %v1837, 0.0
        %v1840 = vadd.f32 %v1838, %v1839
        %v1841 = vrot.slane %v1840, 4
        %v1842 = vadd.f32 %v1840, %v1841
        %v1843 = vrot.slane %v1842, 2
        %v1844 = vadd.f32 %v1842, %v1843
        %v1845 = vrot.slane %v1844, 1
        %v1846 = vadd.f32 %v1844, %v1845
        %v1847 = vperm.slane %v1532, 4
        %v1848 = vmul.f32 %v1847, %v1080
        %v1849 = vmul.f32 %v1847, %v1081
        %v1850 = vmul.f32 %v1848, 1.442695
        %v1851 = vpow.pop %v1850
        %v1852 = vmul.f32 %v1849, 1.442695
        %v1853 = vpow.pop %v1852
        %v1854 = vmul.f32 %v1851, %v1834
        %v1855 = vmul.f32 %v1853, %v1835
        %v1856 = vperm.slane %v1534, 4
        %v1857 = vmul.f32 %v1856, %v1595
        %v1858 = vmul.f32 %v1856, %v1601
        %v1859 = vadd.f32 %v1854, %v1857
        %v1860 = vadd.f32 %v1855, %v1858
        %v1861 = vmul.f32 %v1859, %v1701
        %v1862 = vmul.f32 %v1860, %v1707
        %v1863 = vsel %vm987, %v1861, 0.0
        %v1864 = vsel %vm987, %v1862, 0.0
        %v1865 = vadd.f32 %v1863, %v1864
        %v1866 = vrot.slane %v1865, 4
        %v1867 = vadd.f32 %v1865, %v1866
        %v1868 = vrot.slane %v1867, 2
        %v1869 = vadd.f32 %v1867, %v1868
        %v1870 = vrot.slane %v1869, 1
        %v1871 = vadd.f32 %v1869, %v1870
        %v1872 = vperm.slane %v1532, 5
        %v1873 = vmul.f32 %v1872, %v1080
        %v1874 = vmul.f32 %v1872, %v1081
        %v1875 = vmul.f32 %v1873, 1.442695
        %v1876 = vpow.pop %v1875
        %v1877 = vmul.f32 %v1874, 1.442695
        %v1878 = vpow.pop %v1877
        %v1879 = vmul.f32 %v1876, %v1859
        %v1880 = vmul.f32 %v1878, %v1860
        %v1881 = vperm.slane %v1534, 5
        %v1882 = vmul.f32 %v1881, %v1608
        %v1883 = vmul.f32 %v1881, %v1614
        %v1884 = vadd.f32 %v1879, %v1882
        %v1885 = vadd.f32 %v1880, %v1883
        %v1886 = vmul.f32 %v1884, %v1714
        %v1887 = vmul.f32 %v1885, %v1720
        %v1888 = vsel %vm987, %v1886, 0.0
        %v1889 = vsel %vm987, %v1887, 0.0
        %v1890 = vadd.f32 %v1888, %v1889
        %v1891 = vrot.slane %v1890, 4
        %v1892 = vadd.f32 %v1890, %v1891
        %v1893 = vrot.slane %v1892, 2
        %v1894 = vadd.f32 %v1892, %v1893
        %v1895 = vrot.slane %v1894, 1
        %v1896 = vadd.f32 %v1894, %v1895
        %v1897 = vperm.slane %v1532, 6
        %v1898 = vmul.f32 %v1897, %v1080
        %v1899 = vmul.f32 %v1897, %v1081
        %v1900 = vmul.f32 %v1898, 1.442695
        %v1901 = vpow.pop %v1900
        %v1902 = vmul.f32 %v1899, 1.442695
        %v1903 = vpow.pop %v1902
        %v1904 = vmul.f32 %v1901, %v1884
        %v1905 = vmul.f32 %v1903, %v1885
        %v1906 = vperm.slane %v1534, 6
        %v1907 = vmul.f32 %v1906, %v1621
        %v1908 = vmul.f32 %v1906, %v1627
        %v1909 = vadd.f32 %v1904, %v1907
        %v1910 = vadd.f32 %v1905, %v1908
        %v1911 = vmul.f32 %v1909, %v1727
        %v1912 = vmul.f32 %v1910, %v1733
        %v1913 = vsel %vm987, %v1911, 0.0
        %v1914 = vsel %vm987, %v1912, 0.0
        %v1915 = vadd.f32 %v1913, %v1914
        %v1916 = vrot.slane %v1915, 4
        %v1917 = vadd.f32 %v1915, %v1916
        %v1918 = vrot.slane %v1917, 2
        %v1919 = vadd.f32 %v1917, %v1918
        %v1920 = vrot.slane %v1919, 1
        %v1921 = vadd.f32 %v1919, %v1920
        %v1922 = vperm.slane %v1532, 7
        %v1923 = vmul.f32 %v1922, %v1080
        %v1924 = vmul.f32 %v1922, %v1081
        %v1925 = vmul.f32 %v1923, 1.442695
        %v1926 = vpow.pop %v1925
        %v1927 = vmul.f32 %v1924, 1.442695
        %v1928 = vpow.pop %v1927
        %v1929 = vmul.f32 %v1926, %v1909
        %v1930 = vmul.f32 %v1928, %v1910
        %v1931 = vperm.slane %v1534, 7
        %v1932 = vmul.f32 %v1931, %v1634
        %v1933 = vmul.f32 %v1931, %v1640
        %v1934 = vadd.f32 %v1929, %v1932
        %v1935 = vadd.f32 %v1930, %v1933
        %v1936 = vmul.f32 %v1934, %v1740
        %v1937 = vmul.f32 %v1935, %v1746
        %v1938 = vsel %vm987, %v1936, 0.0
        %v1939 = vsel %vm987, %v1937, 0.0
        %v1940 = vadd.f32 %v1938, %v1939
        %v1941 = vrot.slane %v1940, 4
        %v1942 = vadd.f32 %v1940, %v1941
        %v1943 = vrot.slane %v1942, 2
        %v1944 = vadd.f32 %v1942, %v1943
        %v1945 = vrot.slane %v1944, 1
        %v1946 = vadd.f32 %v1944, %v1945
        %v1947 = vsel %vm1517, %v1771, %v1796
        %v1948 = vsel %vm1017, %v1947, %v1821
        %v1949 = vsel %vm1520, %v1948, %v1846
        %v1950 = vsel %vm1522, %v1949, %v1871
        %v1951 = vsel %vm1524, %v1950, %v1896
        %v1952 = vsel %vm1526, %v1951, %v1921
        %v1953 = vsel %vm1528, %v1952, %v1946
        %s1954 = scalar_lea.vmem [#allocation7], 8
        %1955 = vst.msk [vmem:[%s1954] sm:$0xff] %vm987, %v1953
        %v1956 = vld [vmem:[#allocation7] sm:$0xff]
        %v1957 = vld [vmem:[#allocation7 + $0x8] sm:$0xff]
        %v1958 = vld [vmem:[%s684] sm:$0x1]
        %v1960 = vperm.slane %v1958, 0
        %v1962 = vmul.f32 %v1960, %v952
        %v1963 = vmul.f32 %v1960, %v953
        %v1964 = vadd.f32 %v1956, %v1962
        %v1965 = vadd.f32 %v1957, %v1963
        %v1966 = vand.u32 2147483647, %v839
        %v1967 = vand.u32 2147483647, %v841
        %v1968 = vsub.f32 0.0, %v1966
        %v1969 = vsub.f32 0.0, %v1967
        %v1970 = vmul.f32 %v1968, 1.442695
        %v1971 = vpow.pop %v1970
        %v1972 = vmul.f32 %v1969, 1.442695
        %v1973 = vpow.pop %v1972
        %vm1974 = vcmp.ge.f32.partialorder %v839, 0.0
        %vm1975 = vcmp.ge.f32.partialorder %v841, 0.0
        %v1976 = vsel %vm1974, 1.0, %v1971
        %v1977 = vsel %vm1975, 1.0, %v1973
        %v1978 = vadd.f32 %v1971, 1.0
        %v1979 = vadd.f32 %v1973, 1.0
        %v1980 = vrcp.pop %v1978
        %v1981 = vrcp.pop %v1979
        %v1982 = vmul.f32 %v1976, %v1980
        %v1983 = vmul.f32 %v1977, %v1981
        %v1984 = vmul.f32 %v839, %v1982
        %v1985 = vmul.f32 %v841, %v1983
        %v1986 = vmul.f32 %v1964, %v1984
        %v1987 = vmul.f32 %v1965, %v1985
        %v1988 = vpack.c.bf16 %v1987, %v1986
        %v1989 = vld [vmem:[%s689] sm:$0xf]
        %v1990 = vld [vmem:[%s689 + $0x4] sm:$0xf]
        %v1991 = vld [vmem:[%s689 + $0x8] sm:$0xf]
        %v1992 = vld [vmem:[%s689 + $0xc] sm:$0xf]
        %v1993 = vld [vmem:[%s689 + $0x10] sm:$0xf]
        %v1994 = vld [vmem:[%s689 + $0x14] sm:$0xf]
        %v1995 = vld [vmem:[%s689 + $0x18] sm:$0xf]
        %v1996 = vld [vmem:[%s689 + $0x1c] sm:$0xf]
        %v2005 = vunpack.c.l.b16 %v1989
        %v2006 = vunpack.c.l.b16 %v1990
        %v2007 = vunpack.c.l.b16 %v1991
        %v2008 = vunpack.c.l.b16 %v1992
        %v2009 = vunpack.c.l.b16 %v1993
        %v2010 = vunpack.c.l.b16 %v1994
        %v2011 = vunpack.c.l.b16 %v1995
        %v2012 = vunpack.c.l.b16 %v1996
        %v2013 = vpack.c.b16 %v2006, %v2005
        %v2014 = vpack.c.b16 %v2008, %v2007
        %v2015 = vpack.c.b16 %v2010, %v2009
        %v2016 = vpack.c.b16 %v2012, %v2011
        %v2022 = vsel %vm987, %v1988, 0
        %2024 = vmatpush.bf16.msra.mxu0 0
        %2025 = vmatpush.bf16.msra.mxu0 0
        %2026 = vmatpush.bf16.msra.mxu0 0
        %2027 = vmatpush.bf16.msra.mxu0 0
        %2028 = vmatpush.bf16.msra.mxu0 %v2016
        %2029 = vmatpush.bf16.msra.mxu0 %v2015
        %2030 = vmatpush.bf16.msra.mxu0 %v2014
        %2031 = vmatpush.bf16.msra.mxu0 %v2013
        %2032 = vmatmul.bf16.gmra.mxu0 %v2022
        %v2033 = vpop.f32.mrf.mxu0
        %v2034 = vadd.f32 0.0, %v2033
        %v2035 = vpop.f32.mrf.mxu0
        %v2036 = vadd.f32 0.0, %v2035
        %2037 = vdwg.mxu0
        %v2038 = vadd.f32 %v729, %v2034
        %v2039 = vadd.f32 %v730, %v2036
        %2040 = vst.msk [vmem:[#allocation2] sm:$0xff] %vm734, %v2038
        %2041 = vst.msk [vmem:[#allocation2 + $0x8] sm:$0xff] %vm734, %v2039
        %p2042 = scmp.eq.s32.totalorder %s32, 1
        // Predicated region
        $region85: #{tpu_custom_call.1} parent=79 // pred_check
          %p2043 = pneg %p2042
        $region86: #{tpu_custom_call.1} parent=79 // pred_check_branch
          %2045 = sbr.rel (%p2043) target = $region88
        $region87: #{tpu_custom_call.1} parent=79 // pred_region
          %v2046 = vld [vmem:[#allocation2] sm:$0xff]
          %v2047 = vld [vmem:[#allocation2 + $0x8] sm:$0xff]
          %v2048 = vld [vmem:[%s14] sm:$0x1]
          %v2049 = vmul.f32 %v2046, %v2046
          %v2050 = vmul.f32 %v2047, %v2047
          %v2051 = vsel %vm734, %v2049, 0.0
          %2052 = vadd.xlane.f32.xlu0 %v2051
          %v2053 = vpop.xlane.xlu0 %2052
          %v2054 = vsel %vm734, %v2050, 0.0
          %2055 = vadd.xlane.f32.xlu0 %v2054
          %v2056 = vpop.xlane.xlu0 %2055
          %v2057 = vmul.f32 %v2053, %v747
          %v2058 = vmul.f32 %v2056, %v747
          %v2059 = vadd.f32 %v2057, 1e-05
          %v2060 = vadd.f32 %v2058, 1e-05
          %v2061 = vrsqrt.pop %v2059
          %v2062 = vmul.f32 %v2061, %v2059
          %v2063 = vmul.f32 %v2062, %v2061
          %v2064 = vmul.f32 0.5, %v2063
          %v2065 = vsub.f32 1.5, %v2064
          %v2066 = vmul.f32 %v2061, %v2065
          %vm2067 = vweird.f32 %v2059
          %vm2068 = vweird.f32 %v2061
          %vm2069 = vmor %vm2067, %vm2068
          %v2070 = vsel %vm2069, %v2061, %v2066
          %v2071 = vrsqrt.pop %v2060
          %v2072 = vmul.f32 %v2071, %v2060
          %v2073 = vmul.f32 %v2072, %v2071
          %v2074 = vmul.f32 0.5, %v2073
          %v2075 = vsub.f32 1.5, %v2074
          %v2076 = vmul.f32 %v2071, %v2075
          %vm2077 = vweird.f32 %v2060
          %vm2078 = vweird.f32 %v2071
          %vm2079 = vmor %vm2077, %vm2078
          %v2080 = vsel %vm2079, %v2071, %v2076
          %v2081 = vmul.f32 %v2046, %v2070
          %v2082 = vmul.f32 %v2047, %v2080
          %v2084 = vperm.slane %v2048, 0
          %v2086 = vmul.f32 %v2081, %v2084
          %v2087 = vmul.f32 %v2082, %v2084
          %2088 = vst.msk [vmem:[#allocation8] sm:$0xff] %vm734, %v2086
          %2089 = vst.msk [vmem:[#allocation8 + $0x8] sm:$0xff] %vm734, %v2087
        $region88: #{tpu_custom_call.1} parent=79 // pred_fallthru
          _
        // Predicated region
        $region89: #{tpu_custom_call.1} parent=79 // pred_check
          %p2090 = pneg %p432
        $region90: #{tpu_custom_call.1} parent=79 // pred_check_branch
          %2092 = sbr.rel (%p2090) target = $region92
        $region91: #{tpu_custom_call.1} parent=79 // pred_region
          %s2093 = smul.u32 2, %s31
          %2095 = vsyncadd [#allocation9], 0
          %s2096 = smul.addr %s2093, 8
          %s2097 = scalar_lea.hbm %s15, %s2096
          %s2098 = sshll.u32 [#allocation8], 4
          %s2099 = int_to_ptr.vmem [resolvable:$true] %s2098
          %s2100 = sshll.u32 %s2097, 4
          %s2101 = int_to_ptr.hbm [resolvable:$true] %s2100
          %2106 = dma.vmem_to_hbm [thread:$0]  %s2099, 256, %s2101, [#allocation9], 128, 128, 8
        $region92: #{tpu_custom_call.1} parent=79 // pred_fallthru
          _
        // Predicated region
        $region93: #{tpu_custom_call.1} parent=79 // pred_check
          %p2107 = pneg %p432
        $region94: #{tpu_custom_call.1} parent=79 // pred_check_branch
          %2109 = sbr.rel (%p2107) target = $region96
        $region95: #{tpu_custom_call.1} parent=79 // pred_region
          %2111 = dma.done [#allocation9], 256
        $region96: #{tpu_custom_call.1} parent=79 // pred_fallthru
          _
      $region80: #{tpu_custom_call.1} parent=5 // pred_fallthru
        _
      %p2112 = scmp.le.s32.totalorder 2, %s22
      // Predicated region
      $region97: #{tpu_custom_call.1} parent=5 // pred_check
        %p2113 = pneg %p2112
      $region98: #{tpu_custom_call.1} parent=5 // pred_check_branch
        %2115 = sbr.rel (%p2113) target = $region100
      $region99: #{tpu_custom_call.1} parent=5 // pred_region
        %s2116 = ssub.s32 %s22, 2
      $region100: #{tpu_custom_call.1} parent=5 // pred_fallthru
        _
    $region6: #{tpu_custom_call.1} parent=1 // loop_footer
      %s26 = sadd.s32 1, %s22
    $region7: #{tpu_custom_call.1} parent=1 // loop_footer_branch
      %21 = sbr.rel target = $region3
    $region8: #{tpu_custom_call.1} parent=1 // loop_exit
      _
    %2117 = vsyncpa [#allocation9], 1
    %s2118 = scalar_lea.sflag [#allocation9], 1
    %2119 = vsyncpa %s2118, 1

</llo_original>
